<compile_context>
chip_gen: v7x
topology: tpu7x:2x2x1
jax: 0.10.0
libtpu: 0.0.40
codegen_flags: <defaults>
</compile_context>

<pallas_src>
import functools

import jax
import jax.numpy as jnp
from jax.experimental import pallas as pl
from jax.experimental.pallas import tpu as pltpu

BN_EPS = 1e-5
LANE = 128


def _round_up(x, m):
    return (x + m - 1) // m * m


@functools.lru_cache(maxsize=1)
def _vmem_limit_bytes():
    """Scoped-VMEM ceiling: ~85% of physical per-core VMEM.

    ~54 MiB on v7x (64 MiB/TC, leaves headroom for double buffering and
    internal scratch), ~108 MiB on v5e/v6e (128 MiB physical).  Falls back to
    64 MiB (safe on every generation) if the query is unavailable.
    """
    try:
        cap = getattr(pltpu.get_tpu_info(), "vmem_capacity_bytes", None)
        if cap:
            return int(min(int(cap) * 0.85, 112 * 1024 * 1024))
    except Exception:
        pass
    return 64 * 1024 * 1024


def _compiler_params():
    return pltpu.CompilerParams(
        dimension_semantics=("parallel",),
        vmem_limit_bytes=_vmem_limit_bytes(),
    )


# ----------------------------------------------------------------------------
# Kernels
# ----------------------------------------------------------------------------
def _conv1_stats_kernel(xp_ref, w_ref, y_ref, st_ref, *, ho, wo, hh, c2p):
    """3x3 stride-2 conv as 9 accumulated MXU matmuls over parity planes.

    xp_ref : (4*hh, wh, cin)  parity planes of the padded input, stacked on H.
    w_ref  : (9, cin, c2p)    tap-major weights, Cout lane-padded.
    y_ref  : (ho, wo, c2p)    pre-BatchNorm conv output (MXU dtype).
    st_ref : (2, c2p)         per-image [sum, sum_of_squares] (f32).
    """
    cin = w_ref.shape[1]
    acc = jnp.zeros((ho * wo, c2p), jnp.float32)
    for kh in range(3):
        ph, qh = kh % 2, kh // 2
        for kw in range(3):
            pw, qw = kw % 2, kw // 2
            base = (2 * ph + pw) * hh
            xs = xp_ref[base + qh:base + qh + ho, qw:qw + wo, :]
            xs = xs.reshape(ho * wo, cin)
            acc = acc + jnp.dot(xs, w_ref[3 * kh + kw],
                                preferred_element_type=jnp.float32)
    y_ref[...] = acc.reshape(ho, wo, c2p).astype(y_ref.dtype)
    st_ref[0:1, :] = jnp.sum(acc, axis=0, keepdims=True)
    st_ref[1:2, :] = jnp.sum(acc * acc, axis=0, keepdims=True)


def _conv2_fused_kernel(y1_ref, sc_ref, sh_ref, w_ref, y_ref, st_ref,
                        slab_ref, *, ho, wo, c2p):
    """Fused: BN1-apply + ReLU + 1-px halo (VMEM scratch slab, no HBM slab)
    followed by the 3x3 stride-1 conv as 9 accumulated MXU matmuls, plus the
    per-image BN2 [sum, sumsq] partials.

    y1_ref  : (ho, wo, c2p)   pre-BN conv_1 output (MXU dtype).
    sc/sh   : (1, c2p)        BN1 scale / shift (f32).
    w_ref   : (9, c2p, c2p)   conv_2 weights, tap-major.
    y_ref   : (ho*wo, c2p)    pre-BN conv_2 output (MXU dtype).
    st_ref  : (2, c2p)        per-image [sum, sumsq] (f32).
    slab_ref: ((ho+2),(wo+2),c2p) VMEM scratch (MXU dtype).
    """
    hp, wp = ho + 2, wo + 2
    dt = slab_ref.dtype
    yn = jnp.maximum(
        y1_ref[...].astype(jnp.float32) * sc_ref[...].reshape(1, 1, c2p)
        + sh_ref[...].reshape(1, 1, c2p), 0.0).astype(dt)
    # Zero only the four 1-pixel border strips (not the whole slab), then
    # write the interior once.  Every slab element is written every grid step,
    # so the "parallel" grid axis is safe on megacore / 2-TC parts.
    slab_ref[0:1, :, :] = jnp.zeros((1, wp, c2p), dt)
    slab_ref[hp - 1:hp, :, :] = jnp.zeros((1, wp, c2p), dt)
    slab_ref[:, 0:1, :] = jnp.zeros((hp, 1, c2p), dt)
    slab_ref[:, wp - 1:wp, :] = jnp.zeros((hp, 1, c2p), dt)
    slab_ref[1:ho + 1, 1:wo + 1, :] = yn

    acc = jnp.zeros((ho * wo, c2p), jnp.float32)
    for kh in range(3):
        for kw in range(3):
            xs = slab_ref[kh:kh + ho, kw:kw + wo, :].reshape(ho * wo, c2p)
            acc = acc + jnp.dot(xs, w_ref[3 * kh + kw],
                                preferred_element_type=jnp.float32)
    y_ref[...] = acc.astype(y_ref.dtype)
    st_ref[0:1, :] = jnp.sum(acc, axis=0, keepdims=True)
    st_ref[1:2, :] = jnp.sum(acc * acc, axis=0, keepdims=True)


def _bn2_residual_relu_kernel(y_ref, xr_ref, wr_ref, sc_ref, sh_ref, br_ref,
                              o_ref):
    """out = relu( y*scale + shift + xr @ Wr + br ), row-tiled, f32 math."""
    res = jnp.dot(xr_ref[...], wr_ref[...], preferred_element_type=jnp.float32)
    o_ref[...] = jnp.maximum(
        y_ref[...].astype(jnp.float32) * sc_ref[...] + sh_ref[...]
        + res + br_ref[...], 0.0)


# ----------------------------------------------------------------------------
# pallas_call wrappers
# ----------------------------------------------------------------------------
def _conv1_call(xp, w1, *, n, hh, wh, cin, ho, wo, c2p, out_dtype):
    kernel = functools.partial(_conv1_stats_kernel, ho=ho, wo=wo, hh=hh,
                               c2p=c2p)
    return pl.pallas_call(
        kernel,
        grid=(n,),
        in_specs=[
            pl.BlockSpec((None, 4 * hh, wh, cin), lambda i: (i, 0, 0, 0)),
            pl.BlockSpec((9, cin, c2p), lambda i: (0, 0, 0)),     # resident
        ],
        out_specs=[
            pl.BlockSpec((None, ho, wo, c2p), lambda i: (i, 0, 0, 0)),
            pl.BlockSpec((None, 2, c2p), lambda i: (i, 0, 0)),
        ],
        out_shape=[
            jax.ShapeDtypeStruct((n, ho, wo, c2p), out_dtype),
            jax.ShapeDtypeStruct((n, 2, c2p), jnp.float32),
        ],
        compiler_params=_compiler_params(),
    )(xp, w1)


def _conv2_call(y1_pre, scale1, shift1, w2, *, n, ho, wo, c2p, mxu_dtype):
    kernel = functools.partial(_conv2_fused_kernel, ho=ho, wo=wo, c2p=c2p)
    return pl.pallas_call(
        kernel,
        grid=(n,),
        in_specs=[
            pl.BlockSpec((None, ho, wo, c2p), lambda i: (i, 0, 0, 0)),
            pl.BlockSpec((1, c2p), lambda i: (0, 0)),             # resident
            pl.BlockSpec((1, c2p), lambda i: (0, 0)),             # resident
            pl.BlockSpec((9, c2p, c2p), lambda i: (0, 0, 0)),     # resident
        ],
        out_specs=[
            pl.BlockSpec((None, ho * wo, c2p), lambda i: (i, 0, 0)),
            pl.BlockSpec((None, 2, c2p), lambda i: (i, 0, 0)),
        ],
        out_shape=[
            jax.ShapeDtypeStruct((n, ho * wo, c2p), mxu_dtype),
            jax.ShapeDtypeStruct((n, 2, c2p), jnp.float32),
        ],
        scratch_shapes=[pltpu.VMEM((ho + 2, wo + 2, c2p), mxu_dtype)],
        compiler_params=_compiler_params(),
    )(y1_pre, scale1, shift1, w2)


def _bn2_call(y2flat, xr, wr, scale, shift, br, *, mp, tile_m, cin, c2p):
    # Row (M) tiling with automatic double-buffered HBM<->VMEM pipelining.
    return pl.pallas_call(
        _bn2_residual_relu_kernel,
        grid=(mp // tile_m,),
        in_specs=[
            pl.BlockSpec((tile_m, c2p), lambda i: (i, 0)),
            pl.BlockSpec((tile_m, cin), lambda i: (i, 0)),
            pl.BlockSpec((cin, c2p), lambda i: (0, 0)),           # resident
            pl.BlockSpec((1, c2p), lambda i: (0, 0)),             # resident
            pl.BlockSpec((1, c2p), lambda i: (0, 0)),             # resident
            pl.BlockSpec((1, c2p), lambda i: (0, 0)),             # resident
        ],
        out_specs=pl.BlockSpec((tile_m, c2p), lambda i: (i, 0)),
        out_shape=jax.ShapeDtypeStruct((mp, c2p), jnp.float32),
        compiler_params=_compiler_params(),
    )(y2flat, xr, wr, scale, shift, br)


# ----------------------------------------------------------------------------
# Plain-JAX glue (tiny per-channel math, layout prep)
# ----------------------------------------------------------------------------
def _bn_scale_shift(stats, gamma, beta, m):
    """stats: (N, 2, c2p) per-image [sum, sumsq] partials -> scale, shift.

    gamma/beta are zero-padded for lanes >= c2, so padded channels get
    scale = shift = 0 (nothing can leak through BN on padded lanes).
    TODO(synk): switch to a centered/Welford combine if E[x^2]-E[x]^2 loses
    precision at very large feature-map sizes.
    """
    s = jnp.sum(stats, axis=0)                       # (2, c2p)
    mean = s[0] / m
    var = jnp.maximum(s[1] / m - mean * mean, 0.0)   # biased var (training BN)
    scale = gamma * jax.lax.rsqrt(var + BN_EPS)
    shift = beta - mean * scale
    return scale.reshape(1, -1), shift.reshape(1, -1)


def init_params(dim, key):
    k1, k2, k3, k4, k5, k6 = jax.random.split(key, 6)
    c2 = 2 * dim
    return {
        "w1": jax.random.normal(k1, (c2, dim, 3, 3), jnp.float32) * 0.1,
        "b1": jax.random.normal(k2, (c2,), jnp.float32) * 0.1,
        "w2": jax.random.normal(k3, (c2, c2, 3, 3), jnp.float32) * 0.1,
        "b2": jax.random.normal(k4, (c2,), jnp.float32) * 0.1,
        "wr": jax.random.normal(k5, (c2, dim, 1, 1), jnp.float32) * 0.1,
        "br": jax.random.normal(k6, (c2,), jnp.float32) * 0.1,
        "g1": jnp.ones((c2,), jnp.float32),
        "beta1": jnp.zeros((c2,), jnp.float32),
        "g2": jnp.ones((c2,), jnp.float32),
        "beta2": jnp.zeros((c2,), jnp.float32),
    }


@functools.partial(jax.jit, static_argnames=("mxu_dtype",))
def bottleneck_forward(x_nchw, params, mxu_dtype=jnp.bfloat16):
    """Forward pass. x_nchw: [N, dim, H, W] -> [N, 2*dim, ceil(H/2), ceil(W/2)]."""
    n, cin, h, w = x_nchw.shape
    c2 = params["w1"].shape[0]
    c2p = _round_up(c2, LANE)          # lane-dense output channels
    ho = (h - 1) // 2 + 1
    wo = (w - 1) // 2 + 1
    hh, wh = ho + 1, wo + 1
    m = n * ho * wo

    # Cast to the MXU dtype BEFORE the pad / parity gather / residual slice so
    # all host-side prep traffic moves half-width data on the bf16 path.
    x = jnp.transpose(x_nchw, (0, 2, 3, 1)).astype(mxu_dtype)   # NHWC

    # Parity-plane decomposition of the zero-padded input: plane (ph, pw)
    # holds padded pixels (2r+ph, 2c+pw).  ~1x the input size and every
    # stride-2 tap becomes a contiguous in-kernel slice.
    xpad = jnp.pad(x, ((0, 0), (1, 2), (1, 2), (0, 0)))
    planes = [xpad[:, ph:ph + 2 * hh:2, pw:pw + 2 * wh:2, :]
              for ph in range(2) for pw in range(2)]   # each (n, hh, wh, cin)
    xp = jnp.concatenate(planes, axis=1)               # (n, 4*hh, wh, cin)

    # Residual 1x1 stride-2 conv input == the (odd,odd) parity plane.
    xr = planes[3][:, :ho, :wo, :].reshape(m, cin)

    # Weights in (tap, Cin, Cout) layout, Cout padded to a multiple of 128.
    def conv3x3_w(wt):               # [Cout, Cin, 3, 3] -> (9, Cin*, c2p)
        c_out, c_in = wt.shape[0], wt.shape[1]
        wt = jnp.transpose(wt, (2, 3, 1, 0)).reshape(9, c_in, c_out)
        pad_in = (c2p - c_in) if c_in == c2 else 0
        return jnp.pad(
            wt, ((0, 0), (0, pad_in), (0, c2p - c_out))).astype(mxu_dtype)

    w1m = conv3x3_w(params["w1"])                              # (9, cin, c2p)
    w2m = conv3x3_w(params["w2"])                              # (9, c2p, c2p)
    wrm = jnp.pad(params["wr"][:, :, 0, 0].T,
                  ((0, 0), (0, c2p - c2))).astype(mxu_dtype)   # (cin, c2p)

    def padv(v):
        return jnp.pad(v.astype(jnp.float32), (0, c2p - c2))

    g1, beta1 = padv(params["g1"]), padv(params["beta1"])
    g2, beta2 = padv(params["g2"]), padv(params["beta2"])
    br = padv(params["br"]).reshape(1, c2p)
    # NOTE: conv_1 / conv_2 biases (b1, b2) are intentionally dropped — a
    # per-channel constant added before training-mode BatchNorm cancels
    # exactly in the mean subtraction.  br (residual path, no BN) is kept.

    # --- conv_1 + per-image BN1 sum/sumsq partials ---------------------------
    y1_pre, st1 = _conv1_call(xp, w1m, n=n, hh=hh, wh=wh, cin=cin,
                              ho=ho, wo=wo, c2p=c2p, out_dtype=mxu_dtype)
    scale1, shift1 = _bn_scale_shift(st1, g1, beta1, m)

    # --- fused BN1-apply + ReLU + halo + conv_2 + BN2 partials ---------------
    y2_pre, st2 = _conv2_call(y1_pre, scale1, shift1, w2m,
                              n=n, ho=ho, wo=wo, c2p=c2p, mxu_dtype=mxu_dtype)
    scale2, shift2 = _bn_scale_shift(st2, g2, beta2, m)

    # --- BN2 apply + residual 1x1 conv + bias + ReLU, tiled over rows --------
    tile_m = 1024 if m >= 1024 else _round_up(m, 8)
    mp = _round_up(m, tile_m)
    y2flat = y2_pre.reshape(m, c2p)
    if mp != m:
        y2flat = jnp.pad(y2flat, ((0, mp - m), (0, 0)))
        xr = jnp.pad(xr, ((0, mp - m), (0, 0)))
    out_flat = _bn2_call(y2flat, xr, wrm, scale2, shift2, br,
                         mp=mp, tile_m=tile_m, cin=cin, c2p=c2p)

    out = out_flat[:m, :c2].reshape(n, ho, wo, c2)
    return jnp.transpose(out, (0, 3, 1, 2))                   # back to NCHW


# ----------------------------------------------------------------------------
# Pure-JAX reference (for sanity check)
# ----------------------------------------------------------------------------
def _ref_conv(x_nchw, w, b, stride, pad):
    out = jax.lax.conv_general_dilated(
        x_nchw, w, window_strides=(stride, stride),
        padding=[(pad, pad), (pad, pad)],
        dimension_numbers=("NCHW", "OIHW", "NCHW"))
    return out + b.reshape(1, -1, 1, 1)


def _ref_bn(x_nchw, gamma, beta):
    mean = jnp.mean(x_nchw, axis=(0, 2, 3), keepdims=True)
    var = jnp.mean((x_nchw - mean) ** 2, axis=(0, 2, 3), keepdims=True)
    xn = (x_nchw - mean) * jax.lax.rsqrt(var + BN_EPS)
    return xn * gamma.reshape(1, -1, 1, 1) + beta.reshape(1, -1, 1, 1)


def bottleneck_reference(x, p):
    residual = _ref_conv(x, p["wr"], p["br"], stride=2, pad=0)
    y = _ref_conv(x, p["w1"], p["b1"], stride=2, pad=1)
    y = jax.nn.relu(_ref_bn(y, p["g1"], p["beta1"]))
    y = _ref_bn(_ref_conv(y, p["w2"], p["b2"], stride=1, pad=1),
                p["g2"], p["beta2"])
    return jax.nn.relu(y + residual)


# ----------------------------------------------------------------------------
if __name__ == "__main__":
    key = jax.random.PRNGKey(0)
    kx, kp = jax.random.split(key)

    N, DIM, H, W = 2, 4, 16, 16
    x = jax.random.normal(kx, (N, DIM, H, W), jnp.float32)
    params = init_params(DIM, kp)

    ref = jax.block_until_ready(bottleneck_reference(x, params))

    # Exact-math path (f32 MXU operands and f32 intermediates): tight check.
    out_f32 = jax.block_until_ready(
        bottleneck_forward(x, params, mxu_dtype=jnp.float32))
    assert out_f32.shape == (N, 2 * DIM, H // 2, W // 2), out_f32.shape
    if not jnp.allclose(out_f32, ref, rtol=1e-4, atol=1e-4):
        raise AssertionError("f32 Pallas output does not match JAX reference")

    # Perf path (bf16 MXU operands AND bf16 y1/y2 intermediates, f32
    # accumulation / BN math): loose tolerance reflects bf16 rounding only;
    # the f32 path above is the correctness gate.
    out_bf16 = jax.block_until_ready(
        bottleneck_forward(x, params, mxu_dtype=jnp.bfloat16))
    assert out_bf16.shape == (N, 2 * DIM, H // 2, W // 2), out_bf16.shape
    if not jnp.allclose(out_bf16, ref, rtol=1e-1, atol=1e-1):
        raise AssertionError("bf16 Pallas output does not match JAX reference")

    print("KERNEL_OK")
</pallas_src>

<mosaic_0001>
module attributes {stable_mosaic.version = 11 : i64} {
  func.func @_conv1_stats_kernel(%arg0: i32, %arg1: memref<1x36x9x4xf32, #tpu.memory_space<vmem>>, %arg2: memref<9x4x128xf32, #tpu.memory_space<vmem>>, %arg3: memref<1x8x8x128xf32, #tpu.memory_space<vmem>>, %arg4: memref<1x2x128xf32, #tpu.memory_space<vmem>>) attributes {dimension_semantics = [#tpu.dimension_semantics<parallel>], iteration_bounds = array<i64: 2>, scalar_prefetch = 0 : i64, scratch_operands = 0 : i64, tpu.core_type = #tpu.core_type<tc>, window_params = [{transform_indices = @transform_0, window_bounds = array<i64: 1, 36, 9, 4>}, {pipeline_mode = #tpu.pipeline_mode<synchronous>, transform_indices = @transform_1, window_bounds = array<i64: 9, 4, 128>}, {transform_indices = @transform_2, window_bounds = array<i64: 1, 8, 8, 128>}, {transform_indices = @transform_3, window_bounds = array<i64: 1, 2, 128>}]} {
    %cst = arith.constant 0.000000e+00 : f32
    %0 = vector.broadcast %cst : f32 to vector<64x128xf32>
    %c0 = arith.constant 0 : index
    %c0_0 = arith.constant 0 : index
    %c0_1 = arith.constant 0 : index
    %c0_2 = arith.constant 0 : index
    %1 = vector.load %arg1[%c0, %c0_0, %c0_1, %c0_2] : memref<1x36x9x4xf32, #tpu.memory_space<vmem>>, vector<1x8x8x4xf32>
    %2 = vector.shape_cast %1 : vector<1x8x8x4xf32> to vector<8x8x4xf32>
    %3 = vector.shape_cast %2 : vector<8x8x4xf32> to vector<64x4xf32>
    %c0_3 = arith.constant 0 : index
    %c0_4 = arith.constant 0 : index
    %c0_5 = arith.constant 0 : index
    %4 = vector.load %arg2[%c0_3, %c0_4, %c0_5] : memref<9x4x128xf32, #tpu.memory_space<vmem>>, vector<1x4x128xf32>
    %5 = vector.shape_cast %4 : vector<1x4x128xf32> to vector<4x128xf32>
    %cst_6 = arith.constant dense<0.000000e+00> : vector<64x128xf32>
    %6 = tpu.matmul %3, %5, %cst_6 {dimension_numbers = #tpu.dot_dimension_numbers<[1], [0], [0], [1], [0, 0, 1, 1], [], []>} : vector<64x4xf32>, vector<4x128xf32>, vector<64x128xf32> -> vector<64x128xf32>
    %7 = arith.addf %0, %6 : vector<64x128xf32>
    %c0_7 = arith.constant 0 : index
    %c9 = arith.constant 9 : index
    %c0_8 = arith.constant 0 : index
    %c0_9 = arith.constant 0 : index
    %8 = vector.load %arg1[%c0_7, %c9, %c0_8, %c0_9] : memref<1x36x9x4xf32, #tpu.memory_space<vmem>>, vector<1x8x8x4xf32>
    %9 = vector.shape_cast %8 : vector<1x8x8x4xf32> to vector<8x8x4xf32>
    %10 = vector.shape_cast %9 : vector<8x8x4xf32> to vector<64x4xf32>
    %c1 = arith.constant 1 : index
    %c0_10 = arith.constant 0 : index
    %c0_11 = arith.constant 0 : index
    %11 = vector.load %arg2[%c1, %c0_10, %c0_11] : memref<9x4x128xf32, #tpu.memory_space<vmem>>, vector<1x4x128xf32>
    %12 = vector.shape_cast %11 : vector<1x4x128xf32> to vector<4x128xf32>
    %cst_12 = arith.constant dense<0.000000e+00> : vector<64x128xf32>
    %13 = tpu.matmul %10, %12, %cst_12 {dimension_numbers = #tpu.dot_dimension_numbers<[1], [0], [0], [1], [0, 0, 1, 1], [], []>} : vector<64x4xf32>, vector<4x128xf32>, vector<64x128xf32> -> vector<64x128xf32>
    %14 = arith.addf %7, %13 : vector<64x128xf32>
    %c0_13 = arith.constant 0 : index
    %c0_14 = arith.constant 0 : index
    %c1_15 = arith.constant 1 : index
    %c0_16 = arith.constant 0 : index
    %15 = vector.load %arg1[%c0_13, %c0_14, %c1_15, %c0_16] : memref<1x36x9x4xf32, #tpu.memory_space<vmem>>, vector<1x8x8x4xf32>
    %16 = vector.shape_cast %15 : vector<1x8x8x4xf32> to vector<8x8x4xf32>
    %17 = vector.shape_cast %16 : vector<8x8x4xf32> to vector<64x4xf32>
    %c2 = arith.constant 2 : index
    %c0_17 = arith.constant 0 : index
    %c0_18 = arith.constant 0 : index
    %18 = vector.load %arg2[%c2, %c0_17, %c0_18] : memref<9x4x128xf32, #tpu.memory_space<vmem>>, vector<1x4x128xf32>
    %19 = vector.shape_cast %18 : vector<1x4x128xf32> to vector<4x128xf32>
    %cst_19 = arith.constant dense<0.000000e+00> : vector<64x128xf32>
    %20 = tpu.matmul %17, %19, %cst_19 {dimension_numbers = #tpu.dot_dimension_numbers<[1], [0], [0], [1], [0, 0, 1, 1], [], []>} : vector<64x4xf32>, vector<4x128xf32>, vector<64x128xf32> -> vector<64x128xf32>
    %21 = arith.addf %14, %20 : vector<64x128xf32>
    %c0_20 = arith.constant 0 : index
    %c18 = arith.constant 18 : index
    %c0_21 = arith.constant 0 : index
    %c0_22 = arith.constant 0 : index
    %22 = vector.load %arg1[%c0_20, %c18, %c0_21, %c0_22] : memref<1x36x9x4xf32, #tpu.memory_space<vmem>>, vector<1x8x8x4xf32>
    %23 = vector.shape_cast %22 : vector<1x8x8x4xf32> to vector<8x8x4xf32>
    %24 = vector.shape_cast %23 : vector<8x8x4xf32> to vector<64x4xf32>
    %c3 = arith.constant 3 : index
    %c0_23 = arith.constant 0 : index
    %c0_24 = arith.constant 0 : index
    %25 = vector.load %arg2[%c3, %c0_23, %c0_24] : memref<9x4x128xf32, #tpu.memory_space<vmem>>, vector<1x4x128xf32>
    %26 = vector.shape_cast %25 : vector<1x4x128xf32> to vector<4x128xf32>
    %cst_25 = arith.constant dense<0.000000e+00> : vector<64x128xf32>
    %27 = tpu.matmul %24, %26, %cst_25 {dimension_numbers = #tpu.dot_dimension_numbers<[1], [0], [0], [1], [0, 0, 1, 1], [], []>} : vector<64x4xf32>, vector<4x128xf32>, vector<64x128xf32> -> vector<64x128xf32>
    %28 = arith.addf %21, %27 : vector<64x128xf32>
    %c0_26 = arith.constant 0 : index
    %c27 = arith.constant 27 : index
    %c0_27 = arith.constant 0 : index
    %c0_28 = arith.constant 0 : index
    %29 = vector.load %arg1[%c0_26, %c27, %c0_27, %c0_28] : memref<1x36x9x4xf32, #tpu.memory_space<vmem>>, vector<1x8x8x4xf32>
    %30 = vector.shape_cast %29 : vector<1x8x8x4xf32> to vector<8x8x4xf32>
    %31 = vector.shape_cast %30 : vector<8x8x4xf32> to vector<64x4xf32>
    %c4 = arith.constant 4 : index
    %c0_29 = arith.constant 0 : index
    %c0_30 = arith.constant 0 : index
    %32 = vector.load %arg2[%c4, %c0_29, %c0_30] : memref<9x4x128xf32, #tpu.memory_space<vmem>>, vector<1x4x128xf32>
    %33 = vector.shape_cast %32 : vector<1x4x128xf32> to vector<4x128xf32>
    %cst_31 = arith.constant dense<0.000000e+00> : vector<64x128xf32>
    %34 = tpu.matmul %31, %33, %cst_31 {dimension_numbers = #tpu.dot_dimension_numbers<[1], [0], [0], [1], [0, 0, 1, 1], [], []>} : vector<64x4xf32>, vector<4x128xf32>, vector<64x128xf32> -> vector<64x128xf32>
    %35 = arith.addf %28, %34 : vector<64x128xf32>
    %c0_32 = arith.constant 0 : index
    %c18_33 = arith.constant 18 : index
    %c1_34 = arith.constant 1 : index
    %c0_35 = arith.constant 0 : index
    %36 = vector.load %arg1[%c0_32, %c18_33, %c1_34, %c0_35] : memref<1x36x9x4xf32, #tpu.memory_space<vmem>>, vector<1x8x8x4xf32>
    %37 = vector.shape_cast %36 : vector<1x8x8x4xf32> to vector<8x8x4xf32>
    %38 = vector.shape_cast %37 : vector<8x8x4xf32> to vector<64x4xf32>
    %c5 = arith.constant 5 : index
    %c0_36 = arith.constant 0 : index
    %c0_37 = arith.constant 0 : index
    %39 = vector.load %arg2[%c5, %c0_36, %c0_37] : memref<9x4x128xf32, #tpu.memory_space<vmem>>, vector<1x4x128xf32>
    %40 = vector.shape_cast %39 : vector<1x4x128xf32> to vector<4x128xf32>
    %cst_38 = arith.constant dense<0.000000e+00> : vector<64x128xf32>
    %41 = tpu.matmul %38, %40, %cst_38 {dimension_numbers = #tpu.dot_dimension_numbers<[1], [0], [0], [1], [0, 0, 1, 1], [], []>} : vector<64x4xf32>, vector<4x128xf32>, vector<64x128xf32> -> vector<64x128xf32>
    %42 = arith.addf %35, %41 : vector<64x128xf32>
    %c0_39 = arith.constant 0 : index
    %c1_40 = arith.constant 1 : index
    %c0_41 = arith.constant 0 : index
    %c0_42 = arith.constant 0 : index
    %43 = vector.load %arg1[%c0_39, %c1_40, %c0_41, %c0_42] : memref<1x36x9x4xf32, #tpu.memory_space<vmem>>, vector<1x8x8x4xf32>
    %44 = vector.shape_cast %43 : vector<1x8x8x4xf32> to vector<8x8x4xf32>
    %45 = vector.shape_cast %44 : vector<8x8x4xf32> to vector<64x4xf32>
    %c6 = arith.constant 6 : index
    %c0_43 = arith.constant 0 : index
    %c0_44 = arith.constant 0 : index
    %46 = vector.load %arg2[%c6, %c0_43, %c0_44] : memref<9x4x128xf32, #tpu.memory_space<vmem>>, vector<1x4x128xf32>
    %47 = vector.shape_cast %46 : vector<1x4x128xf32> to vector<4x128xf32>
    %cst_45 = arith.constant dense<0.000000e+00> : vector<64x128xf32>
    %48 = tpu.matmul %45, %47, %cst_45 {dimension_numbers = #tpu.dot_dimension_numbers<[1], [0], [0], [1], [0, 0, 1, 1], [], []>} : vector<64x4xf32>, vector<4x128xf32>, vector<64x128xf32> -> vector<64x128xf32>
    %49 = arith.addf %42, %48 : vector<64x128xf32>
    %c0_46 = arith.constant 0 : index
    %c10 = arith.constant 10 : index
    %c0_47 = arith.constant 0 : index
    %c0_48 = arith.constant 0 : index
    %50 = vector.load %arg1[%c0_46, %c10, %c0_47, %c0_48] : memref<1x36x9x4xf32, #tpu.memory_space<vmem>>, vector<1x8x8x4xf32>
    %51 = vector.shape_cast %50 : vector<1x8x8x4xf32> to vector<8x8x4xf32>
    %52 = vector.shape_cast %51 : vector<8x8x4xf32> to vector<64x4xf32>
    %c7 = arith.constant 7 : index
    %c0_49 = arith.constant 0 : index
    %c0_50 = arith.constant 0 : index
    %53 = vector.load %arg2[%c7, %c0_49, %c0_50] : memref<9x4x128xf32, #tpu.memory_space<vmem>>, vector<1x4x128xf32>
    %54 = vector.shape_cast %53 : vector<1x4x128xf32> to vector<4x128xf32>
    %cst_51 = arith.constant dense<0.000000e+00> : vector<64x128xf32>
    %55 = tpu.matmul %52, %54, %cst_51 {dimension_numbers = #tpu.dot_dimension_numbers<[1], [0], [0], [1], [0, 0, 1, 1], [], []>} : vector<64x4xf32>, vector<4x128xf32>, vector<64x128xf32> -> vector<64x128xf32>
    %56 = arith.addf %49, %55 : vector<64x128xf32>
    %c0_52 = arith.constant 0 : index
    %c1_53 = arith.constant 1 : index
    %c1_54 = arith.constant 1 : index
    %c0_55 = arith.constant 0 : index
    %57 = vector.load %arg1[%c0_52, %c1_53, %c1_54, %c0_55] : memref<1x36x9x4xf32, #tpu.memory_space<vmem>>, vector<1x8x8x4xf32>
    %58 = vector.shape_cast %57 : vector<1x8x8x4xf32> to vector<8x8x4xf32>
    %59 = vector.shape_cast %58 : vector<8x8x4xf32> to vector<64x4xf32>
    %c8 = arith.constant 8 : index
    %c0_56 = arith.constant 0 : index
    %c0_57 = arith.constant 0 : index
    %60 = vector.load %arg2[%c8, %c0_56, %c0_57] : memref<9x4x128xf32, #tpu.memory_space<vmem>>, vector<1x4x128xf32>
    %61 = vector.shape_cast %60 : vector<1x4x128xf32> to vector<4x128xf32>
    %cst_58 = arith.constant dense<0.000000e+00> : vector<64x128xf32>
    %62 = tpu.matmul %59, %61, %cst_58 {dimension_numbers = #tpu.dot_dimension_numbers<[1], [0], [0], [1], [0, 0, 1, 1], [], []>} : vector<64x4xf32>, vector<4x128xf32>, vector<64x128xf32> -> vector<64x128xf32>
    %63 = arith.addf %56, %62 : vector<64x128xf32>
    %64 = vector.shape_cast %63 : vector<64x128xf32> to vector<8x8x128xf32>
    %c0_59 = arith.constant 0 : index
    %c0_60 = arith.constant 0 : index
    %c0_61 = arith.constant 0 : index
    %c0_62 = arith.constant 0 : index
    %65 = vector.load %arg3[%c0_59, %c0_60, %c0_61, %c0_62] : memref<1x8x8x128xf32, #tpu.memory_space<vmem>>, vector<1x8x8x128xf32>
    %66 = vector.shape_cast %65 : vector<1x8x8x128xf32> to vector<8x8x128xf32>
    %67 = vector.shape_cast %64 : vector<8x8x128xf32> to vector<1x8x8x128xf32>
    tpu.vector_store %arg3[%c0_59, %c0_60, %c0_61, %c0_62], %67 {strides = array<i32>} : memref<1x8x8x128xf32, #tpu.memory_space<vmem>>, vector<1x8x8x128xf32>,
    %cst_63 = arith.constant dense<0.000000e+00> : vector<128xf32>
    %68 = vector.multi_reduction <add>, %63, %cst_63 [0] : vector<64x128xf32> to vector<128xf32>
    %69 = vector.shape_cast %68 : vector<128xf32> to vector<1x128xf32>
    %c0_64 = arith.constant 0 : index
    %c0_65 = arith.constant 0 : index
    %c0_66 = arith.constant 0 : index
    %70 = vector.load %arg4[%c0_64, %c0_65, %c0_66] : memref<1x2x128xf32, #tpu.memory_space<vmem>>, vector<1x1x128xf32>
    %71 = vector.shape_cast %70 : vector<1x1x128xf32> to vector<1x128xf32>
    %72 = vector.shape_cast %69 : vector<1x128xf32> to vector<1x1x128xf32>
    tpu.vector_store %arg4[%c0_64, %c0_65, %c0_66], %72 {strides = array<i32>} : memref<1x2x128xf32, #tpu.memory_space<vmem>>, vector<1x1x128xf32>,
    %73 = arith.mulf %63, %63 : vector<64x128xf32>
    %cst_67 = arith.constant dense<0.000000e+00> : vector<128xf32>
    %74 = vector.multi_reduction <add>, %73, %cst_67 [0] : vector<64x128xf32> to vector<128xf32>
    %75 = vector.shape_cast %74 : vector<128xf32> to vector<1x128xf32>
    %c0_68 = arith.constant 0 : index
    %c1_69 = arith.constant 1 : index
    %c0_70 = arith.constant 0 : index
    %76 = vector.load %arg4[%c0_68, %c1_69, %c0_70] : memref<1x2x128xf32, #tpu.memory_space<vmem>>, vector<1x1x128xf32>
    %77 = vector.shape_cast %76 : vector<1x1x128xf32> to vector<1x128xf32>
    %78 = vector.shape_cast %75 : vector<1x128xf32> to vector<1x1x128xf32>
    tpu.vector_store %arg4[%c0_68, %c1_69, %c0_70], %78 {strides = array<i32>} : memref<1x2x128xf32, #tpu.memory_space<vmem>>, vector<1x1x128xf32>,
    return
  }
  func.func @transform_0(%arg0: i32) -> (i32, i32, i32, i32) {
    %c0_i32 = arith.constant 0 : i32
    %c0_i32_0 = arith.constant 0 : i32
    %c0_i32_1 = arith.constant 0 : i32
    %c0_i32_2 = arith.constant 0 : i32
    return %arg0, %c0_i32, %c0_i32_0, %c0_i32_1 : i32, i32, i32, i32
  }
  func.func @transform_1(%arg0: i32) -> (i32, i32, i32) {
    %c0_i32 = arith.constant 0 : i32
    %c0_i32_0 = arith.constant 0 : i32
    %c0_i32_1 = arith.constant 0 : i32
    %c0_i32_2 = arith.constant 0 : i32
    return %c0_i32, %c0_i32_0, %c0_i32_1 : i32, i32, i32
  }
  func.func @transform_2(%arg0: i32) -> (i32, i32, i32, i32) {
    %c0_i32 = arith.constant 0 : i32
    %c0_i32_0 = arith.constant 0 : i32
    %c0_i32_1 = arith.constant 0 : i32
    %c0_i32_2 = arith.constant 0 : i32
    return %arg0, %c0_i32, %c0_i32_0, %c0_i32_1 : i32, i32, i32, i32
  }
  func.func @transform_3(%arg0: i32) -> (i32, i32, i32) {
    %c0_i32 = arith.constant 0 : i32
    %c0_i32_0 = arith.constant 0 : i32
    %c0_i32_1 = arith.constant 0 : i32
    return %arg0, %c0_i32, %c0_i32_0 : i32, i32, i32
  }
}

module attributes {stable_mosaic.version = 11 : i64} {
  func.func @_conv2_fused_kernel(%arg0: i32, %arg1: memref<1x8x8x128xf32, #tpu.memory_space<vmem>>, %arg2: memref<1x128xf32, #tpu.memory_space<vmem>>, %arg3: memref<1x128xf32, #tpu.memory_space<vmem>>, %arg4: memref<9x128x128xf32, #tpu.memory_space<vmem>>, %arg5: memref<1x64x128xf32, #tpu.memory_space<vmem>>, %arg6: memref<1x2x128xf32, #tpu.memory_space<vmem>>, %arg7: memref<10x10x128xf32, #tpu.memory_space<vmem>>) attributes {dimension_semantics = [#tpu.dimension_semantics<parallel>], iteration_bounds = array<i64: 2>, scalar_prefetch = 0 : i64, scratch_operands = 1 : i64, tpu.core_type = #tpu.core_type<tc>, window_params = [{transform_indices = @transform_0, window_bounds = array<i64: 1, 8, 8, 128>}, {pipeline_mode = #tpu.pipeline_mode<synchronous>, transform_indices = @transform_1, window_bounds = array<i64: 1, 128>}, {pipeline_mode = #tpu.pipeline_mode<synchronous>, transform_indices = @transform_2, window_bounds = array<i64: 1, 128>}, {pipeline_mode = #tpu.pipeline_mode<synchronous>, transform_indices = @transform_3, window_bounds = array<i64: 9, 128, 128>}, {transform_indices = @transform_4, window_bounds = array<i64: 1, 64, 128>}, {transform_indices = @transform_5, window_bounds = array<i64: 1, 2, 128>}]} {
    %c0 = arith.constant 0 : index
    %c0_0 = arith.constant 0 : index
    %c0_1 = arith.constant 0 : index
    %c0_2 = arith.constant 0 : index
    %0 = vector.load %arg1[%c0, %c0_0, %c0_1, %c0_2] : memref<1x8x8x128xf32, #tpu.memory_space<vmem>>, vector<1x8x8x128xf32>
    %1 = vector.shape_cast %0 : vector<1x8x8x128xf32> to vector<8x8x128xf32>
    %c0_3 = arith.constant 0 : index
    %c0_4 = arith.constant 0 : index
    %2 = vector.load %arg2[%c0_3, %c0_4] : memref<1x128xf32, #tpu.memory_space<vmem>>, vector<1x128xf32>
    %3 = vector.shape_cast %2 : vector<1x128xf32> to vector<1x1x128xf32>
    %4 = vector.broadcast %3 : vector<1x1x128xf32> to vector<8x8x128xf32>
    %5 = arith.mulf %1, %4 : vector<8x8x128xf32>
    %c0_5 = arith.constant 0 : index
    %c0_6 = arith.constant 0 : index
    %6 = vector.load %arg3[%c0_5, %c0_6] : memref<1x128xf32, #tpu.memory_space<vmem>>, vector<1x128xf32>
    %7 = vector.shape_cast %6 : vector<1x128xf32> to vector<1x1x128xf32>
    %8 = vector.broadcast %7 : vector<1x1x128xf32> to vector<8x8x128xf32>
    %9 = arith.addf %5, %8 : vector<8x8x128xf32>
    %cst = arith.constant 0.000000e+00 : f32
    %10 = vector.broadcast %cst : f32 to vector<8x8x128xf32>
    %11 = arith.maximumf %9, %10 : vector<8x8x128xf32>
    %cst_7 = arith.constant 0.000000e+00 : f32
    %12 = vector.broadcast %cst_7 : f32 to vector<1x10x128xf32>
    %c0_8 = arith.constant 0 : index
    %c0_9 = arith.constant 0 : index
    %c0_10 = arith.constant 0 : index
    %13 = vector.load %arg7[%c0_8, %c0_9, %c0_10] : memref<10x10x128xf32, #tpu.memory_space<vmem>>, vector<1x10x128xf32>
    tpu.vector_store %arg7[%c0_8, %c0_9, %c0_10], %12 {strides = array<i32>} : memref<10x10x128xf32, #tpu.memory_space<vmem>>, vector<1x10x128xf32>,
    %cst_11 = arith.constant 0.000000e+00 : f32
    %14 = vector.broadcast %cst_11 : f32 to vector<1x10x128xf32>
    %c9 = arith.constant 9 : index
    %c0_12 = arith.constant 0 : index
    %c0_13 = arith.constant 0 : index
    %15 = vector.load %arg7[%c9, %c0_12, %c0_13] : memref<10x10x128xf32, #tpu.memory_space<vmem>>, vector<1x10x128xf32>
    tpu.vector_store %arg7[%c9, %c0_12, %c0_13], %14 {strides = array<i32>} : memref<10x10x128xf32, #tpu.memory_space<vmem>>, vector<1x10x128xf32>,
    %cst_14 = arith.constant 0.000000e+00 : f32
    %16 = vector.broadcast %cst_14 : f32 to vector<10x1x128xf32>
    %c0_15 = arith.constant 0 : index
    %c0_16 = arith.constant 0 : index
    %c0_17 = arith.constant 0 : index
    %17 = vector.load %arg7[%c0_15, %c0_16, %c0_17] : memref<10x10x128xf32, #tpu.memory_space<vmem>>, vector<10x1x128xf32>
    tpu.vector_store %arg7[%c0_15, %c0_16, %c0_17], %16 {strides = array<i32>} : memref<10x10x128xf32, #tpu.memory_space<vmem>>, vector<10x1x128xf32>,
    %cst_18 = arith.constant 0.000000e+00 : f32
    %18 = vector.broadcast %cst_18 : f32 to vector<10x1x128xf32>
    %c0_19 = arith.constant 0 : index
    %c9_20 = arith.constant 9 : index
    %c0_21 = arith.constant 0 : index
    %19 = vector.load %arg7[%c0_19, %c9_20, %c0_21] : memref<10x10x128xf32, #tpu.memory_space<vmem>>, vector<10x1x128xf32>
    tpu.vector_store %arg7[%c0_19, %c9_20, %c0_21], %18 {strides = array<i32>} : memref<10x10x128xf32, #tpu.memory_space<vmem>>, vector<10x1x128xf32>,
    %c1 = arith.constant 1 : index
    %c1_22 = arith.constant 1 : index
    %c0_23 = arith.constant 0 : index
    %20 = vector.load %arg7[%c1, %c1_22, %c0_23] : memref<10x10x128xf32, #tpu.memory_space<vmem>>, vector<8x8x128xf32>
    tpu.vector_store %arg7[%c1, %c1_22, %c0_23], %11 {strides = array<i32>} : memref<10x10x128xf32, #tpu.memory_space<vmem>>, vector<8x8x128xf32>,
    %cst_24 = arith.constant 0.000000e+00 : f32
    %21 = vector.broadcast %cst_24 : f32 to vector<64x128xf32>
    %c0_25 = arith.constant 0 : index
    %c0_26 = arith.constant 0 : index
    %c0_27 = arith.constant 0 : index
    %22 = vector.load %arg7[%c0_25, %c0_26, %c0_27] : memref<10x10x128xf32, #tpu.memory_space<vmem>>, vector<8x8x128xf32>
    %23 = vector.shape_cast %22 : vector<8x8x128xf32> to vector<64x128xf32>
    %c0_28 = arith.constant 0 : index
    %c0_29 = arith.constant 0 : index
    %c0_30 = arith.constant 0 : index
    %24 = vector.load %arg4[%c0_28, %c0_29, %c0_30] : memref<9x128x128xf32, #tpu.memory_space<vmem>>, vector<1x128x128xf32>
    %25 = vector.shape_cast %24 : vector<1x128x128xf32> to vector<128x128xf32>
    %cst_31 = arith.constant dense<0.000000e+00> : vector<64x128xf32>
    %26 = tpu.matmul %23, %25, %cst_31 {dimension_numbers = #tpu.dot_dimension_numbers<[1], [0], [0], [1], [0, 0, 1, 1], [], []>} : vector<64x128xf32>, vector<128x128xf32>, vector<64x128xf32> -> vector<64x128xf32>
    %27 = arith.addf %21, %26 : vector<64x128xf32>
    %c0_32 = arith.constant 0 : index
    %c1_33 = arith.constant 1 : index
    %c0_34 = arith.constant 0 : index
    %28 = vector.load %arg7[%c0_32, %c1_33, %c0_34] : memref<10x10x128xf32, #tpu.memory_space<vmem>>, vector<8x8x128xf32>
    %29 = vector.shape_cast %28 : vector<8x8x128xf32> to vector<64x128xf32>
    %c1_35 = arith.constant 1 : index
    %c0_36 = arith.constant 0 : index
    %c0_37 = arith.constant 0 : index
    %30 = vector.load %arg4[%c1_35, %c0_36, %c0_37] : memref<9x128x128xf32, #tpu.memory_space<vmem>>, vector<1x128x128xf32>
    %31 = vector.shape_cast %30 : vector<1x128x128xf32> to vector<128x128xf32>
    %cst_38 = arith.constant dense<0.000000e+00> : vector<64x128xf32>
    %32 = tpu.matmul %29, %31, %cst_38 {dimension_numbers = #tpu.dot_dimension_numbers<[1], [0], [0], [1], [0, 0, 1, 1], [], []>} : vector<64x128xf32>, vector<128x128xf32>, vector<64x128xf32> -> vector<64x128xf32>
    %33 = arith.addf %27, %32 : vector<64x128xf32>
    %c0_39 = arith.constant 0 : index
    %c2 = arith.constant 2 : index
    %c0_40 = arith.constant 0 : index
    %34 = vector.load %arg7[%c0_39, %c2, %c0_40] : memref<10x10x128xf32, #tpu.memory_space<vmem>>, vector<8x8x128xf32>
    %35 = vector.shape_cast %34 : vector<8x8x128xf32> to vector<64x128xf32>
    %c2_41 = arith.constant 2 : index
    %c0_42 = arith.constant 0 : index
    %c0_43 = arith.constant 0 : index
    %36 = vector.load %arg4[%c2_41, %c0_42, %c0_43] : memref<9x128x128xf32, #tpu.memory_space<vmem>>, vector<1x128x128xf32>
    %37 = vector.shape_cast %36 : vector<1x128x128xf32> to vector<128x128xf32>
    %cst_44 = arith.constant dense<0.000000e+00> : vector<64x128xf32>
    %38 = tpu.matmul %35, %37, %cst_44 {dimension_numbers = #tpu.dot_dimension_numbers<[1], [0], [0], [1], [0, 0, 1, 1], [], []>} : vector<64x128xf32>, vector<128x128xf32>, vector<64x128xf32> -> vector<64x128xf32>
    %39 = arith.addf %33, %38 : vector<64x128xf32>
    %c1_45 = arith.constant 1 : index
    %c0_46 = arith.constant 0 : index
    %c0_47 = arith.constant 0 : index
    %40 = vector.load %arg7[%c1_45, %c0_46, %c0_47] : memref<10x10x128xf32, #tpu.memory_space<vmem>>, vector<8x8x128xf32>
    %41 = vector.shape_cast %40 : vector<8x8x128xf32> to vector<64x128xf32>
    %c3 = arith.constant 3 : index
    %c0_48 = arith.constant 0 : index
    %c0_49 = arith.constant 0 : index
    %42 = vector.load %arg4[%c3, %c0_48, %c0_49] : memref<9x128x128xf32, #tpu.memory_space<vmem>>, vector<1x128x128xf32>
    %43 = vector.shape_cast %42 : vector<1x128x128xf32> to vector<128x128xf32>
    %cst_50 = arith.constant dense<0.000000e+00> : vector<64x128xf32>
    %44 = tpu.matmul %41, %43, %cst_50 {dimension_numbers = #tpu.dot_dimension_numbers<[1], [0], [0], [1], [0, 0, 1, 1], [], []>} : vector<64x128xf32>, vector<128x128xf32>, vector<64x128xf32> -> vector<64x128xf32>
    %45 = arith.addf %39, %44 : vector<64x128xf32>
    %c1_51 = arith.constant 1 : index
    %c1_52 = arith.constant 1 : index
    %c0_53 = arith.constant 0 : index
    %46 = vector.load %arg7[%c1_51, %c1_52, %c0_53] : memref<10x10x128xf32, #tpu.memory_space<vmem>>, vector<8x8x128xf32>
    %47 = vector.shape_cast %46 : vector<8x8x128xf32> to vector<64x128xf32>
    %c4 = arith.constant 4 : index
    %c0_54 = arith.constant 0 : index
    %c0_55 = arith.constant 0 : index
    %48 = vector.load %arg4[%c4, %c0_54, %c0_55] : memref<9x128x128xf32, #tpu.memory_space<vmem>>, vector<1x128x128xf32>
    %49 = vector.shape_cast %48 : vector<1x128x128xf32> to vector<128x128xf32>
    %cst_56 = arith.constant dense<0.000000e+00> : vector<64x128xf32>
    %50 = tpu.matmul %47, %49, %cst_56 {dimension_numbers = #tpu.dot_dimension_numbers<[1], [0], [0], [1], [0, 0, 1, 1], [], []>} : vector<64x128xf32>, vector<128x128xf32>, vector<64x128xf32> -> vector<64x128xf32>
    %51 = arith.addf %45, %50 : vector<64x128xf32>
    %c1_57 = arith.constant 1 : index
    %c2_58 = arith.constant 2 : index
    %c0_59 = arith.constant 0 : index
    %52 = vector.load %arg7[%c1_57, %c2_58, %c0_59] : memref<10x10x128xf32, #tpu.memory_space<vmem>>, vector<8x8x128xf32>
    %53 = vector.shape_cast %52 : vector<8x8x128xf32> to vector<64x128xf32>
    %c5 = arith.constant 5 : index
    %c0_60 = arith.constant 0 : index
    %c0_61 = arith.constant 0 : index
    %54 = vector.load %arg4[%c5, %c0_60, %c0_61] : memref<9x128x128xf32, #tpu.memory_space<vmem>>, vector<1x128x128xf32>
    %55 = vector.shape_cast %54 : vector<1x128x128xf32> to vector<128x128xf32>
    %cst_62 = arith.constant dense<0.000000e+00> : vector<64x128xf32>
    %56 = tpu.matmul %53, %55, %cst_62 {dimension_numbers = #tpu.dot_dimension_numbers<[1], [0], [0], [1], [0, 0, 1, 1], [], []>} : vector<64x128xf32>, vector<128x128xf32>, vector<64x128xf32> -> vector<64x128xf32>
    %57 = arith.addf %51, %56 : vector<64x128xf32>
    %c2_63 = arith.constant 2 : index
    %c0_64 = arith.constant 0 : index
    %c0_65 = arith.constant 0 : index
    %58 = vector.load %arg7[%c2_63, %c0_64, %c0_65] : memref<10x10x128xf32, #tpu.memory_space<vmem>>, vector<8x8x128xf32>
    %59 = vector.shape_cast %58 : vector<8x8x128xf32> to vector<64x128xf32>
    %c6 = arith.constant 6 : index
    %c0_66 = arith.constant 0 : index
    %c0_67 = arith.constant 0 : index
    %60 = vector.load %arg4[%c6, %c0_66, %c0_67] : memref<9x128x128xf32, #tpu.memory_space<vmem>>, vector<1x128x128xf32>
    %61 = vector.shape_cast %60 : vector<1x128x128xf32> to vector<128x128xf32>
    %cst_68 = arith.constant dense<0.000000e+00> : vector<64x128xf32>
    %62 = tpu.matmul %59, %61, %cst_68 {dimension_numbers = #tpu.dot_dimension_numbers<[1], [0], [0], [1], [0, 0, 1, 1], [], []>} : vector<64x128xf32>, vector<128x128xf32>, vector<64x128xf32> -> vector<64x128xf32>
    %63 = arith.addf %57, %62 : vector<64x128xf32>
    %c2_69 = arith.constant 2 : index
    %c1_70 = arith.constant 1 : index
    %c0_71 = arith.constant 0 : index
    %64 = vector.load %arg7[%c2_69, %c1_70, %c0_71] : memref<10x10x128xf32, #tpu.memory_space<vmem>>, vector<8x8x128xf32>
    %65 = vector.shape_cast %64 : vector<8x8x128xf32> to vector<64x128xf32>
    %c7 = arith.constant 7 : index
    %c0_72 = arith.constant 0 : index
    %c0_73 = arith.constant 0 : index
    %66 = vector.load %arg4[%c7, %c0_72, %c0_73] : memref<9x128x128xf32, #tpu.memory_space<vmem>>, vector<1x128x128xf32>
    %67 = vector.shape_cast %66 : vector<1x128x128xf32> to vector<128x128xf32>
    %cst_74 = arith.constant dense<0.000000e+00> : vector<64x128xf32>
    %68 = tpu.matmul %65, %67, %cst_74 {dimension_numbers = #tpu.dot_dimension_numbers<[1], [0], [0], [1], [0, 0, 1, 1], [], []>} : vector<64x128xf32>, vector<128x128xf32>, vector<64x128xf32> -> vector<64x128xf32>
    %69 = arith.addf %63, %68 : vector<64x128xf32>
    %c2_75 = arith.constant 2 : index
    %c2_76 = arith.constant 2 : index
    %c0_77 = arith.constant 0 : index
    %70 = vector.load %arg7[%c2_75, %c2_76, %c0_77] : memref<10x10x128xf32, #tpu.memory_space<vmem>>, vector<8x8x128xf32>
    %71 = vector.shape_cast %70 : vector<8x8x128xf32> to vector<64x128xf32>
    %c8 = arith.constant 8 : index
    %c0_78 = arith.constant 0 : index
    %c0_79 = arith.constant 0 : index
    %72 = vector.load %arg4[%c8, %c0_78, %c0_79] : memref<9x128x128xf32, #tpu.memory_space<vmem>>, vector<1x128x128xf32>
    %73 = vector.shape_cast %72 : vector<1x128x128xf32> to vector<128x128xf32>
    %cst_80 = arith.constant dense<0.000000e+00> : vector<64x128xf32>
    %74 = tpu.matmul %71, %73, %cst_80 {dimension_numbers = #tpu.dot_dimension_numbers<[1], [0], [0], [1], [0, 0, 1, 1], [], []>} : vector<64x128xf32>, vector<128x128xf32>, vector<64x128xf32> -> vector<64x128xf32>
    %75 = arith.addf %69, %74 : vector<64x128xf32>
    %c0_81 = arith.constant 0 : index
    %c0_82 = arith.constant 0 : index
    %c0_83 = arith.constant 0 : index
    %76 = vector.load %arg5[%c0_81, %c0_82, %c0_83] : memref<1x64x128xf32, #tpu.memory_space<vmem>>, vector<1x64x128xf32>
    %77 = vector.shape_cast %76 : vector<1x64x128xf32> to vector<64x128xf32>
    %78 = vector.shape_cast %75 : vector<64x128xf32> to vector<1x64x128xf32>
    tpu.vector_store %arg5[%c0_81, %c0_82, %c0_83], %78 {strides = array<i32>} : memref<1x64x128xf32, #tpu.memory_space<vmem>>, vector<1x64x128xf32>,
    %cst_84 = arith.constant dense<0.000000e+00> : vector<128xf32>
    %79 = vector.multi_reduction <add>, %75, %cst_84 [0] : vector<64x128xf32> to vector<128xf32>
    %80 = vector.shape_cast %79 : vector<128xf32> to vector<1x128xf32>
    %c0_85 = arith.constant 0 : index
    %c0_86 = arith.constant 0 : index
    %c0_87 = arith.constant 0 : index
    %81 = vector.load %arg6[%c0_85, %c0_86, %c0_87] : memref<1x2x128xf32, #tpu.memory_space<vmem>>, vector<1x1x128xf32>
    %82 = vector.shape_cast %81 : vector<1x1x128xf32> to vector<1x128xf32>
    %83 = vector.shape_cast %80 : vector<1x128xf32> to vector<1x1x128xf32>
    tpu.vector_store %arg6[%c0_85, %c0_86, %c0_87], %83 {strides = array<i32>} : memref<1x2x128xf32, #tpu.memory_space<vmem>>, vector<1x1x128xf32>,
    %84 = arith.mulf %75, %75 : vector<64x128xf32>
    %cst_88 = arith.constant dense<0.000000e+00> : vector<128xf32>
    %85 = vector.multi_reduction <add>, %84, %cst_88 [0] : vector<64x128xf32> to vector<128xf32>
    %86 = vector.shape_cast %85 : vector<128xf32> to vector<1x128xf32>
    %c0_89 = arith.constant 0 : index
    %c1_90 = arith.constant 1 : index
    %c0_91 = arith.constant 0 : index
    %87 = vector.load %arg6[%c0_89, %c1_90, %c0_91] : memref<1x2x128xf32, #tpu.memory_space<vmem>>, vector<1x1x128xf32>
    %88 = vector.shape_cast %87 : vector<1x1x128xf32> to vector<1x128xf32>
    %89 = vector.shape_cast %86 : vector<1x128xf32> to vector<1x1x128xf32>
    tpu.vector_store %arg6[%c0_89, %c1_90, %c0_91], %89 {strides = array<i32>} : memref<1x2x128xf32, #tpu.memory_space<vmem>>, vector<1x1x128xf32>,
    return
  }
  func.func @transform_0(%arg0: i32) -> (i32, i32, i32, i32) {
    %c0_i32 = arith.constant 0 : i32
    %c0_i32_0 = arith.constant 0 : i32
    %c0_i32_1 = arith.constant 0 : i32
    %c0_i32_2 = arith.constant 0 : i32
    return %arg0, %c0_i32, %c0_i32_0, %c0_i32_1 : i32, i32, i32, i32
  }
  func.func @transform_1(%arg0: i32) -> (i32, i32) {
    %c0_i32 = arith.constant 0 : i32
    %c0_i32_0 = arith.constant 0 : i32
    %c0_i32_1 = arith.constant 0 : i32
    return %c0_i32, %c0_i32_0 : i32, i32
  }
  func.func @transform_2(%arg0: i32) -> (i32, i32) {
    %c0_i32 = arith.constant 0 : i32
    %c0_i32_0 = arith.constant 0 : i32
    %c0_i32_1 = arith.constant 0 : i32
    return %c0_i32, %c0_i32_0 : i32, i32
  }
  func.func @transform_3(%arg0: i32) -> (i32, i32, i32) {
    %c0_i32 = arith.constant 0 : i32
    %c0_i32_0 = arith.constant 0 : i32
    %c0_i32_1 = arith.constant 0 : i32
    %c0_i32_2 = arith.constant 0 : i32
    return %c0_i32, %c0_i32_0, %c0_i32_1 : i32, i32, i32
  }
  func.func @transform_4(%arg0: i32) -> (i32, i32, i32) {
    %c0_i32 = arith.constant 0 : i32
    %c0_i32_0 = arith.constant 0 : i32
    %c0_i32_1 = arith.constant 0 : i32
    return %arg0, %c0_i32, %c0_i32_0 : i32, i32, i32
  }
  func.func @transform_5(%arg0: i32) -> (i32, i32, i32) {
    %c0_i32 = arith.constant 0 : i32
    %c0_i32_0 = arith.constant 0 : i32
    %c0_i32_1 = arith.constant 0 : i32
    return %arg0, %c0_i32, %c0_i32_0 : i32, i32, i32
  }
}

module attributes {stable_mosaic.version = 11 : i64} {
  func.func @_bn2_residual_relu_kernel(%arg0: i32, %arg1: memref<128x128xf32, #tpu.memory_space<vmem>>, %arg2: memref<128x4xf32, #tpu.memory_space<vmem>>, %arg3: memref<4x128xf32, #tpu.memory_space<vmem>>, %arg4: memref<1x128xf32, #tpu.memory_space<vmem>>, %arg5: memref<1x128xf32, #tpu.memory_space<vmem>>, %arg6: memref<1x128xf32, #tpu.memory_space<vmem>>, %arg7: memref<128x128xf32, #tpu.memory_space<vmem>>) attributes {dimension_semantics = [#tpu.dimension_semantics<parallel>], iteration_bounds = array<i64: 1>, scalar_prefetch = 0 : i64, scratch_operands = 0 : i64, tpu.core_type = #tpu.core_type<tc>, window_params = [{transform_indices = @transform_0, window_bounds = array<i64: 128, 128>}, {transform_indices = @transform_1, window_bounds = array<i64: 128, 4>}, {pipeline_mode = #tpu.pipeline_mode<synchronous>, transform_indices = @transform_2, window_bounds = array<i64: 4, 128>}, {pipeline_mode = #tpu.pipeline_mode<synchronous>, transform_indices = @transform_3, window_bounds = array<i64: 1, 128>}, {pipeline_mode = #tpu.pipeline_mode<synchronous>, transform_indices = @transform_4, window_bounds = array<i64: 1, 128>}, {pipeline_mode = #tpu.pipeline_mode<synchronous>, transform_indices = @transform_5, window_bounds = array<i64: 1, 128>}, {transform_indices = @transform_6, window_bounds = array<i64: 128, 128>}]} {
    %c0 = arith.constant 0 : index
    %c0_0 = arith.constant 0 : index
    %0 = vector.load %arg2[%c0, %c0_0] : memref<128x4xf32, #tpu.memory_space<vmem>>, vector<128x4xf32>
    %c0_1 = arith.constant 0 : index
    %c0_2 = arith.constant 0 : index
    %1 = vector.load %arg3[%c0_1, %c0_2] : memref<4x128xf32, #tpu.memory_space<vmem>>, vector<4x128xf32>
    %cst = arith.constant dense<0.000000e+00> : vector<128x128xf32>
    %2 = tpu.matmul %0, %1, %cst {dimension_numbers = #tpu.dot_dimension_numbers<[1], [0], [0], [1], [0, 0, 1, 1], [], []>} : vector<128x4xf32>, vector<4x128xf32>, vector<128x128xf32> -> vector<128x128xf32>
    %c0_3 = arith.constant 0 : index
    %c0_4 = arith.constant 0 : index
    %3 = vector.load %arg1[%c0_3, %c0_4] : memref<128x128xf32, #tpu.memory_space<vmem>>, vector<128x128xf32>
    %c0_5 = arith.constant 0 : index
    %c0_6 = arith.constant 0 : index
    %4 = vector.load %arg4[%c0_5, %c0_6] : memref<1x128xf32, #tpu.memory_space<vmem>>, vector<1x128xf32>
    %5 = vector.broadcast %4 : vector<1x128xf32> to vector<128x128xf32>
    %6 = arith.mulf %3, %5 : vector<128x128xf32>
    %c0_7 = arith.constant 0 : index
    %c0_8 = arith.constant 0 : index
    %7 = vector.load %arg5[%c0_7, %c0_8] : memref<1x128xf32, #tpu.memory_space<vmem>>, vector<1x128xf32>
    %8 = vector.broadcast %7 : vector<1x128xf32> to vector<128x128xf32>
    %9 = arith.addf %6, %8 : vector<128x128xf32>
    %10 = arith.addf %9, %2 : vector<128x128xf32>
    %c0_9 = arith.constant 0 : index
    %c0_10 = arith.constant 0 : index
    %11 = vector.load %arg6[%c0_9, %c0_10] : memref<1x128xf32, #tpu.memory_space<vmem>>, vector<1x128xf32>
    %12 = vector.broadcast %11 : vector<1x128xf32> to vector<128x128xf32>
    %13 = arith.addf %10, %12 : vector<128x128xf32>
    %cst_11 = arith.constant 0.000000e+00 : f32
    %14 = vector.broadcast %cst_11 : f32 to vector<128x128xf32>
    %15 = arith.maximumf %13, %14 : vector<128x128xf32>
    %c0_12 = arith.constant 0 : index
    %c0_13 = arith.constant 0 : index
    %16 = vector.load %arg7[%c0_12, %c0_13] : memref<128x128xf32, #tpu.memory_space<vmem>>, vector<128x128xf32>
    tpu.vector_store %arg7[%c0_12, %c0_13], %15 {strides = array<i32>} : memref<128x128xf32, #tpu.memory_space<vmem>>, vector<128x128xf32>,
    return
  }
  func.func @transform_0(%arg0: i32) -> (i32, i32) {
    %c0_i32 = arith.constant 0 : i32
    %c0_i32_0 = arith.constant 0 : i32
    return %arg0, %c0_i32 : i32, i32
  }
  func.func @transform_1(%arg0: i32) -> (i32, i32) {
    %c0_i32 = arith.constant 0 : i32
    %c0_i32_0 = arith.constant 0 : i32
    return %arg0, %c0_i32 : i32, i32
  }
  func.func @transform_2(%arg0: i32) -> (i32, i32) {
    %c0_i32 = arith.constant 0 : i32
    %c0_i32_0 = arith.constant 0 : i32
    %c0_i32_1 = arith.constant 0 : i32
    return %c0_i32, %c0_i32_0 : i32, i32
  }
  func.func @transform_3(%arg0: i32) -> (i32, i32) {
    %c0_i32 = arith.constant 0 : i32
    %c0_i32_0 = arith.constant 0 : i32
    %c0_i32_1 = arith.constant 0 : i32
    return %c0_i32, %c0_i32_0 : i32, i32
  }
  func.func @transform_4(%arg0: i32) -> (i32, i32) {
    %c0_i32 = arith.constant 0 : i32
    %c0_i32_0 = arith.constant 0 : i32
    %c0_i32_1 = arith.constant 0 : i32
    return %c0_i32, %c0_i32_0 : i32, i32
  }
  func.func @transform_5(%arg0: i32) -> (i32, i32) {
    %c0_i32 = arith.constant 0 : i32
    %c0_i32_0 = arith.constant 0 : i32
    %c0_i32_1 = arith.constant 0 : i32
    return %c0_i32, %c0_i32_0 : i32, i32
  }
  func.func @transform_6(%arg0: i32) -> (i32, i32) {
    %c0_i32 = arith.constant 0 : i32
    %c0_i32_0 = arith.constant 0 : i32
    return %arg0, %c0_i32 : i32, i32
  }
}

</mosaic_0001>

<llo_original>
// kernel: bottleneck_forward.5
$region0: #{bottleneck_forward.5}
  #allocation0 [shape = 'u32[]', space=smem, size = 0x4, offset = 0x4, fixed_abs, tag = 'smem constant byte address 0x4 - core index']
  #allocation1 [shape = 'u32[144,128]{1,0:T(1,128)}', space=vmem, size = 0x12000, scoped, tag = 'internal scratch']
  %s0 = inlined_call_operand.hbm [shape: f32[128,128], index: 0, kind: input, shape index: {}]
  %s1 = inlined_call_operand.hbm [shape: f32[128,4], index: 1, kind: input, shape index: {}]
  %s2 = inlined_call_operand.hbm [shape: f32[4,128], index: 2, kind: input, shape index: {}]
  %s3 = inlined_call_operand.hbm [shape: f32[1,128], index: 3, kind: input, shape index: {}]
  %s4 = inlined_call_operand.hbm [shape: f32[1,128], index: 4, kind: input, shape index: {}]
  %s5 = inlined_call_operand.hbm [shape: f32[1,128], index: 5, kind: input, shape index: {}]
  %s6 = inlined_call_operand.hbm [shape: f32[128,128], index: 6, kind: output, shape index: {}]
  %s7 = sld [smem:[#allocation0]]
  $region58: #{bottleneck_forward.5} parent=0
    _
  %s9 = ssub.s32 1, %s7
  %s10 = scalar_select 0, %s9, %s7
  $region1: #{bottleneck_forward.5} parent=0
    #allocation2 [shape = 'u8[65536]{0}', space=vmem, size = 0x10000, scoped, tag = 'input window, operand 0, single buffered']
    #allocation3 [shape = 's32[1]{0}', space=sflag, size = 0x4, scoped, tag = 'scoped memory for bottleneck_forward.5']
    #allocation4 [shape = 's32[1]{0}', space=sflag, size = 0x4, scoped, tag = 'scoped memory for bottleneck_forward.5']
    #allocation5 [shape = 'u8[65536]{0}', space=vmem, size = 0x10000, scoped, tag = 'input window, operand 1, single buffered']
    #allocation6 [shape = 's32[1]{0}', space=sflag, size = 0x4, scoped, tag = 'scoped memory for bottleneck_forward.5']
    #allocation7 [shape = 'u8[2048]{0}', space=vmem, size = 0x800, scoped, tag = 'input window, operand 2, single buffered']
    #allocation8 [shape = 'u8[512]{0}', space=vmem, size = 0x400, scoped, tag = 'input window, operand 3, single buffered']
    #allocation9 [shape = 's32[1]{0}', space=sflag, size = 0x4, scoped, tag = 'scoped memory for bottleneck_forward.5']
    #allocation10 [shape = 'u8[512]{0}', space=vmem, size = 0x400, scoped, tag = 'input window, operand 4, single buffered']
    #allocation11 [shape = 'u8[512]{0}', space=vmem, size = 0x400, scoped, tag = 'input window, operand 5, single buffered']
    #allocation12 [shape = 's32[1]{0}', space=sflag, size = 0x4, scoped, tag = 'scoped memory for bottleneck_forward.5']
    #allocation13 [shape = 'u8[65536]{0}', space=vmem, size = 0x10000, scoped, tag = 'output window, operand 0, single buffered']
    %11 = vsyncpa [#allocation3], 0
    %12 = vsyncpa [#allocation6], 0
    %13 = vsyncpa [#allocation9], 0
    %14 = vsyncpa [#allocation12], 0
    %15 = vsyncpa [#allocation4], 0
    // Predicated region
    $region2: #{bottleneck_forward.5} parent=1 // pred_check
      _
    $region3: #{bottleneck_forward.5} parent=1 // pred_check_branch
      %17 = sbr.rel (0) target = $region5
    $region4: #{bottleneck_forward.5} parent=1 // pred_region
      %s19 = ssub.s32 2048, 2048
      %20 = vsyncadd [#allocation3], %s19
      %s21 = sshll.u32 [#allocation2], 4
      %s22 = int_to_ptr.vmem [resolvable:$true] %s21
      %27 = dma.hbm_to_vmem [thread:$0]  %s0, 2048, %s22, [#allocation3], 128, 128, 8
    $region5: #{bottleneck_forward.5} parent=1 // pred_fallthru
      _
    // Predicated region
    $region6: #{bottleneck_forward.5} parent=1 // pred_check
      _
    $region7: #{bottleneck_forward.5} parent=1 // pred_check_branch
      %29 = sbr.rel (0) target = $region9
    $region8: #{bottleneck_forward.5} parent=1 // pred_region
      %s31 = ssub.s32 2048, 2048
      %32 = vsyncadd [#allocation6], %s31
      %s33 = sshll.u32 [#allocation5], 4
      %s34 = int_to_ptr.vmem [resolvable:$true] %s33
      %39 = dma.hbm_to_vmem [thread:$0]  %s1, 2048, %s34, [#allocation6], 128, 128, 8
    $region9: #{bottleneck_forward.5} parent=1 // pred_fallthru
      _
    // Predicated region
    $region10: #{bottleneck_forward.5} parent=1 // pred_check
      _
    $region11: #{bottleneck_forward.5} parent=1 // pred_check_branch
      %41 = sbr.rel (0) target = $region13
    $region12: #{bottleneck_forward.5} parent=1 // pred_region
      %s43 = ssub.s32 64, 64
      %44 = vsyncadd [#allocation6], %s43
      %s46 = sshll.u32 [#allocation7], 4
      %s47 = int_to_ptr.vmem [resolvable:$true] %s46
      %49 = dma.hbm_to_vmem [thread:$0]  %s2, 64, %s47, [#allocation6]
    $region13: #{bottleneck_forward.5} parent=1 // pred_fallthru
      _
    // Predicated region
    $region14: #{bottleneck_forward.5} parent=1 // pred_check
      _
    $region15: #{bottleneck_forward.5} parent=1 // pred_check_branch
      %51 = sbr.rel (0) target = $region17
    $region16: #{bottleneck_forward.5} parent=1 // pred_region
      %s53 = ssub.s32 16, 16
      %54 = vsyncadd [#allocation9], %s53
      %s56 = sshll.u32 [#allocation8], 4
      %s57 = int_to_ptr.vmem [resolvable:$true] %s56
      %59 = dma.hbm_to_vmem [thread:$0]  %s3, 16, %s57, [#allocation9]
    $region17: #{bottleneck_forward.5} parent=1 // pred_fallthru
      _
    // Predicated region
    $region18: #{bottleneck_forward.5} parent=1 // pred_check
      _
    $region19: #{bottleneck_forward.5} parent=1 // pred_check_branch
      %61 = sbr.rel (0) target = $region21
    $region20: #{bottleneck_forward.5} parent=1 // pred_region
      %s63 = ssub.s32 16, 16
      %64 = vsyncadd [#allocation9], %s63
      %s66 = sshll.u32 [#allocation10], 4
      %s67 = int_to_ptr.vmem [resolvable:$true] %s66
      %69 = dma.hbm_to_vmem [thread:$0]  %s4, 16, %s67, [#allocation9]
    $region21: #{bottleneck_forward.5} parent=1 // pred_fallthru
      _
    // Predicated region
    $region22: #{bottleneck_forward.5} parent=1 // pred_check
      _
    $region23: #{bottleneck_forward.5} parent=1 // pred_check_branch
      %71 = sbr.rel (0) target = $region25
    $region24: #{bottleneck_forward.5} parent=1 // pred_region
      %s73 = ssub.s32 16, 16
      %74 = vsyncadd [#allocation12], %s73
      %s76 = sshll.u32 [#allocation11], 4
      %s77 = int_to_ptr.vmem [resolvable:$true] %s76
      %79 = dma.hbm_to_vmem [thread:$0]  %s5, 16, %s77, [#allocation12]
    $region25: #{bottleneck_forward.5} parent=1 // pred_fallthru
      _
    // Predicated region
    $region26: #{bottleneck_forward.5} parent=1 // pred_check
      _
    $region27: #{bottleneck_forward.5} parent=1 // pred_check_branch
      %81 = sbr.rel (0) target = $region29
    $region28: #{bottleneck_forward.5} parent=1 // pred_region
      %82 = dma.done [#allocation3], 2048
    $region29: #{bottleneck_forward.5} parent=1 // pred_fallthru
      _
    // Predicated region
    $region30: #{bottleneck_forward.5} parent=1 // pred_check
      _
    $region31: #{bottleneck_forward.5} parent=1 // pred_check_branch
      %84 = sbr.rel (0) target = $region33
    $region32: #{bottleneck_forward.5} parent=1 // pred_region
      %85 = dma.done [#allocation6], 2048
    $region33: #{bottleneck_forward.5} parent=1 // pred_fallthru
      _
    // Predicated region
    $region34: #{bottleneck_forward.5} parent=1 // pred_check
      _
    $region35: #{bottleneck_forward.5} parent=1 // pred_check_branch
      %87 = sbr.rel (0) target = $region37
    $region36: #{bottleneck_forward.5} parent=1 // pred_region
      %88 = dma.done [#allocation6], 64
    $region37: #{bottleneck_forward.5} parent=1 // pred_fallthru
      _
    // Predicated region
    $region38: #{bottleneck_forward.5} parent=1 // pred_check
      _
    $region39: #{bottleneck_forward.5} parent=1 // pred_check_branch
      %90 = sbr.rel (0) target = $region41
    $region40: #{bottleneck_forward.5} parent=1 // pred_region
      %91 = dma.done [#allocation9], 16
    $region41: #{bottleneck_forward.5} parent=1 // pred_fallthru
      _
    // Predicated region
    $region42: #{bottleneck_forward.5} parent=1 // pred_check
      _
    $region43: #{bottleneck_forward.5} parent=1 // pred_check_branch
      %93 = sbr.rel (0) target = $region45
    $region44: #{bottleneck_forward.5} parent=1 // pred_region
      %94 = dma.done [#allocation9], 16
    $region45: #{bottleneck_forward.5} parent=1 // pred_fallthru
      _
    // Predicated region
    $region46: #{bottleneck_forward.5} parent=1 // pred_check
      _
    $region47: #{bottleneck_forward.5} parent=1 // pred_check_branch
      %96 = sbr.rel (0) target = $region49
    $region48: #{bottleneck_forward.5} parent=1 // pred_region
      %97 = dma.done [#allocation12], 16
    $region49: #{bottleneck_forward.5} parent=1 // pred_fallthru
      _
    %v98 = vld [vmem:[#allocation5] sm:$0xff]
    %v99 = vld [vmem:[#allocation5 + $0x8] sm:$0xff]
    %v100 = vld [vmem:[#allocation5 + $0x10] sm:$0xff]
    %v101 = vld [vmem:[#allocation5 + $0x18] sm:$0xff]
    %v102 = vld [vmem:[#allocation5 + $0x20] sm:$0xff]
    %v103 = vld [vmem:[#allocation5 + $0x28] sm:$0xff]
    %v104 = vld [vmem:[#allocation5 + $0x30] sm:$0xff]
    %v105 = vld [vmem:[#allocation5 + $0x38] sm:$0xff]
    %v106 = vld [vmem:[#allocation5 + $0x40] sm:$0xff]
    %v107 = vld [vmem:[#allocation5 + $0x48] sm:$0xff]
    %v108 = vld [vmem:[#allocation5 + $0x50] sm:$0xff]
    %v109 = vld [vmem:[#allocation5 + $0x58] sm:$0xff]
    %v110 = vld [vmem:[#allocation5 + $0x60] sm:$0xff]
    %v111 = vld [vmem:[#allocation5 + $0x68] sm:$0xff]
    %v112 = vld [vmem:[#allocation5 + $0x70] sm:$0xff]
    %v113 = vld [vmem:[#allocation5 + $0x78] sm:$0xff]
    %v114 = vld [vmem:[#allocation7] sm:$0xf]
    %vm115 = vcmask 31744
    %v117 = vsel %vm115, %v98, 0
    %v120 = vsel %vm115, %v99, 0
    %v123 = vsel %vm115, %v100, 0
    %v126 = vsel %vm115, %v101, 0
    %v129 = vsel %vm115, %v102, 0
    %v132 = vsel %vm115, %v103, 0
    %v135 = vsel %vm115, %v104, 0
    %v138 = vsel %vm115, %v105, 0
    %v141 = vsel %vm115, %v106, 0
    %v144 = vsel %vm115, %v107, 0
    %v147 = vsel %vm115, %v108, 0
    %v150 = vsel %vm115, %v109, 0
    %v153 = vsel %vm115, %v110, 0
    %v156 = vsel %vm115, %v111, 0
    %v159 = vsel %vm115, %v112, 0
    %v162 = vsel %vm115, %v113, 0
    %vm164 = vcmask 1043456
    %v166 = vsel %vm164, %v114, 0
    %168 = vmatprep.subr.mxu0 0.0
    %169 = vmatpush1.msra.mxu0 %v166
    %170 = vmatprep.subr.mxu0 0.0
    %171 = vmatpush1.msra.mxu0 0.0
    %172 = vmatprep.subr.mxu0 0.0
    %173 = vmatpush1.msra.mxu0 0.0
    %174 = vmatprep.subr.mxu0 0.0
    %175 = vmatpush1.msra.mxu0 0.0
    %176 = vmatprep.subr.mxu0 0.0
    %177 = vmatpush1.msra.mxu0 0.0
    %178 = vmatprep.subr.mxu0 0.0
    %179 = vmatpush1.msra.mxu0 0.0
    %180 = vmatprep.subr.mxu0 0.0
    %181 = vmatpush1.msra.mxu0 0.0
    %182 = vmatprep.subr.mxu0 0.0
    %183 = vmatpush1.msra.mxu0 0.0
    %184 = vmatprep.subr.mxu0 0.0
    %185 = vmatpush1.msra.mxu0 0.0
    %186 = vmatprep.subr.mxu0 0.0
    %187 = vmatpush1.msra.mxu0 0.0
    %188 = vmatprep.subr.mxu0 0.0
    %189 = vmatpush1.msra.mxu0 0.0
    %190 = vmatprep.subr.mxu0 0.0
    %191 = vmatpush1.msra.mxu0 0.0
    %192 = vmatprep.subr.mxu0 0.0
    %193 = vmatpush1.msra.mxu0 0.0
    %194 = vmatprep.subr.mxu0 0.0
    %195 = vmatpush1.msra.mxu0 0.0
    %196 = vmatprep.subr.mxu0 0.0
    %197 = vmatpush1.msra.mxu0 0.0
    %198 = vmatprep.subr.mxu0 0.0
    %199 = vmatpush1.msra.mxu0 0.0
    %200 = vmatprep.subr.mxu0 0.0
    %201 = vmatpush1.msra.mxu0 0.0
    %202 = vmatprep.subr.mxu0 0.0
    %203 = vmatpush1.msra.mxu0 0.0
    %204 = vmatprep.subr.mxu0 0.0
    %205 = vmatpush1.msra.mxu0 0.0
    %206 = vmatprep.subr.mxu0 0.0
    %207 = vmatpush1.msra.mxu0 0.0
    %208 = vmatprep.subr.mxu0 0.0
    %209 = vmatpush1.msra.mxu0 0.0
    %210 = vmatprep.subr.mxu0 0.0
    %211 = vmatpush1.msra.mxu0 0.0
    %212 = vmatprep.subr.mxu0 0.0
    %213 = vmatpush1.msra.mxu0 0.0
    %214 = vmatprep.subr.mxu0 0.0
    %215 = vmatpush1.msra.mxu0 0.0
    %216 = vmatprep.subr.mxu0 0.0
    %217 = vmatpush1.msra.mxu0 0.0
    %218 = vmatprep.subr.mxu0 0.0
    %219 = vmatpush1.msra.mxu0 0.0
    %220 = vmatprep.subr.mxu0 0.0
    %221 = vmatpush1.msra.mxu0 0.0
    %222 = vmatprep.subr.mxu0 0.0
    %223 = vmatpush1.msra.mxu0 0.0
    %224 = vmatprep.subr.mxu0 0.0
    %225 = vmatpush1.msra.mxu0 0.0
    %226 = vmatprep.subr.mxu0 0.0
    %227 = vmatpush1.msra.mxu0 0.0
    %228 = vmatprep.subr.mxu0 0.0
    %229 = vmatpush1.msra.mxu0 0.0
    %230 = vmatprep.subr.mxu0 0.0
    %231 = vmatpush1.msra.mxu0 0.0
    %232 = vmatprep.mubr.f32.mxu0 0.0
    %233 = vmatmul.mubr.f32.gmra.mrb[0].mxu0 %v117
    %v234 = vpop.f32.mrb[0].mxu0
    %v235 = vadd.f32 0.0, %v234
    %v236 = vpop.f32.mrb[0].mxu0
    %237 = vmatprep.mubr.f32.mxu0 0.0
    %238 = vmatmul.mubr.f32.gmra.mrb[0].mxu0 %v120
    %v239 = vpop.f32.mrb[0].mxu0
    %v240 = vadd.f32 0.0, %v239
    %v241 = vpop.f32.mrb[0].mxu0
    %242 = vmatprep.mubr.f32.mxu0 0.0
    %243 = vmatmul.mubr.f32.gmra.mrb[0].mxu0 %v123
    %v244 = vpop.f32.mrb[0].mxu0
    %v245 = vadd.f32 0.0, %v244
    %v246 = vpop.f32.mrb[0].mxu0
    %247 = vmatprep.mubr.f32.mxu0 0.0
    %248 = vmatmul.mubr.f32.gmra.mrb[0].mxu0 %v126
    %v249 = vpop.f32.mrb[0].mxu0
    %v250 = vadd.f32 0.0, %v249
    %v251 = vpop.f32.mrb[0].mxu0
    %252 = vmatprep.mubr.f32.mxu0 0.0
    %253 = vmatmul.mubr.f32.gmra.mrb[0].mxu0 %v129
    %v254 = vpop.f32.mrb[0].mxu0
    %v255 = vadd.f32 0.0, %v254
    %v256 = vpop.f32.mrb[0].mxu0
    %257 = vmatprep.mubr.f32.mxu0 0.0
    %258 = vmatmul.mubr.f32.gmra.mrb[0].mxu0 %v132
    %v259 = vpop.f32.mrb[0].mxu0
    %v260 = vadd.f32 0.0, %v259
    %v261 = vpop.f32.mrb[0].mxu0
    %262 = vmatprep.mubr.f32.mxu0 0.0
    %263 = vmatmul.mubr.f32.gmra.mrb[0].mxu0 %v135
    %v264 = vpop.f32.mrb[0].mxu0
    %v265 = vadd.f32 0.0, %v264
    %v266 = vpop.f32.mrb[0].mxu0
    %267 = vmatprep.mubr.f32.mxu0 0.0
    %268 = vmatmul.mubr.f32.gmra.mrb[0].mxu0 %v138
    %v269 = vpop.f32.mrb[0].mxu0
    %v270 = vadd.f32 0.0, %v269
    %v271 = vpop.f32.mrb[0].mxu0
    %272 = vmatprep.mubr.f32.mxu0 0.0
    %273 = vmatmul.mubr.f32.gmra.mrb[0].mxu0 %v141
    %v274 = vpop.f32.mrb[0].mxu0
    %v275 = vadd.f32 0.0, %v274
    %v276 = vpop.f32.mrb[0].mxu0
    %277 = vmatprep.mubr.f32.mxu0 0.0
    %278 = vmatmul.mubr.f32.gmra.mrb[0].mxu0 %v144
    %v279 = vpop.f32.mrb[0].mxu0
    %v280 = vadd.f32 0.0, %v279
    %v281 = vpop.f32.mrb[0].mxu0
    %282 = vmatprep.mubr.f32.mxu0 0.0
    %283 = vmatmul.mubr.f32.gmra.mrb[0].mxu0 %v147
    %v284 = vpop.f32.mrb[0].mxu0
    %v285 = vadd.f32 0.0, %v284
    %v286 = vpop.f32.mrb[0].mxu0
    %287 = vmatprep.mubr.f32.mxu0 0.0
    %288 = vmatmul.mubr.f32.gmra.mrb[0].mxu0 %v150
    %v289 = vpop.f32.mrb[0].mxu0
    %v290 = vadd.f32 0.0, %v289
    %v291 = vpop.f32.mrb[0].mxu0
    %292 = vmatprep.mubr.f32.mxu0 0.0
    %293 = vmatmul.mubr.f32.gmra.mrb[0].mxu0 %v153
    %v294 = vpop.f32.mrb[0].mxu0
    %v295 = vadd.f32 0.0, %v294
    %v296 = vpop.f32.mrb[0].mxu0
    %297 = vmatprep.mubr.f32.mxu0 0.0
    %298 = vmatmul.mubr.f32.gmra.mrb[0].mxu0 %v156
    %v299 = vpop.f32.mrb[0].mxu0
    %v300 = vadd.f32 0.0, %v299
    %v301 = vpop.f32.mrb[0].mxu0
    %302 = vmatprep.mubr.f32.mxu0 0.0
    %303 = vmatmul.mubr.f32.gmra.mrb[0].mxu0 %v159
    %v304 = vpop.f32.mrb[0].mxu0
    %v305 = vadd.f32 0.0, %v304
    %v306 = vpop.f32.mrb[0].mxu0
    %307 = vmatprep.mubr.f32.mxu0 0.0
    %308 = vmatmul.mubr.f32.gmra.mrb[0].mxu0 %v162
    %v309 = vpop.f32.mrb[0].mxu0
    %v310 = vadd.f32 0.0, %v309
    %v311 = vpop.f32.mrb[0].mxu0
    %312 = vdwg.mxu0
    %v313 = vld [vmem:[#allocation2] sm:$0xff]
    %v314 = vld [vmem:[#allocation2 + $0x8] sm:$0xff]
    %v315 = vld [vmem:[#allocation2 + $0x10] sm:$0xff]
    %v316 = vld [vmem:[#allocation2 + $0x18] sm:$0xff]
    %v317 = vld [vmem:[#allocation2 + $0x20] sm:$0xff]
    %v318 = vld [vmem:[#allocation2 + $0x28] sm:$0xff]
    %v319 = vld [vmem:[#allocation2 + $0x30] sm:$0xff]
    %v320 = vld [vmem:[#allocation2 + $0x38] sm:$0xff]
    %v321 = vld [vmem:[#allocation2 + $0x40] sm:$0xff]
    %v322 = vld [vmem:[#allocation2 + $0x48] sm:$0xff]
    %v323 = vld [vmem:[#allocation2 + $0x50] sm:$0xff]
    %v324 = vld [vmem:[#allocation2 + $0x58] sm:$0xff]
    %v325 = vld [vmem:[#allocation2 + $0x60] sm:$0xff]
    %v326 = vld [vmem:[#allocation2 + $0x68] sm:$0xff]
    %v327 = vld [vmem:[#allocation2 + $0x70] sm:$0xff]
    %v328 = vld [vmem:[#allocation2 + $0x78] sm:$0xff]
    %v329 = vld [vmem:[#allocation8] sm:$0x1]
    %v331 = vlaneseq
    %v332 = vshrl.u32 %v331, 7
    %v333 = vsub.s32 0, %v332
    %v334 = vrot.slane %v329, %v333
    %v336 = vmul.f32 %v313, %v334
    %v337 = vmul.f32 %v314, %v334
    %v338 = vmul.f32 %v315, %v334
    %v339 = vmul.f32 %v316, %v334
    %v340 = vmul.f32 %v317, %v334
    %v341 = vmul.f32 %v318, %v334
    %v342 = vmul.f32 %v319, %v334
    %v343 = vmul.f32 %v320, %v334
    %v344 = vmul.f32 %v321, %v334
    %v345 = vmul.f32 %v322, %v334
    %v346 = vmul.f32 %v323, %v334
    %v347 = vmul.f32 %v324, %v334
    %v348 = vmul.f32 %v325, %v334
    %v349 = vmul.f32 %v326, %v334
    %v350 = vmul.f32 %v327, %v334
    %v351 = vmul.f32 %v328, %v334
    %v352 = vld [vmem:[#allocation10] sm:$0x1]
    %v354 = vlaneseq
    %v355 = vshrl.u32 %v354, 7
    %v356 = vsub.s32 0, %v355
    %v357 = vrot.slane %v352, %v356
    %v359 = vadd.f32 %v336, %v357
    %v360 = vadd.f32 %v337, %v357
    %v361 = vadd.f32 %v338, %v357
    %v362 = vadd.f32 %v339, %v357
    %v363 = vadd.f32 %v340, %v357
    %v364 = vadd.f32 %v341, %v357
    %v365 = vadd.f32 %v342, %v357
    %v366 = vadd.f32 %v343, %v357
    %v367 = vadd.f32 %v344, %v357
    %v368 = vadd.f32 %v345, %v357
    %v369 = vadd.f32 %v346, %v357
    %v370 = vadd.f32 %v347, %v357
    %v371 = vadd.f32 %v348, %v357
    %v372 = vadd.f32 %v349, %v357
    %v373 = vadd.f32 %v350, %v357
    %v374 = vadd.f32 %v351, %v357
    %v375 = vadd.f32 %v359, %v235
    %v376 = vadd.f32 %v360, %v240
    %v377 = vadd.f32 %v361, %v245
    %v378 = vadd.f32 %v362, %v250
    %v379 = vadd.f32 %v363, %v255
    %v380 = vadd.f32 %v364, %v260
    %v381 = vadd.f32 %v365, %v265
    %v382 = vadd.f32 %v366, %v270
    %v383 = vadd.f32 %v367, %v275
    %v384 = vadd.f32 %v368, %v280
    %v385 = vadd.f32 %v369, %v285
    %v386 = vadd.f32 %v370, %v290
    %v387 = vadd.f32 %v371, %v295
    %v388 = vadd.f32 %v372, %v300
    %v389 = vadd.f32 %v373, %v305
    %v390 = vadd.f32 %v374, %v310
    %v391 = vld [vmem:[#allocation11] sm:$0x1]
    %v393 = vlaneseq
    %v394 = vshrl.u32 %v393, 7
    %v395 = vsub.s32 0, %v394
    %v396 = vrot.slane %v391, %v395
    %v398 = vadd.f32 %v375, %v396
    %v399 = vadd.f32 %v376, %v396
    %v400 = vadd.f32 %v377, %v396
    %v401 = vadd.f32 %v378, %v396
    %v402 = vadd.f32 %v379, %v396
    %v403 = vadd.f32 %v380, %v396
    %v404 = vadd.f32 %v381, %v396
    %v405 = vadd.f32 %v382, %v396
    %v406 = vadd.f32 %v383, %v396
    %v407 = vadd.f32 %v384, %v396
    %v408 = vadd.f32 %v385, %v396
    %v409 = vadd.f32 %v386, %v396
    %v410 = vadd.f32 %v387, %v396
    %v411 = vadd.f32 %v388, %v396
    %v412 = vadd.f32 %v389, %v396
    %v413 = vadd.f32 %v390, %v396
    %v414 = vmax.f32 %v398, 0.0
    %v415 = vmax.f32 %v399, 0.0
    %v416 = vmax.f32 %v400, 0.0
    %v417 = vmax.f32 %v401, 0.0
    %v418 = vmax.f32 %v402, 0.0
    %v419 = vmax.f32 %v403, 0.0
    %v420 = vmax.f32 %v404, 0.0
    %v421 = vmax.f32 %v405, 0.0
    %v422 = vmax.f32 %v406, 0.0
    %v423 = vmax.f32 %v407, 0.0
    %v424 = vmax.f32 %v408, 0.0
    %v425 = vmax.f32 %v409, 0.0
    %v426 = vmax.f32 %v410, 0.0
    %v427 = vmax.f32 %v411, 0.0
    %v428 = vmax.f32 %v412, 0.0
    %v429 = vmax.f32 %v413, 0.0
    %430 = vst [vmem:[#allocation13] sm:$0xff] %v414
    %431 = vst [vmem:[#allocation13 + $0x8] sm:$0xff] %v415
    %432 = vst [vmem:[#allocation13 + $0x10] sm:$0xff] %v416
    %433 = vst [vmem:[#allocation13 + $0x18] sm:$0xff] %v417
    %434 = vst [vmem:[#allocation13 + $0x20] sm:$0xff] %v418
    %435 = vst [vmem:[#allocation13 + $0x28] sm:$0xff] %v419
    %436 = vst [vmem:[#allocation13 + $0x30] sm:$0xff] %v420
    %437 = vst [vmem:[#allocation13 + $0x38] sm:$0xff] %v421
    %438 = vst [vmem:[#allocation13 + $0x40] sm:$0xff] %v422
    %439 = vst [vmem:[#allocation13 + $0x48] sm:$0xff] %v423
    %440 = vst [vmem:[#allocation13 + $0x50] sm:$0xff] %v424
    %441 = vst [vmem:[#allocation13 + $0x58] sm:$0xff] %v425
    %442 = vst [vmem:[#allocation13 + $0x60] sm:$0xff] %v426
    %443 = vst [vmem:[#allocation13 + $0x68] sm:$0xff] %v427
    %444 = vst [vmem:[#allocation13 + $0x70] sm:$0xff] %v428
    %445 = vst [vmem:[#allocation13 + $0x78] sm:$0xff] %v429
    // Predicated region
    $region50: #{bottleneck_forward.5} parent=1 // pred_check
      _
    $region51: #{bottleneck_forward.5} parent=1 // pred_check_branch
      %447 = sbr.rel (0) target = $region53
    $region52: #{bottleneck_forward.5} parent=1 // pred_region
      %s449 = ssub.s32 2048, 2048
      %450 = vsyncadd [#allocation4], %s449
      %s451 = sshll.u32 [#allocation13], 4
      %s452 = int_to_ptr.vmem [resolvable:$true] %s451
      %457 = dma.vmem_to_hbm [thread:$0]  %s452, 2048, %s6, [#allocation4], 128, 128, 8
    $region53: #{bottleneck_forward.5} parent=1 // pred_fallthru
      _
    // Predicated region
    $region54: #{bottleneck_forward.5} parent=1 // pred_check
      _
    $region55: #{bottleneck_forward.5} parent=1 // pred_check_branch
      %459 = sbr.rel (0) target = $region57
    $region56: #{bottleneck_forward.5} parent=1 // pred_region
      %460 = dma.done [#allocation4], 2048
    $region57: #{bottleneck_forward.5} parent=1 // pred_fallthru
      _
    %461 = vsyncpa [#allocation3], 1
    %462 = vsyncpa [#allocation6], 1
    %463 = vsyncpa [#allocation9], 1
    %464 = vsyncpa [#allocation12], 1
    %465 = vsyncpa [#allocation4], 1

// kernel: bottleneck_forward.3
$region0: #{bottleneck_forward.3}
  #allocation0 [shape = 'u32[]', space=smem, size = 0x4, offset = 0x4, fixed_abs, tag = 'smem constant byte address 0x4 - core index']
  #allocation1 [shape = 'u32[144,128]{1,0:T(1,128)}', space=vmem, size = 0x12000, scoped, tag = 'internal scratch']
  %s0 = inlined_call_operand.hbm [shape: f32[2,36,9,4], index: 0, kind: input, shape index: {}]
  %s1 = inlined_call_operand.hbm [shape: f32[9,4,128], index: 1, kind: input, shape index: {}]
  %s2 = inlined_call_operand.hbm [shape: f32[2,8,8,128], index: 2, kind: output, shape index: {0}]
  %s3 = inlined_call_operand.hbm [shape: f32[2,2,128], index: 3, kind: output, shape index: {1}]
  %4 = xla_tuple %s2, %s3
  %s5 = sld [smem:[#allocation0]]
  $region57: #{bottleneck_forward.3} parent=0
    _
  %s7 = ssub.s32 1, %s5
  %s8 = scalar_select 0, %s7, %s5
  $region1: #{bottleneck_forward.3} parent=0
    #allocation2 [shape = 'u8[589824]{0}', space=vmem, size = 0x90000, scoped, tag = 'input window, operand 0']
    #allocation3 [shape = 's32[2]{0}', space=sflag, size = 0x8, scoped, tag = 'scoped memory for bottleneck_forward.3']
    #allocation4 [shape = 's32[2]{0}', space=sflag, size = 0x8, scoped, tag = 'scoped memory for bottleneck_forward.3']
    #allocation5 [shape = 'u8[18432]{0}', space=vmem, size = 0x4800, scoped, tag = 'input window, operand 1, single buffered']
    #allocation6 [shape = 's32[1]{0}', space=sflag, size = 0x4, scoped, tag = 'scoped memory for bottleneck_forward.3']
    #allocation7 [shape = 'u8[65536]{0}', space=vmem, size = 0x10000, scoped, tag = 'output window, operand 0']
    #allocation8 [shape = 'u8[2048]{0}', space=vmem, size = 0x800, scoped, tag = 'output window, operand 1']
    #allocation9 [shape = 's32[2]{0}', space=sflag, size = 0x8, scoped, tag = 'scoped memory for bottleneck_forward.3']
    %9 = vsyncpa [#allocation3], 0
    %s10 = scalar_lea.sflag [#allocation3], 1
    %11 = vsyncpa %s10, 0
    %12 = vsyncpa [#allocation6], 0
    %13 = vsyncpa [#allocation4], 0
    %s14 = scalar_lea.sflag [#allocation4], 1
    %15 = vsyncpa %s14, 0
    %16 = vsyncpa [#allocation9], 0
    %s17 = scalar_lea.sflag [#allocation9], 1
    %18 = vsyncpa %s17, 0
    loop: start=0, step=1, limit=4
    $region2: #{bottleneck_forward.3} parent=1 // loop_pre_header
      _
    $region3: #{bottleneck_forward.3} parent=1 // loop_header
      %s20 = sphi 0, %s24
      %p21 = scmp.ge.s32.totalorder %s20, 4
      %s30 = sphi 0, %s32
      %s33 = sphi 0, %s30
      %s34 = sphi 0, %s33
      %s50 = sphi 0, %s34
      %s54 = sphi 0, %s54
      %s56 = sphi 0, %s54
      %s57 = sphi 0, %s56
      %s71 = sphi 0, %s57
      %s77 = sphi 0, %s79
      %s80 = sphi 0, %s77
      %s81 = sphi 0, %s80
      %s97 = sphi 0, %s81
      %s103 = sphi 0, %s105
      %s106 = sphi 0, %s103
      %s107 = sphi 0, %s106
      %s123 = sphi 0, %s107
    $region4: #{bottleneck_forward.3} parent=1 // loop_header_branch
      %23 = sbr.rel (%p21) target = $region8
    $region5: #{bottleneck_forward.3} parent=1 // loop_body
      %s25 = ssub.s32 %s20, 1
      %s26 = ssub.s32 %s20, 2
      %s27 = sadd.s32 %s20, 1
      %s28 = ssub.s32 %s20, %s27
      %p29 = scmp.eq.s32.totalorder %s28, 0
      %s31 = sadd.s32 %s30, 1
      %s32 = scalar_select %p29, %s30, %s31
      %p35 = pneg %p29
      %p36 = scmp.eq.s32.totalorder %s20, 1
      %p37 = por %p35, %p36
      %p38 = scmp.ne.s32.totalorder %s30, %s33
      %p39 = scmp.eq.s32.totalorder %s20, 0
      %p40 = por %p38, %p39
      %p41 = scmp.ne.s32.totalorder %s30, %s33
      %p42 = scmp.eq.s32.totalorder %s25, 1
      %p43 = por %p41, %p42
      %p44 = scmp.ne.s32.totalorder %s33, %s34
      %p45 = scmp.eq.s32.totalorder %s25, 0
      %p46 = por %p44, %p45
      %p47 = scmp.ne.s32.totalorder %s33, %s34
      %p48 = scmp.eq.s32.totalorder %s26, 1
      %p49 = por %p47, %p48
      %p51 = scmp.ne.s32.totalorder %s34, %s50
      %p52 = scmp.eq.s32.totalorder %s26, 0
      %p53 = por %p51, %p52
      %s55 = sadd.s32 %s54, 1
      %p58 = scmp.eq.s32.totalorder %s20, 1
      %p59 = scmp.ne.s32.totalorder %s54, %s56
      %p60 = scmp.eq.s32.totalorder %s20, 0
      %p61 = por %p59, %p60
      %p62 = scmp.ne.s32.totalorder %s54, %s56
      %p63 = scmp.eq.s32.totalorder %s25, 1
      %p64 = por %p62, %p63
      %p65 = scmp.ne.s32.totalorder %s56, %s57
      %p66 = scmp.eq.s32.totalorder %s25, 0
      %p67 = por %p65, %p66
      %p68 = scmp.ne.s32.totalorder %s56, %s57
      %p69 = scmp.eq.s32.totalorder %s26, 1
      %p70 = por %p68, %p69
      %p72 = scmp.ne.s32.totalorder %s57, %s71
      %p73 = scmp.eq.s32.totalorder %s26, 0
      %p74 = por %p72, %p73
      %s75 = ssub.s32 %s20, %s27
      %p76 = scmp.eq.s32.totalorder %s75, 0
      %s78 = sadd.s32 %s77, 1
      %s79 = scalar_select %p76, %s77, %s78
      %p82 = pneg %p76
      %p83 = scmp.eq.s32.totalorder %s20, 1
      %p84 = por %p82, %p83
      %p85 = scmp.ne.s32.totalorder %s77, %s80
      %p86 = scmp.eq.s32.totalorder %s20, 0
      %p87 = por %p85, %p86
      %p88 = scmp.ne.s32.totalorder %s77, %s80
      %p89 = scmp.eq.s32.totalorder %s25, 1
      %p90 = por %p88, %p89
      %p91 = scmp.ne.s32.totalorder %s80, %s81
      %p92 = scmp.eq.s32.totalorder %s25, 0
      %p93 = por %p91, %p92
      %p94 = scmp.ne.s32.totalorder %s80, %s81
      %p95 = scmp.eq.s32.totalorder %s26, 1
      %p96 = por %p94, %p95
      %p98 = scmp.ne.s32.totalorder %s81, %s97
      %p99 = scmp.eq.s32.totalorder %s26, 0
      %p100 = por %p98, %p99
      %s101 = ssub.s32 %s20, %s27
      %p102 = scmp.eq.s32.totalorder %s101, 0
      %s104 = sadd.s32 %s103, 1
      %s105 = scalar_select %p102, %s103, %s104
      %p108 = pneg %p102
      %p109 = scmp.eq.s32.totalorder %s20, 1
      %p110 = por %p108, %p109
      %p111 = scmp.ne.s32.totalorder %s103, %s106
      %p112 = scmp.eq.s32.totalorder %s20, 0
      %p113 = por %p111, %p112
      %p114 = scmp.ne.s32.totalorder %s103, %s106
      %p115 = scmp.eq.s32.totalorder %s25, 1
      %p116 = por %p114, %p115
      %p117 = scmp.ne.s32.totalorder %s106, %s107
      %p118 = scmp.eq.s32.totalorder %s25, 0
      %p119 = por %p117, %p118
      %p120 = scmp.ne.s32.totalorder %s106, %s107
      %p121 = scmp.eq.s32.totalorder %s26, 1
      %p122 = por %p120, %p121
      %p124 = scmp.ne.s32.totalorder %s107, %s123
      %p125 = scmp.eq.s32.totalorder %s26, 0
      %p126 = por %p124, %p125
      %p127 = scmp.le.s32.totalorder 1, %s20
      %p128 = scmp.lt.s32.totalorder %s20, 3
      %p129 = pnand %p127, %p128
      %p130 = pneg %p129
      // Predicated region
      $region9: #{bottleneck_forward.3} parent=5 // pred_check
        _
      $region10: #{bottleneck_forward.3} parent=5 // pred_check_branch
        %132 = sbr.rel (%p129) target = $region12
      $region11: #{bottleneck_forward.3} parent=5 // pred_region
        %s133 = ssub.s32 %s20, 1
        // Predicated region
        $region13: #{bottleneck_forward.3} parent=11 // pred_check
          %p134 = pneg %p67
        $region14: #{bottleneck_forward.3} parent=11 // pred_check_branch
          %136 = sbr.rel (%p134) target = $region16
        $region15: #{bottleneck_forward.3} parent=11 // pred_region
          %s138 = ssub.s32 576, 576
          %139 = vsyncadd [#allocation6], %s138
          %s140 = sshll.u32 [#allocation5], 4
          %s141 = int_to_ptr.vmem [resolvable:$true] %s140
          %146 = dma.hbm_to_vmem [thread:$0]  %s1, 576, %s141, [#allocation6], 64, 64, 4
        $region16: #{bottleneck_forward.3} parent=11 // pred_fallthru
          _
      $region12: #{bottleneck_forward.3} parent=5 // pred_fallthru
        _
      %p147 = scmp.lt.s32.totalorder %s20, 2
      // Predicated region
      $region17: #{bottleneck_forward.3} parent=5 // pred_check
        %p148 = pneg %p147
      $region18: #{bottleneck_forward.3} parent=5 // pred_check_branch
        %150 = sbr.rel (%p148) target = $region20
      $region19: #{bottleneck_forward.3} parent=5 // pred_region
        // Predicated region
        $region21: #{bottleneck_forward.3} parent=19 // pred_check
          %p151 = pneg %p40
        $region22: #{bottleneck_forward.3} parent=19 // pred_check_branch
          %153 = sbr.rel (%p151) target = $region24
        $region23: #{bottleneck_forward.3} parent=19 // pred_region
          %s154 = sand.u32 %s30, 1
          %s155 = scalar_lea.sflag [#allocation3], %s154
          %s156 = sand.u32 %s30, 1
          %s157 = smul.addr %s156, 576
          %s158 = scalar_lea.vmem [#allocation2], %s157
          %s160 = ssub.s32 9216, 9216
          %161 = vsyncadd %s155, %s160
          %s162 = smul.addr %s20, 72
          %s163 = smul.addr %s162, 128
          %s164 = scalar_lea.hbm %s0, %s163
          %s165 = sshll.u32 %s158, 4
          %s166 = int_to_ptr.vmem [resolvable:$true] %s165
          %171 = dma.hbm_to_vmem [thread:$0]  %s164, 9216, %s166, %s155, 128, 128, 8
        $region24: #{bottleneck_forward.3} parent=19 // pred_fallthru
          _
      $region20: #{bottleneck_forward.3} parent=5 // pred_fallthru
        _
      %p172 = scmp.le.s32.totalorder 1, %s20
      %p173 = scmp.lt.s32.totalorder %s20, 3
      %p174 = pnand %p172, %p173
      %p175 = pneg %p174
      // Predicated region
      $region25: #{bottleneck_forward.3} parent=5 // pred_check
        _
      $region26: #{bottleneck_forward.3} parent=5 // pred_check_branch
        %177 = sbr.rel (%p174) target = $region28
      $region27: #{bottleneck_forward.3} parent=5 // pred_region
        %s178 = ssub.s32 %s20, 1
        %s179 = sand.u32 %s33, 1
        %s180 = scalar_lea.sflag [#allocation3], %s179
        %s181 = sand.u32 %s33, 1
        %s182 = smul.addr %s181, 576
        %s183 = scalar_lea.vmem [#allocation2], %s182
        // Predicated region
        $region29: #{bottleneck_forward.3} parent=27 // pred_check
          %p184 = pneg %p46
        $region30: #{bottleneck_forward.3} parent=27 // pred_check_branch
          %186 = sbr.rel (%p184) target = $region32
        $region31: #{bottleneck_forward.3} parent=27 // pred_region
          %187 = dma.done %s180, 9216
        $region32: #{bottleneck_forward.3} parent=27 // pred_fallthru
          _
        // Predicated region
        $region33: #{bottleneck_forward.3} parent=27 // pred_check
          %p188 = pneg %p67
        $region34: #{bottleneck_forward.3} parent=27 // pred_check_branch
          %190 = sbr.rel (%p188) target = $region36
        $region35: #{bottleneck_forward.3} parent=27 // pred_region
          %191 = dma.done [#allocation6], 576
        $region36: #{bottleneck_forward.3} parent=27 // pred_fallthru
          _
        %s192 = sand.u32 %s33, 1
        %s193 = scalar_lea.sflag [#allocation3], %s192
        %s194 = sand.u32 %s33, 1
        %s195 = smul.addr %s194, 576
        %s196 = scalar_lea.vmem [#allocation2], %s195
        %p197 = pneg %p46
        %p198 = pneg %p43
        %p199 = pneg %p67
        %p200 = pneg %p64
        %p201 = pneg %p93
        %p202 = pneg %p90
        %s203 = sand.u32 %s80, 1
        %s204 = scalar_lea.sflag [#allocation4], %s203
        %s205 = sand.u32 %s80, 1
        %s206 = smul.addr %s205, 64
        %s207 = scalar_lea.vmem [#allocation7], %s206
        %p208 = pneg %p119
        %p209 = pneg %p116
        %s210 = sand.u32 %s106, 1
        %s211 = scalar_lea.sflag [#allocation9], %s210
        %s212 = sand.u32 %s106, 1
        %s213 = smul.addr %s212, 2
        %s214 = scalar_lea.vmem [#allocation8], %s213
        %v215 = vld [vmem:[%s183] sm:$0xff]
        %v216 = vld [vmem:[%s183 + $0x10] sm:$0xff]
        %v217 = vld [vmem:[%s183 + $0x20] sm:$0xff]
        %v218 = vld [vmem:[%s183 + $0x30] sm:$0xff]
        %v219 = vld [vmem:[%s183 + $0x40] sm:$0xff]
        %v220 = vld [vmem:[%s183 + $0x50] sm:$0xff]
        %v221 = vld [vmem:[%s183 + $0x60] sm:$0xff]
        %v222 = vld [vmem:[%s183 + $0x70] sm:$0xff]
        %v223 = vld [vmem:[#allocation5] sm:$0xf]
        %s224 = scalar_lea.vmem %s183, 144 [#allocation2]
        %v225 = vld [vmem:[%s224] sm:$0xff]
        %v226 = vld [vmem:[%s224 + $0x10] sm:$0xff]
        %v227 = vld [vmem:[%s224 + $0x20] sm:$0xff]
        %v228 = vld [vmem:[%s224 + $0x30] sm:$0xff]
        %v229 = vld [vmem:[%s224 + $0x40] sm:$0xff]
        %v230 = vld [vmem:[%s224 + $0x50] sm:$0xff]
        %v231 = vld [vmem:[%s224 + $0x60] sm:$0xff]
        %v232 = vld [vmem:[%s224 + $0x70] sm:$0xff]
        %s233 = scalar_lea.vmem [#allocation5], 4
        %v234 = vld [vmem:[%s233] sm:$0xf]
        %vm235 = vcmask 31744
        %v237 = vsel %vm235, %v225, 0
        %v240 = vsel %vm235, %v226, 0
        %v243 = vsel %vm235, %v227, 0
        %v246 = vsel %vm235, %v228, 0
        %v249 = vsel %vm235, %v229, 0
        %v252 = vsel %vm235, %v230, 0
        %v255 = vsel %vm235, %v231, 0
        %v258 = vsel %vm235, %v232, 0
        %vm260 = vcmask 1043456
        %v262 = vsel %vm260, %v234, 0
        %264 = vmatprep.subr.mxu0 0.0
        %265 = vmatpush1.msra.mxu0 %v262
        %266 = vmatprep.subr.mxu0 0.0
        %267 = vmatpush1.msra.mxu0 0.0
        %268 = vmatprep.subr.mxu0 0.0
        %269 = vmatpush1.msra.mxu0 0.0
        %270 = vmatprep.subr.mxu0 0.0
        %271 = vmatpush1.msra.mxu0 0.0
        %272 = vmatprep.subr.mxu0 0.0
        %273 = vmatpush1.msra.mxu0 0.0
        %274 = vmatprep.subr.mxu0 0.0
        %275 = vmatpush1.msra.mxu0 0.0
        %276 = vmatprep.subr.mxu0 0.0
        %277 = vmatpush1.msra.mxu0 0.0
        %278 = vmatprep.subr.mxu0 0.0
        %279 = vmatpush1.msra.mxu0 0.0
        %280 = vmatprep.subr.mxu0 0.0
        %281 = vmatpush1.msra.mxu0 0.0
        %282 = vmatprep.subr.mxu0 0.0
        %283 = vmatpush1.msra.mxu0 0.0
        %284 = vmatprep.subr.mxu0 0.0
        %285 = vmatpush1.msra.mxu0 0.0
        %286 = vmatprep.subr.mxu0 0.0
        %287 = vmatpush1.msra.mxu0 0.0
        %288 = vmatprep.subr.mxu0 0.0
        %289 = vmatpush1.msra.mxu0 0.0
        %290 = vmatprep.subr.mxu0 0.0
        %291 = vmatpush1.msra.mxu0 0.0
        %292 = vmatprep.subr.mxu0 0.0
        %293 = vmatpush1.msra.mxu0 0.0
        %294 = vmatprep.subr.mxu0 0.0
        %295 = vmatpush1.msra.mxu0 0.0
        %296 = vmatprep.subr.mxu0 0.0
        %297 = vmatpush1.msra.mxu0 0.0
        %298 = vmatprep.subr.mxu0 0.0
        %299 = vmatpush1.msra.mxu0 0.0
        %300 = vmatprep.subr.mxu0 0.0
        %301 = vmatpush1.msra.mxu0 0.0
        %302 = vmatprep.subr.mxu0 0.0
        %303 = vmatpush1.msra.mxu0 0.0
        %304 = vmatprep.subr.mxu0 0.0
        %305 = vmatpush1.msra.mxu0 0.0
        %306 = vmatprep.subr.mxu0 0.0
        %307 = vmatpush1.msra.mxu0 0.0
        %308 = vmatprep.subr.mxu0 0.0
        %309 = vmatpush1.msra.mxu0 0.0
        %310 = vmatprep.subr.mxu0 0.0
        %311 = vmatpush1.msra.mxu0 0.0
        %312 = vmatprep.subr.mxu0 0.0
        %313 = vmatpush1.msra.mxu0 0.0
        %314 = vmatprep.subr.mxu0 0.0
        %315 = vmatpush1.msra.mxu0 0.0
        %316 = vmatprep.subr.mxu0 0.0
        %317 = vmatpush1.msra.mxu0 0.0
        %318 = vmatprep.subr.mxu0 0.0
        %319 = vmatpush1.msra.mxu0 0.0
        %320 = vmatprep.subr.mxu0 0.0
        %321 = vmatpush1.msra.mxu0 0.0
        %322 = vmatprep.subr.mxu0 0.0
        %323 = vmatpush1.msra.mxu0 0.0
        %324 = vmatprep.subr.mxu0 0.0
        %325 = vmatpush1.msra.mxu0 0.0
        %326 = vmatprep.subr.mxu0 0.0
        %327 = vmatpush1.msra.mxu0 0.0
        %328 = vmatprep.mubr.f32.mxu0 0.0
        %329 = vmatmul.mubr.f32.gmra.mrb[0].mxu0 %v237
        %v330 = vpop.f32.mrb[0].mxu0
        %v331 = vadd.f32 0.0, %v330
        %v332 = vpop.f32.mrb[0].mxu0
        %333 = vmatprep.mubr.f32.mxu0 0.0
        %334 = vmatmul.mubr.f32.gmra.mrb[0].mxu0 %v240
        %v335 = vpop.f32.mrb[0].mxu0
        %v336 = vadd.f32 0.0, %v335
        %v337 = vpop.f32.mrb[0].mxu0
        %338 = vmatprep.mubr.f32.mxu0 0.0
        %339 = vmatmul.mubr.f32.gmra.mrb[0].mxu0 %v243
        %v340 = vpop.f32.mrb[0].mxu0
        %v341 = vadd.f32 0.0, %v340
        %v342 = vpop.f32.mrb[0].mxu0
        %343 = vmatprep.mubr.f32.mxu0 0.0
        %344 = vmatmul.mubr.f32.gmra.mrb[0].mxu0 %v246
        %v345 = vpop.f32.mrb[0].mxu0
        %v346 = vadd.f32 0.0, %v345
        %v347 = vpop.f32.mrb[0].mxu0
        %348 = vmatprep.mubr.f32.mxu0 0.0
        %349 = vmatmul.mubr.f32.gmra.mrb[0].mxu0 %v249
        %v350 = vpop.f32.mrb[0].mxu0
        %v351 = vadd.f32 0.0, %v350
        %v352 = vpop.f32.mrb[0].mxu0
        %353 = vmatprep.mubr.f32.mxu0 0.0
        %354 = vmatmul.mubr.f32.gmra.mrb[0].mxu0 %v252
        %v355 = vpop.f32.mrb[0].mxu0
        %v356 = vadd.f32 0.0, %v355
        %v357 = vpop.f32.mrb[0].mxu0
        %358 = vmatprep.mubr.f32.mxu0 0.0
        %359 = vmatmul.mubr.f32.gmra.mrb[0].mxu0 %v255
        %v360 = vpop.f32.mrb[0].mxu0
        %v361 = vadd.f32 0.0, %v360
        %v362 = vpop.f32.mrb[0].mxu0
        %363 = vmatprep.mubr.f32.mxu0 0.0
        %364 = vmatmul.mubr.f32.gmra.mrb[0].mxu0 %v258
        %v365 = vpop.f32.mrb[0].mxu0
        %v366 = vadd.f32 0.0, %v365
        %v367 = vpop.f32.mrb[0].mxu0
        %368 = vdwg.mxu0
        %v370 = vsel %vm235, %v215, 0
        %v373 = vsel %vm235, %v216, 0
        %v376 = vsel %vm235, %v217, 0
        %v379 = vsel %vm235, %v218, 0
        %v382 = vsel %vm235, %v219, 0
        %v385 = vsel %vm235, %v220, 0
        %v388 = vsel %vm235, %v221, 0
        %v391 = vsel %vm235, %v222, 0
        %v394 = vsel %vm260, %v223, 0
        %396 = vmatprep.subr.mxu0 0.0
        %397 = vmatpush1.msra.mxu0 %v394
        %398 = vmatprep.subr.mxu0 0.0
        %399 = vmatpush1.msra.mxu0 0.0
        %400 = vmatprep.subr.mxu0 0.0
        %401 = vmatpush1.msra.mxu0 0.0
        %402 = vmatprep.subr.mxu0 0.0
        %403 = vmatpush1.msra.mxu0 0.0
        %404 = vmatprep.subr.mxu0 0.0
        %405 = vmatpush1.msra.mxu0 0.0
        %406 = vmatprep.subr.mxu0 0.0
        %407 = vmatpush1.msra.mxu0 0.0
        %408 = vmatprep.subr.mxu0 0.0
        %409 = vmatpush1.msra.mxu0 0.0
        %410 = vmatprep.subr.mxu0 0.0
        %411 = vmatpush1.msra.mxu0 0.0
        %412 = vmatprep.subr.mxu0 0.0
        %413 = vmatpush1.msra.mxu0 0.0
        %414 = vmatprep.subr.mxu0 0.0
        %415 = vmatpush1.msra.mxu0 0.0
        %416 = vmatprep.subr.mxu0 0.0
        %417 = vmatpush1.msra.mxu0 0.0
        %418 = vmatprep.subr.mxu0 0.0
        %419 = vmatpush1.msra.mxu0 0.0
        %420 = vmatprep.subr.mxu0 0.0
        %421 = vmatpush1.msra.mxu0 0.0
        %422 = vmatprep.subr.mxu0 0.0
        %423 = vmatpush1.msra.mxu0 0.0
        %424 = vmatprep.subr.mxu0 0.0
        %425 = vmatpush1.msra.mxu0 0.0
        %426 = vmatprep.subr.mxu0 0.0
        %427 = vmatpush1.msra.mxu0 0.0
        %428 = vmatprep.subr.mxu0 0.0
        %429 = vmatpush1.msra.mxu0 0.0
        %430 = vmatprep.subr.mxu0 0.0
        %431 = vmatpush1.msra.mxu0 0.0
        %432 = vmatprep.subr.mxu0 0.0
        %433 = vmatpush1.msra.mxu0 0.0
        %434 = vmatprep.subr.mxu0 0.0
        %435 = vmatpush1.msra.mxu0 0.0
        %436 = vmatprep.subr.mxu0 0.0
        %437 = vmatpush1.msra.mxu0 0.0
        %438 = vmatprep.subr.mxu0 0.0
        %439 = vmatpush1.msra.mxu0 0.0
        %440 = vmatprep.subr.mxu0 0.0
        %441 = vmatpush1.msra.mxu0 0.0
        %442 = vmatprep.subr.mxu0 0.0
        %443 = vmatpush1.msra.mxu0 0.0
        %444 = vmatprep.subr.mxu0 0.0
        %445 = vmatpush1.msra.mxu0 0.0
        %446 = vmatprep.subr.mxu0 0.0
        %447 = vmatpush1.msra.mxu0 0.0
        %448 = vmatprep.subr.mxu0 0.0
        %449 = vmatpush1.msra.mxu0 0.0
        %450 = vmatprep.subr.mxu0 0.0
        %451 = vmatpush1.msra.mxu0 0.0
        %452 = vmatprep.subr.mxu0 0.0
        %453 = vmatpush1.msra.mxu0 0.0
        %454 = vmatprep.subr.mxu0 0.0
        %455 = vmatpush1.msra.mxu0 0.0
        %456 = vmatprep.subr.mxu0 0.0
        %457 = vmatpush1.msra.mxu0 0.0
        %458 = vmatprep.subr.mxu0 0.0
        %459 = vmatpush1.msra.mxu0 0.0
        %460 = vmatprep.mubr.f32.mxu0 0.0
        %461 = vmatmul.mubr.f32.gmra.mrb[0].mxu0 %v370
        %v462 = vpop.f32.mrb[0].mxu0
        %v463 = vadd.f32 %v331, %v462
        %v464 = vpop.f32.mrb[0].mxu0
        %465 = vmatprep.mubr.f32.mxu0 0.0
        %466 = vmatmul.mubr.f32.gmra.mrb[0].mxu0 %v373
        %v467 = vpop.f32.mrb[0].mxu0
        %v468 = vadd.f32 %v336, %v467
        %v469 = vpop.f32.mrb[0].mxu0
        %470 = vmatprep.mubr.f32.mxu0 0.0
        %471 = vmatmul.mubr.f32.gmra.mrb[0].mxu0 %v376
        %v472 = vpop.f32.mrb[0].mxu0
        %v473 = vadd.f32 %v341, %v472
        %v474 = vpop.f32.mrb[0].mxu0
        %475 = vmatprep.mubr.f32.mxu0 0.0
        %476 = vmatmul.mubr.f32.gmra.mrb[0].mxu0 %v379
        %v477 = vpop.f32.mrb[0].mxu0
        %v478 = vadd.f32 %v346, %v477
        %v479 = vpop.f32.mrb[0].mxu0
        %480 = vmatprep.mubr.f32.mxu0 0.0
        %481 = vmatmul.mubr.f32.gmra.mrb[0].mxu0 %v382
        %v482 = vpop.f32.mrb[0].mxu0
        %v483 = vadd.f32 %v351, %v482
        %v484 = vpop.f32.mrb[0].mxu0
        %485 = vmatprep.mubr.f32.mxu0 0.0
        %486 = vmatmul.mubr.f32.gmra.mrb[0].mxu0 %v385
        %v487 = vpop.f32.mrb[0].mxu0
        %v488 = vadd.f32 %v356, %v487
        %v489 = vpop.f32.mrb[0].mxu0
        %490 = vmatprep.mubr.f32.mxu0 0.0
        %491 = vmatmul.mubr.f32.gmra.mrb[0].mxu0 %v388
        %v492 = vpop.f32.mrb[0].mxu0
        %v493 = vadd.f32 %v361, %v492
        %v494 = vpop.f32.mrb[0].mxu0
        %495 = vmatprep.mubr.f32.mxu0 0.0
        %496 = vmatmul.mubr.f32.gmra.mrb[0].mxu0 %v391
        %v497 = vpop.f32.mrb[0].mxu0
        %v498 = vadd.f32 %v366, %v497
        %v499 = vpop.f32.mrb[0].mxu0
        %500 = vdwg.mxu0
        %v501 = vld [vmem:[%s183 + $0x1] sm:$0xff]
        %v502 = vld [vmem:[%s183 + $0x11] sm:$0xff]
        %v503 = vld [vmem:[%s183 + $0x21] sm:$0xff]
        %v504 = vld [vmem:[%s183 + $0x31] sm:$0xff]
        %v505 = vld [vmem:[%s183 + $0x41] sm:$0xff]
        %v506 = vld [vmem:[%s183 + $0x51] sm:$0xff]
        %v507 = vld [vmem:[%s183 + $0x61] sm:$0xff]
        %v508 = vld [vmem:[%s183 + $0x71] sm:$0xff]
        %s509 = scalar_lea.vmem [#allocation5], 8
        %v510 = vld [vmem:[%s509] sm:$0xf]
        %v512 = vsel %vm235, %v501, 0
        %v515 = vsel %vm235, %v502, 0
        %v518 = vsel %vm235, %v503, 0
        %v521 = vsel %vm235, %v504, 0
        %v524 = vsel %vm235, %v505, 0
        %v527 = vsel %vm235, %v506, 0
        %v530 = vsel %vm235, %v507, 0
        %v533 = vsel %vm235, %v508, 0
        %v536 = vsel %vm260, %v510, 0
        %538 = vmatprep.subr.mxu0 0.0
        %539 = vmatpush1.msra.mxu0 %v536
        %540 = vmatprep.subr.mxu0 0.0
        %541 = vmatpush1.msra.mxu0 0.0
        %542 = vmatprep.subr.mxu0 0.0
        %543 = vmatpush1.msra.mxu0 0.0
        %544 = vmatprep.subr.mxu0 0.0
        %545 = vmatpush1.msra.mxu0 0.0
        %546 = vmatprep.subr.mxu0 0.0
        %547 = vmatpush1.msra.mxu0 0.0
        %548 = vmatprep.subr.mxu0 0.0
        %549 = vmatpush1.msra.mxu0 0.0
        %550 = vmatprep.subr.mxu0 0.0
        %551 = vmatpush1.msra.mxu0 0.0
        %552 = vmatprep.subr.mxu0 0.0
        %553 = vmatpush1.msra.mxu0 0.0
        %554 = vmatprep.subr.mxu0 0.0
        %555 = vmatpush1.msra.mxu0 0.0
        %556 = vmatprep.subr.mxu0 0.0
        %557 = vmatpush1.msra.mxu0 0.0
        %558 = vmatprep.subr.mxu0 0.0
        %559 = vmatpush1.msra.mxu0 0.0
        %560 = vmatprep.subr.mxu0 0.0
        %561 = vmatpush1.msra.mxu0 0.0
        %562 = vmatprep.subr.mxu0 0.0
        %563 = vmatpush1.msra.mxu0 0.0
        %564 = vmatprep.subr.mxu0 0.0
        %565 = vmatpush1.msra.mxu0 0.0
        %566 = vmatprep.subr.mxu0 0.0
        %567 = vmatpush1.msra.mxu0 0.0
        %568 = vmatprep.subr.mxu0 0.0
        %569 = vmatpush1.msra.mxu0 0.0
        %570 = vmatprep.subr.mxu0 0.0
        %571 = vmatpush1.msra.mxu0 0.0
        %572 = vmatprep.subr.mxu0 0.0
        %573 = vmatpush1.msra.mxu0 0.0
        %574 = vmatprep.subr.mxu0 0.0
        %575 = vmatpush1.msra.mxu0 0.0
        %576 = vmatprep.subr.mxu0 0.0
        %577 = vmatpush1.msra.mxu0 0.0
        %578 = vmatprep.subr.mxu0 0.0
        %579 = vmatpush1.msra.mxu0 0.0
        %580 = vmatprep.subr.mxu0 0.0
        %581 = vmatpush1.msra.mxu0 0.0
        %582 = vmatprep.subr.mxu0 0.0
        %583 = vmatpush1.msra.mxu0 0.0
        %584 = vmatprep.subr.mxu0 0.0
        %585 = vmatpush1.msra.mxu0 0.0
        %586 = vmatprep.subr.mxu0 0.0
        %587 = vmatpush1.msra.mxu0 0.0
        %588 = vmatprep.subr.mxu0 0.0
        %589 = vmatpush1.msra.mxu0 0.0
        %590 = vmatprep.subr.mxu0 0.0
        %591 = vmatpush1.msra.mxu0 0.0
        %592 = vmatprep.subr.mxu0 0.0
        %593 = vmatpush1.msra.mxu0 0.0
        %594 = vmatprep.subr.mxu0 0.0
        %595 = vmatpush1.msra.mxu0 0.0
        %596 = vmatprep.subr.mxu0 0.0
        %597 = vmatpush1.msra.mxu0 0.0
        %598 = vmatprep.subr.mxu0 0.0
        %599 = vmatpush1.msra.mxu0 0.0
        %600 = vmatprep.subr.mxu0 0.0
        %601 = vmatpush1.msra.mxu0 0.0
        %602 = vmatprep.mubr.f32.mxu0 0.0
        %603 = vmatmul.mubr.f32.gmra.mrb[0].mxu0 %v512
        %v604 = vpop.f32.mrb[0].mxu0
        %v605 = vadd.f32 0.0, %v604
        %v606 = vpop.f32.mrb[0].mxu0
        %607 = vmatprep.mubr.f32.mxu0 0.0
        %608 = vmatmul.mubr.f32.gmra.mrb[0].mxu0 %v515
        %v609 = vpop.f32.mrb[0].mxu0
        %v610 = vadd.f32 0.0, %v609
        %v611 = vpop.f32.mrb[0].mxu0
        %612 = vmatprep.mubr.f32.mxu0 0.0
        %613 = vmatmul.mubr.f32.gmra.mrb[0].mxu0 %v518
        %v614 = vpop.f32.mrb[0].mxu0
        %v615 = vadd.f32 0.0, %v614
        %v616 = vpop.f32.mrb[0].mxu0
        %617 = vmatprep.mubr.f32.mxu0 0.0
        %618 = vmatmul.mubr.f32.gmra.mrb[0].mxu0 %v521
        %v619 = vpop.f32.mrb[0].mxu0
        %v620 = vadd.f32 0.0, %v619
        %v621 = vpop.f32.mrb[0].mxu0
        %622 = vmatprep.mubr.f32.mxu0 0.0
        %623 = vmatmul.mubr.f32.gmra.mrb[0].mxu0 %v524
        %v624 = vpop.f32.mrb[0].mxu0
        %v625 = vadd.f32 0.0, %v624
        %v626 = vpop.f32.mrb[0].mxu0
        %627 = vmatprep.mubr.f32.mxu0 0.0
        %628 = vmatmul.mubr.f32.gmra.mrb[0].mxu0 %v527
        %v629 = vpop.f32.mrb[0].mxu0
        %v630 = vadd.f32 0.0, %v629
        %v631 = vpop.f32.mrb[0].mxu0
        %632 = vmatprep.mubr.f32.mxu0 0.0
        %633 = vmatmul.mubr.f32.gmra.mrb[0].mxu0 %v530
        %v634 = vpop.f32.mrb[0].mxu0
        %v635 = vadd.f32 0.0, %v634
        %v636 = vpop.f32.mrb[0].mxu0
        %637 = vmatprep.mubr.f32.mxu0 0.0
        %638 = vmatmul.mubr.f32.gmra.mrb[0].mxu0 %v533
        %v639 = vpop.f32.mrb[0].mxu0
        %v640 = vadd.f32 0.0, %v639
        %v641 = vpop.f32.mrb[0].mxu0
        %642 = vdwg.mxu0
        %v643 = vadd.f32 %v463, %v605
        %v644 = vadd.f32 %v468, %v610
        %v645 = vadd.f32 %v473, %v615
        %v646 = vadd.f32 %v478, %v620
        %v647 = vadd.f32 %v483, %v625
        %v648 = vadd.f32 %v488, %v630
        %v649 = vadd.f32 %v493, %v635
        %v650 = vadd.f32 %v498, %v640
        %s651 = scalar_lea.vmem %s183, 288 [#allocation2]
        %v652 = vld [vmem:[%s651] sm:$0xff]
        %v653 = vld [vmem:[%s651 + $0x10] sm:$0xff]
        %v654 = vld [vmem:[%s651 + $0x20] sm:$0xff]
        %v655 = vld [vmem:[%s651 + $0x30] sm:$0xff]
        %v656 = vld [vmem:[%s651 + $0x40] sm:$0xff]
        %v657 = vld [vmem:[%s651 + $0x50] sm:$0xff]
        %v658 = vld [vmem:[%s651 + $0x60] sm:$0xff]
        %v659 = vld [vmem:[%s651 + $0x70] sm:$0xff]
        %s660 = scalar_lea.vmem [#allocation5], 12
        %v661 = vld [vmem:[%s660] sm:$0xf]
        %v663 = vsel %vm235, %v652, 0
        %v666 = vsel %vm235, %v653, 0
        %v669 = vsel %vm235, %v654, 0
        %v672 = vsel %vm235, %v655, 0
        %v675 = vsel %vm235, %v656, 0
        %v678 = vsel %vm235, %v657, 0
        %v681 = vsel %vm235, %v658, 0
        %v684 = vsel %vm235, %v659, 0
        %v687 = vsel %vm260, %v661, 0
        %689 = vmatprep.subr.mxu0 0.0
        %690 = vmatpush1.msra.mxu0 %v687
        %691 = vmatprep.subr.mxu0 0.0
        %692 = vmatpush1.msra.mxu0 0.0
        %693 = vmatprep.subr.mxu0 0.0
        %694 = vmatpush1.msra.mxu0 0.0
        %695 = vmatprep.subr.mxu0 0.0
        %696 = vmatpush1.msra.mxu0 0.0
        %697 = vmatprep.subr.mxu0 0.0
        %698 = vmatpush1.msra.mxu0 0.0
        %699 = vmatprep.subr.mxu0 0.0
        %700 = vmatpush1.msra.mxu0 0.0
        %701 = vmatprep.subr.mxu0 0.0
        %702 = vmatpush1.msra.mxu0 0.0
        %703 = vmatprep.subr.mxu0 0.0
        %704 = vmatpush1.msra.mxu0 0.0
        %705 = vmatprep.subr.mxu0 0.0
        %706 = vmatpush1.msra.mxu0 0.0
        %707 = vmatprep.subr.mxu0 0.0
        %708 = vmatpush1.msra.mxu0 0.0
        %709 = vmatprep.subr.mxu0 0.0
        %710 = vmatpush1.msra.mxu0 0.0
        %711 = vmatprep.subr.mxu0 0.0
        %712 = vmatpush1.msra.mxu0 0.0
        %713 = vmatprep.subr.mxu0 0.0
        %714 = vmatpush1.msra.mxu0 0.0
        %715 = vmatprep.subr.mxu0 0.0
        %716 = vmatpush1.msra.mxu0 0.0
        %717 = vmatprep.subr.mxu0 0.0
        %718 = vmatpush1.msra.mxu0 0.0
        %719 = vmatprep.subr.mxu0 0.0
        %720 = vmatpush1.msra.mxu0 0.0
        %721 = vmatprep.subr.mxu0 0.0
        %722 = vmatpush1.msra.mxu0 0.0
        %723 = vmatprep.subr.mxu0 0.0
        %724 = vmatpush1.msra.mxu0 0.0
        %725 = vmatprep.subr.mxu0 0.0
        %726 = vmatpush1.msra.mxu0 0.0
        %727 = vmatprep.subr.mxu0 0.0
        %728 = vmatpush1.msra.mxu0 0.0
        %729 = vmatprep.subr.mxu0 0.0
        %730 = vmatpush1.msra.mxu0 0.0
        %731 = vmatprep.subr.mxu0 0.0
        %732 = vmatpush1.msra.mxu0 0.0
        %733 = vmatprep.subr.mxu0 0.0
        %734 = vmatpush1.msra.mxu0 0.0
        %735 = vmatprep.subr.mxu0 0.0
        %736 = vmatpush1.msra.mxu0 0.0
        %737 = vmatprep.subr.mxu0 0.0
        %738 = vmatpush1.msra.mxu0 0.0
        %739 = vmatprep.subr.mxu0 0.0
        %740 = vmatpush1.msra.mxu0 0.0
        %741 = vmatprep.subr.mxu0 0.0
        %742 = vmatpush1.msra.mxu0 0.0
        %743 = vmatprep.subr.mxu0 0.0
        %744 = vmatpush1.msra.mxu0 0.0
        %745 = vmatprep.subr.mxu0 0.0
        %746 = vmatpush1.msra.mxu0 0.0
        %747 = vmatprep.subr.mxu0 0.0
        %748 = vmatpush1.msra.mxu0 0.0
        %749 = vmatprep.subr.mxu0 0.0
        %750 = vmatpush1.msra.mxu0 0.0
        %751 = vmatprep.subr.mxu0 0.0
        %752 = vmatpush1.msra.mxu0 0.0
        %753 = vmatprep.mubr.f32.mxu0 0.0
        %754 = vmatmul.mubr.f32.gmra.mrb[0].mxu0 %v663
        %v755 = vpop.f32.mrb[0].mxu0
        %v756 = vadd.f32 0.0, %v755
        %v757 = vpop.f32.mrb[0].mxu0
        %758 = vmatprep.mubr.f32.mxu0 0.0
        %759 = vmatmul.mubr.f32.gmra.mrb[0].mxu0 %v666
        %v760 = vpop.f32.mrb[0].mxu0
        %v761 = vadd.f32 0.0, %v760
        %v762 = vpop.f32.mrb[0].mxu0
        %763 = vmatprep.mubr.f32.mxu0 0.0
        %764 = vmatmul.mubr.f32.gmra.mrb[0].mxu0 %v669
        %v765 = vpop.f32.mrb[0].mxu0
        %v766 = vadd.f32 0.0, %v765
        %v767 = vpop.f32.mrb[0].mxu0
        %768 = vmatprep.mubr.f32.mxu0 0.0
        %769 = vmatmul.mubr.f32.gmra.mrb[0].mxu0 %v672
        %v770 = vpop.f32.mrb[0].mxu0
        %v771 = vadd.f32 0.0, %v770
        %v772 = vpop.f32.mrb[0].mxu0
        %773 = vmatprep.mubr.f32.mxu0 0.0
        %774 = vmatmul.mubr.f32.gmra.mrb[0].mxu0 %v675
        %v775 = vpop.f32.mrb[0].mxu0
        %v776 = vadd.f32 0.0, %v775
        %v777 = vpop.f32.mrb[0].mxu0
        %778 = vmatprep.mubr.f32.mxu0 0.0
        %779 = vmatmul.mubr.f32.gmra.mrb[0].mxu0 %v678
        %v780 = vpop.f32.mrb[0].mxu0
        %v781 = vadd.f32 0.0, %v780
        %v782 = vpop.f32.mrb[0].mxu0
        %783 = vmatprep.mubr.f32.mxu0 0.0
        %784 = vmatmul.mubr.f32.gmra.mrb[0].mxu0 %v681
        %v785 = vpop.f32.mrb[0].mxu0
        %v786 = vadd.f32 0.0, %v785
        %v787 = vpop.f32.mrb[0].mxu0
        %788 = vmatprep.mubr.f32.mxu0 0.0
        %789 = vmatmul.mubr.f32.gmra.mrb[0].mxu0 %v684
        %v790 = vpop.f32.mrb[0].mxu0
        %v791 = vadd.f32 0.0, %v790
        %v792 = vpop.f32.mrb[0].mxu0
        %793 = vdwg.mxu0
        %v794 = vadd.f32 %v643, %v756
        %v795 = vadd.f32 %v644, %v761
        %v796 = vadd.f32 %v645, %v766
        %v797 = vadd.f32 %v646, %v771
        %v798 = vadd.f32 %v647, %v776
        %v799 = vadd.f32 %v648, %v781
        %v800 = vadd.f32 %v649, %v786
        %v801 = vadd.f32 %v650, %v791
        %s802 = scalar_lea.vmem %s183, 432 [#allocation2]
        %v803 = vld [vmem:[%s802] sm:$0xff]
        %v804 = vld [vmem:[%s802 + $0x10] sm:$0xff]
        %v805 = vld [vmem:[%s802 + $0x20] sm:$0xff]
        %v806 = vld [vmem:[%s802 + $0x30] sm:$0xff]
        %v807 = vld [vmem:[%s802 + $0x40] sm:$0xff]
        %v808 = vld [vmem:[%s802 + $0x50] sm:$0xff]
        %v809 = vld [vmem:[%s802 + $0x60] sm:$0xff]
        %v810 = vld [vmem:[%s802 + $0x70] sm:$0xff]
        %s811 = scalar_lea.vmem [#allocation5], 16
        %v812 = vld [vmem:[%s811] sm:$0xf]
        %v814 = vsel %vm235, %v803, 0
        %v817 = vsel %vm235, %v804, 0
        %v820 = vsel %vm235, %v805, 0
        %v823 = vsel %vm235, %v806, 0
        %v826 = vsel %vm235, %v807, 0
        %v829 = vsel %vm235, %v808, 0
        %v832 = vsel %vm235, %v809, 0
        %v835 = vsel %vm235, %v810, 0
        %v838 = vsel %vm260, %v812, 0
        %840 = vmatprep.subr.mxu0 0.0
        %841 = vmatpush1.msra.mxu0 %v838
        %842 = vmatprep.subr.mxu0 0.0
        %843 = vmatpush1.msra.mxu0 0.0
        %844 = vmatprep.subr.mxu0 0.0
        %845 = vmatpush1.msra.mxu0 0.0
        %846 = vmatprep.subr.mxu0 0.0
        %847 = vmatpush1.msra.mxu0 0.0
        %848 = vmatprep.subr.mxu0 0.0
        %849 = vmatpush1.msra.mxu0 0.0
        %850 = vmatprep.subr.mxu0 0.0
        %851 = vmatpush1.msra.mxu0 0.0
        %852 = vmatprep.subr.mxu0 0.0
        %853 = vmatpush1.msra.mxu0 0.0
        %854 = vmatprep.subr.mxu0 0.0
        %855 = vmatpush1.msra.mxu0 0.0
        %856 = vmatprep.subr.mxu0 0.0
        %857 = vmatpush1.msra.mxu0 0.0
        %858 = vmatprep.subr.mxu0 0.0
        %859 = vmatpush1.msra.mxu0 0.0
        %860 = vmatprep.subr.mxu0 0.0
        %861 = vmatpush1.msra.mxu0 0.0
        %862 = vmatprep.subr.mxu0 0.0
        %863 = vmatpush1.msra.mxu0 0.0
        %864 = vmatprep.subr.mxu0 0.0
        %865 = vmatpush1.msra.mxu0 0.0
        %866 = vmatprep.subr.mxu0 0.0
        %867 = vmatpush1.msra.mxu0 0.0
        %868 = vmatprep.subr.mxu0 0.0
        %869 = vmatpush1.msra.mxu0 0.0
        %870 = vmatprep.subr.mxu0 0.0
        %871 = vmatpush1.msra.mxu0 0.0
        %872 = vmatprep.subr.mxu0 0.0
        %873 = vmatpush1.msra.mxu0 0.0
        %874 = vmatprep.subr.mxu0 0.0
        %875 = vmatpush1.msra.mxu0 0.0
        %876 = vmatprep.subr.mxu0 0.0
        %877 = vmatpush1.msra.mxu0 0.0
        %878 = vmatprep.subr.mxu0 0.0
        %879 = vmatpush1.msra.mxu0 0.0
        %880 = vmatprep.subr.mxu0 0.0
        %881 = vmatpush1.msra.mxu0 0.0
        %882 = vmatprep.subr.mxu0 0.0
        %883 = vmatpush1.msra.mxu0 0.0
        %884 = vmatprep.subr.mxu0 0.0
        %885 = vmatpush1.msra.mxu0 0.0
        %886 = vmatprep.subr.mxu0 0.0
        %887 = vmatpush1.msra.mxu0 0.0
        %888 = vmatprep.subr.mxu0 0.0
        %889 = vmatpush1.msra.mxu0 0.0
        %890 = vmatprep.subr.mxu0 0.0
        %891 = vmatpush1.msra.mxu0 0.0
        %892 = vmatprep.subr.mxu0 0.0
        %893 = vmatpush1.msra.mxu0 0.0
        %894 = vmatprep.subr.mxu0 0.0
        %895 = vmatpush1.msra.mxu0 0.0
        %896 = vmatprep.subr.mxu0 0.0
        %897 = vmatpush1.msra.mxu0 0.0
        %898 = vmatprep.subr.mxu0 0.0
        %899 = vmatpush1.msra.mxu0 0.0
        %900 = vmatprep.subr.mxu0 0.0
        %901 = vmatpush1.msra.mxu0 0.0
        %902 = vmatprep.subr.mxu0 0.0
        %903 = vmatpush1.msra.mxu0 0.0
        %904 = vmatprep.mubr.f32.mxu0 0.0
        %905 = vmatmul.mubr.f32.gmra.mrb[0].mxu0 %v814
        %v906 = vpop.f32.mrb[0].mxu0
        %v907 = vadd.f32 0.0, %v906
        %v908 = vpop.f32.mrb[0].mxu0
        %909 = vmatprep.mubr.f32.mxu0 0.0
        %910 = vmatmul.mubr.f32.gmra.mrb[0].mxu0 %v817
        %v911 = vpop.f32.mrb[0].mxu0
        %v912 = vadd.f32 0.0, %v911
        %v913 = vpop.f32.mrb[0].mxu0
        %914 = vmatprep.mubr.f32.mxu0 0.0
        %915 = vmatmul.mubr.f32.gmra.mrb[0].mxu0 %v820
        %v916 = vpop.f32.mrb[0].mxu0
        %v917 = vadd.f32 0.0, %v916
        %v918 = vpop.f32.mrb[0].mxu0
        %919 = vmatprep.mubr.f32.mxu0 0.0
        %920 = vmatmul.mubr.f32.gmra.mrb[0].mxu0 %v823
        %v921 = vpop.f32.mrb[0].mxu0
        %v922 = vadd.f32 0.0, %v921
        %v923 = vpop.f32.mrb[0].mxu0
        %924 = vmatprep.mubr.f32.mxu0 0.0
        %925 = vmatmul.mubr.f32.gmra.mrb[0].mxu0 %v826
        %v926 = vpop.f32.mrb[0].mxu0
        %v927 = vadd.f32 0.0, %v926
        %v928 = vpop.f32.mrb[0].mxu0
        %929 = vmatprep.mubr.f32.mxu0 0.0
        %930 = vmatmul.mubr.f32.gmra.mrb[0].mxu0 %v829
        %v931 = vpop.f32.mrb[0].mxu0
        %v932 = vadd.f32 0.0, %v931
        %v933 = vpop.f32.mrb[0].mxu0
        %934 = vmatprep.mubr.f32.mxu0 0.0
        %935 = vmatmul.mubr.f32.gmra.mrb[0].mxu0 %v832
        %v936 = vpop.f32.mrb[0].mxu0
        %v937 = vadd.f32 0.0, %v936
        %v938 = vpop.f32.mrb[0].mxu0
        %939 = vmatprep.mubr.f32.mxu0 0.0
        %940 = vmatmul.mubr.f32.gmra.mrb[0].mxu0 %v835
        %v941 = vpop.f32.mrb[0].mxu0
        %v942 = vadd.f32 0.0, %v941
        %v943 = vpop.f32.mrb[0].mxu0
        %944 = vdwg.mxu0
        %v945 = vadd.f32 %v794, %v907
        %v946 = vadd.f32 %v795, %v912
        %v947 = vadd.f32 %v796, %v917
        %v948 = vadd.f32 %v797, %v922
        %v949 = vadd.f32 %v798, %v927
        %v950 = vadd.f32 %v799, %v932
        %v951 = vadd.f32 %v800, %v937
        %v952 = vadd.f32 %v801, %v942
        %v953 = vld [vmem:[%s651 + $0x1] sm:$0xff]
        %v954 = vld [vmem:[%s651 + $0x11] sm:$0xff]
        %v955 = vld [vmem:[%s651 + $0x21] sm:$0xff]
        %v956 = vld [vmem:[%s651 + $0x31] sm:$0xff]
        %v957 = vld [vmem:[%s651 + $0x41] sm:$0xff]
        %v958 = vld [vmem:[%s651 + $0x51] sm:$0xff]
        %v959 = vld [vmem:[%s651 + $0x61] sm:$0xff]
        %v960 = vld [vmem:[%s651 + $0x71] sm:$0xff]
        %s961 = scalar_lea.vmem [#allocation5], 20
        %v962 = vld [vmem:[%s961] sm:$0xf]
        %v964 = vsel %vm235, %v953, 0
        %v967 = vsel %vm235, %v954, 0
        %v970 = vsel %vm235, %v955, 0
        %v973 = vsel %vm235, %v956, 0
        %v976 = vsel %vm235, %v957, 0
        %v979 = vsel %vm235, %v958, 0
        %v982 = vsel %vm235, %v959, 0
        %v985 = vsel %vm235, %v960, 0
        %v988 = vsel %vm260, %v962, 0
        %990 = vmatprep.subr.mxu0 0.0
        %991 = vmatpush1.msra.mxu0 %v988
        %992 = vmatprep.subr.mxu0 0.0
        %993 = vmatpush1.msra.mxu0 0.0
        %994 = vmatprep.subr.mxu0 0.0
        %995 = vmatpush1.msra.mxu0 0.0
        %996 = vmatprep.subr.mxu0 0.0
        %997 = vmatpush1.msra.mxu0 0.0
        %998 = vmatprep.subr.mxu0 0.0
        %999 = vmatpush1.msra.mxu0 0.0
        %1000 = vmatprep.subr.mxu0 0.0
        %1001 = vmatpush1.msra.mxu0 0.0
        %1002 = vmatprep.subr.mxu0 0.0
        %1003 = vmatpush1.msra.mxu0 0.0
        %1004 = vmatprep.subr.mxu0 0.0
        %1005 = vmatpush1.msra.mxu0 0.0
        %1006 = vmatprep.subr.mxu0 0.0
        %1007 = vmatpush1.msra.mxu0 0.0
        %1008 = vmatprep.subr.mxu0 0.0
        %1009 = vmatpush1.msra.mxu0 0.0
        %1010 = vmatprep.subr.mxu0 0.0
        %1011 = vmatpush1.msra.mxu0 0.0
        %1012 = vmatprep.subr.mxu0 0.0
        %1013 = vmatpush1.msra.mxu0 0.0
        %1014 = vmatprep.subr.mxu0 0.0
        %1015 = vmatpush1.msra.mxu0 0.0
        %1016 = vmatprep.subr.mxu0 0.0
        %1017 = vmatpush1.msra.mxu0 0.0
        %1018 = vmatprep.subr.mxu0 0.0
        %1019 = vmatpush1.msra.mxu0 0.0
        %1020 = vmatprep.subr.mxu0 0.0
        %1021 = vmatpush1.msra.mxu0 0.0
        %1022 = vmatprep.subr.mxu0 0.0
        %1023 = vmatpush1.msra.mxu0 0.0
        %1024 = vmatprep.subr.mxu0 0.0
        %1025 = vmatpush1.msra.mxu0 0.0
        %1026 = vmatprep.subr.mxu0 0.0
        %1027 = vmatpush1.msra.mxu0 0.0
        %1028 = vmatprep.subr.mxu0 0.0
        %1029 = vmatpush1.msra.mxu0 0.0
        %1030 = vmatprep.subr.mxu0 0.0
        %1031 = vmatpush1.msra.mxu0 0.0
        %1032 = vmatprep.subr.mxu0 0.0
        %1033 = vmatpush1.msra.mxu0 0.0
        %1034 = vmatprep.subr.mxu0 0.0
        %1035 = vmatpush1.msra.mxu0 0.0
        %1036 = vmatprep.subr.mxu0 0.0
        %1037 = vmatpush1.msra.mxu0 0.0
        %1038 = vmatprep.subr.mxu0 0.0
        %1039 = vmatpush1.msra.mxu0 0.0
        %1040 = vmatprep.subr.mxu0 0.0
        %1041 = vmatpush1.msra.mxu0 0.0
        %1042 = vmatprep.subr.mxu0 0.0
        %1043 = vmatpush1.msra.mxu0 0.0
        %1044 = vmatprep.subr.mxu0 0.0
        %1045 = vmatpush1.msra.mxu0 0.0
        %1046 = vmatprep.subr.mxu0 0.0
        %1047 = vmatpush1.msra.mxu0 0.0
        %1048 = vmatprep.subr.mxu0 0.0
        %1049 = vmatpush1.msra.mxu0 0.0
        %1050 = vmatprep.subr.mxu0 0.0
        %1051 = vmatpush1.msra.mxu0 0.0
        %1052 = vmatprep.subr.mxu0 0.0
        %1053 = vmatpush1.msra.mxu0 0.0
        %1054 = vmatprep.mubr.f32.mxu0 0.0
        %1055 = vmatmul.mubr.f32.gmra.mrb[0].mxu0 %v964
        %v1056 = vpop.f32.mrb[0].mxu0
        %v1057 = vadd.f32 0.0, %v1056
        %v1058 = vpop.f32.mrb[0].mxu0
        %1059 = vmatprep.mubr.f32.mxu0 0.0
        %1060 = vmatmul.mubr.f32.gmra.mrb[0].mxu0 %v967
        %v1061 = vpop.f32.mrb[0].mxu0
        %v1062 = vadd.f32 0.0, %v1061
        %v1063 = vpop.f32.mrb[0].mxu0
        %1064 = vmatprep.mubr.f32.mxu0 0.0
        %1065 = vmatmul.mubr.f32.gmra.mrb[0].mxu0 %v970
        %v1066 = vpop.f32.mrb[0].mxu0
        %v1067 = vadd.f32 0.0, %v1066
        %v1068 = vpop.f32.mrb[0].mxu0
        %1069 = vmatprep.mubr.f32.mxu0 0.0
        %1070 = vmatmul.mubr.f32.gmra.mrb[0].mxu0 %v973
        %v1071 = vpop.f32.mrb[0].mxu0
        %v1072 = vadd.f32 0.0, %v1071
        %v1073 = vpop.f32.mrb[0].mxu0
        %1074 = vmatprep.mubr.f32.mxu0 0.0
        %1075 = vmatmul.mubr.f32.gmra.mrb[0].mxu0 %v976
        %v1076 = vpop.f32.mrb[0].mxu0
        %v1077 = vadd.f32 0.0, %v1076
        %v1078 = vpop.f32.mrb[0].mxu0
        %1079 = vmatprep.mubr.f32.mxu0 0.0
        %1080 = vmatmul.mubr.f32.gmra.mrb[0].mxu0 %v979
        %v1081 = vpop.f32.mrb[0].mxu0
        %v1082 = vadd.f32 0.0, %v1081
        %v1083 = vpop.f32.mrb[0].mxu0
        %1084 = vmatprep.mubr.f32.mxu0 0.0
        %1085 = vmatmul.mubr.f32.gmra.mrb[0].mxu0 %v982
        %v1086 = vpop.f32.mrb[0].mxu0
        %v1087 = vadd.f32 0.0, %v1086
        %v1088 = vpop.f32.mrb[0].mxu0
        %1089 = vmatprep.mubr.f32.mxu0 0.0
        %1090 = vmatmul.mubr.f32.gmra.mrb[0].mxu0 %v985
        %v1091 = vpop.f32.mrb[0].mxu0
        %v1092 = vadd.f32 0.0, %v1091
        %v1093 = vpop.f32.mrb[0].mxu0
        %1094 = vdwg.mxu0
        %v1095 = vadd.f32 %v945, %v1057
        %v1096 = vadd.f32 %v946, %v1062
        %v1097 = vadd.f32 %v947, %v1067
        %v1098 = vadd.f32 %v948, %v1072
        %v1099 = vadd.f32 %v949, %v1077
        %v1100 = vadd.f32 %v950, %v1082
        %v1101 = vadd.f32 %v951, %v1087
        %v1102 = vadd.f32 %v952, %v1092
        %s1103 = scalar_lea.vmem %s183, 16 [#allocation2]
        %v1104 = vld [vmem:[%s1103] sm:$0xff]
        %v1105 = vld [vmem:[%s1103 + $0x10] sm:$0xff]
        %v1106 = vld [vmem:[%s1103 + $0x20] sm:$0xff]
        %v1107 = vld [vmem:[%s1103 + $0x30] sm:$0xff]
        %v1108 = vld [vmem:[%s1103 + $0x40] sm:$0xff]
        %v1109 = vld [vmem:[%s1103 + $0x50] sm:$0xff]
        %v1110 = vld [vmem:[%s1103 + $0x60] sm:$0xff]
        %v1111 = vld [vmem:[%s1103 + $0x70] sm:$0xff]
        %s1112 = scalar_lea.vmem [#allocation5], 24
        %v1113 = vld [vmem:[%s1112] sm:$0xf]
        %v1115 = vsel %vm235, %v1104, 0
        %v1118 = vsel %vm235, %v1105, 0
        %v1121 = vsel %vm235, %v1106, 0
        %v1124 = vsel %vm235, %v1107, 0
        %v1127 = vsel %vm235, %v1108, 0
        %v1130 = vsel %vm235, %v1109, 0
        %v1133 = vsel %vm235, %v1110, 0
        %v1136 = vsel %vm235, %v1111, 0
        %v1139 = vsel %vm260, %v1113, 0
        %1141 = vmatprep.subr.mxu0 0.0
        %1142 = vmatpush1.msra.mxu0 %v1139
        %1143 = vmatprep.subr.mxu0 0.0
        %1144 = vmatpush1.msra.mxu0 0.0
        %1145 = vmatprep.subr.mxu0 0.0
        %1146 = vmatpush1.msra.mxu0 0.0
        %1147 = vmatprep.subr.mxu0 0.0
        %1148 = vmatpush1.msra.mxu0 0.0
        %1149 = vmatprep.subr.mxu0 0.0
        %1150 = vmatpush1.msra.mxu0 0.0
        %1151 = vmatprep.subr.mxu0 0.0
        %1152 = vmatpush1.msra.mxu0 0.0
        %1153 = vmatprep.subr.mxu0 0.0
        %1154 = vmatpush1.msra.mxu0 0.0
        %1155 = vmatprep.subr.mxu0 0.0
        %1156 = vmatpush1.msra.mxu0 0.0
        %1157 = vmatprep.subr.mxu0 0.0
        %1158 = vmatpush1.msra.mxu0 0.0
        %1159 = vmatprep.subr.mxu0 0.0
        %1160 = vmatpush1.msra.mxu0 0.0
        %1161 = vmatprep.subr.mxu0 0.0
        %1162 = vmatpush1.msra.mxu0 0.0
        %1163 = vmatprep.subr.mxu0 0.0
        %1164 = vmatpush1.msra.mxu0 0.0
        %1165 = vmatprep.subr.mxu0 0.0
        %1166 = vmatpush1.msra.mxu0 0.0
        %1167 = vmatprep.subr.mxu0 0.0
        %1168 = vmatpush1.msra.mxu0 0.0
        %1169 = vmatprep.subr.mxu0 0.0
        %1170 = vmatpush1.msra.mxu0 0.0
        %1171 = vmatprep.subr.mxu0 0.0
        %1172 = vmatpush1.msra.mxu0 0.0
        %1173 = vmatprep.subr.mxu0 0.0
        %1174 = vmatpush1.msra.mxu0 0.0
        %1175 = vmatprep.subr.mxu0 0.0
        %1176 = vmatpush1.msra.mxu0 0.0
        %1177 = vmatprep.subr.mxu0 0.0
        %1178 = vmatpush1.msra.mxu0 0.0
        %1179 = vmatprep.subr.mxu0 0.0
        %1180 = vmatpush1.msra.mxu0 0.0
        %1181 = vmatprep.subr.mxu0 0.0
        %1182 = vmatpush1.msra.mxu0 0.0
        %1183 = vmatprep.subr.mxu0 0.0
        %1184 = vmatpush1.msra.mxu0 0.0
        %1185 = vmatprep.subr.mxu0 0.0
        %1186 = vmatpush1.msra.mxu0 0.0
        %1187 = vmatprep.subr.mxu0 0.0
        %1188 = vmatpush1.msra.mxu0 0.0
        %1189 = vmatprep.subr.mxu0 0.0
        %1190 = vmatpush1.msra.mxu0 0.0
        %1191 = vmatprep.subr.mxu0 0.0
        %1192 = vmatpush1.msra.mxu0 0.0
        %1193 = vmatprep.subr.mxu0 0.0
        %1194 = vmatpush1.msra.mxu0 0.0
        %1195 = vmatprep.subr.mxu0 0.0
        %1196 = vmatpush1.msra.mxu0 0.0
        %1197 = vmatprep.subr.mxu0 0.0
        %1198 = vmatpush1.msra.mxu0 0.0
        %1199 = vmatprep.subr.mxu0 0.0
        %1200 = vmatpush1.msra.mxu0 0.0
        %1201 = vmatprep.subr.mxu0 0.0
        %1202 = vmatpush1.msra.mxu0 0.0
        %1203 = vmatprep.subr.mxu0 0.0
        %1204 = vmatpush1.msra.mxu0 0.0
        %1205 = vmatprep.mubr.f32.mxu0 0.0
        %1206 = vmatmul.mubr.f32.gmra.mrb[0].mxu0 %v1115
        %v1207 = vpop.f32.mrb[0].mxu0
        %v1208 = vadd.f32 0.0, %v1207
        %v1209 = vpop.f32.mrb[0].mxu0
        %1210 = vmatprep.mubr.f32.mxu0 0.0
        %1211 = vmatmul.mubr.f32.gmra.mrb[0].mxu0 %v1118
        %v1212 = vpop.f32.mrb[0].mxu0
        %v1213 = vadd.f32 0.0, %v1212
        %v1214 = vpop.f32.mrb[0].mxu0
        %1215 = vmatprep.mubr.f32.mxu0 0.0
        %1216 = vmatmul.mubr.f32.gmra.mrb[0].mxu0 %v1121
        %v1217 = vpop.f32.mrb[0].mxu0
        %v1218 = vadd.f32 0.0, %v1217
        %v1219 = vpop.f32.mrb[0].mxu0
        %1220 = vmatprep.mubr.f32.mxu0 0.0
        %1221 = vmatmul.mubr.f32.gmra.mrb[0].mxu0 %v1124
        %v1222 = vpop.f32.mrb[0].mxu0
        %v1223 = vadd.f32 0.0, %v1222
        %v1224 = vpop.f32.mrb[0].mxu0
        %1225 = vmatprep.mubr.f32.mxu0 0.0
        %1226 = vmatmul.mubr.f32.gmra.mrb[0].mxu0 %v1127
        %v1227 = vpop.f32.mrb[0].mxu0
        %v1228 = vadd.f32 0.0, %v1227
        %v1229 = vpop.f32.mrb[0].mxu0
        %1230 = vmatprep.mubr.f32.mxu0 0.0
        %1231 = vmatmul.mubr.f32.gmra.mrb[0].mxu0 %v1130
        %v1232 = vpop.f32.mrb[0].mxu0
        %v1233 = vadd.f32 0.0, %v1232
        %v1234 = vpop.f32.mrb[0].mxu0
        %1235 = vmatprep.mubr.f32.mxu0 0.0
        %1236 = vmatmul.mubr.f32.gmra.mrb[0].mxu0 %v1133
        %v1237 = vpop.f32.mrb[0].mxu0
        %v1238 = vadd.f32 0.0, %v1237
        %v1239 = vpop.f32.mrb[0].mxu0
        %1240 = vmatprep.mubr.f32.mxu0 0.0
        %1241 = vmatmul.mubr.f32.gmra.mrb[0].mxu0 %v1136
        %v1242 = vpop.f32.mrb[0].mxu0
        %v1243 = vadd.f32 0.0, %v1242
        %v1244 = vpop.f32.mrb[0].mxu0
        %1245 = vdwg.mxu0
        %v1246 = vadd.f32 %v1095, %v1208
        %v1247 = vadd.f32 %v1096, %v1213
        %v1248 = vadd.f32 %v1097, %v1218
        %v1249 = vadd.f32 %v1098, %v1223
        %v1250 = vadd.f32 %v1099, %v1228
        %v1251 = vadd.f32 %v1100, %v1233
        %v1252 = vadd.f32 %v1101, %v1238
        %v1253 = vadd.f32 %v1102, %v1243
        %s1254 = scalar_lea.vmem %s183, 160 [#allocation2]
        %v1255 = vld [vmem:[%s1254] sm:$0xff]
        %v1256 = vld [vmem:[%s1254 + $0x10] sm:$0xff]
        %v1257 = vld [vmem:[%s1254 + $0x20] sm:$0xff]
        %v1258 = vld [vmem:[%s1254 + $0x30] sm:$0xff]
        %v1259 = vld [vmem:[%s1254 + $0x40] sm:$0xff]
        %v1260 = vld [vmem:[%s1254 + $0x50] sm:$0xff]
        %v1261 = vld [vmem:[%s1254 + $0x60] sm:$0xff]
        %v1262 = vld [vmem:[%s1254 + $0x70] sm:$0xff]
        %s1263 = scalar_lea.vmem [#allocation5], 28
        %v1264 = vld [vmem:[%s1263] sm:$0xf]
        %v1266 = vsel %vm235, %v1255, 0
        %v1269 = vsel %vm235, %v1256, 0
        %v1272 = vsel %vm235, %v1257, 0
        %v1275 = vsel %vm235, %v1258, 0
        %v1278 = vsel %vm235, %v1259, 0
        %v1281 = vsel %vm235, %v1260, 0
        %v1284 = vsel %vm235, %v1261, 0
        %v1287 = vsel %vm235, %v1262, 0
        %v1290 = vsel %vm260, %v1264, 0
        %1292 = vmatprep.subr.mxu0 0.0
        %1293 = vmatpush1.msra.mxu0 %v1290
        %1294 = vmatprep.subr.mxu0 0.0
        %1295 = vmatpush1.msra.mxu0 0.0
        %1296 = vmatprep.subr.mxu0 0.0
        %1297 = vmatpush1.msra.mxu0 0.0
        %1298 = vmatprep.subr.mxu0 0.0
        %1299 = vmatpush1.msra.mxu0 0.0
        %1300 = vmatprep.subr.mxu0 0.0
        %1301 = vmatpush1.msra.mxu0 0.0
        %1302 = vmatprep.subr.mxu0 0.0
        %1303 = vmatpush1.msra.mxu0 0.0
        %1304 = vmatprep.subr.mxu0 0.0
        %1305 = vmatpush1.msra.mxu0 0.0
        %1306 = vmatprep.subr.mxu0 0.0
        %1307 = vmatpush1.msra.mxu0 0.0
        %1308 = vmatprep.subr.mxu0 0.0
        %1309 = vmatpush1.msra.mxu0 0.0
        %1310 = vmatprep.subr.mxu0 0.0
        %1311 = vmatpush1.msra.mxu0 0.0
        %1312 = vmatprep.subr.mxu0 0.0
        %1313 = vmatpush1.msra.mxu0 0.0
        %1314 = vmatprep.subr.mxu0 0.0
        %1315 = vmatpush1.msra.mxu0 0.0
        %1316 = vmatprep.subr.mxu0 0.0
        %1317 = vmatpush1.msra.mxu0 0.0
        %1318 = vmatprep.subr.mxu0 0.0
        %1319 = vmatpush1.msra.mxu0 0.0
        %1320 = vmatprep.subr.mxu0 0.0
        %1321 = vmatpush1.msra.mxu0 0.0
        %1322 = vmatprep.subr.mxu0 0.0
        %1323 = vmatpush1.msra.mxu0 0.0
        %1324 = vmatprep.subr.mxu0 0.0
        %1325 = vmatpush1.msra.mxu0 0.0
        %1326 = vmatprep.subr.mxu0 0.0
        %1327 = vmatpush1.msra.mxu0 0.0
        %1328 = vmatprep.subr.mxu0 0.0
        %1329 = vmatpush1.msra.mxu0 0.0
        %1330 = vmatprep.subr.mxu0 0.0
        %1331 = vmatpush1.msra.mxu0 0.0
        %1332 = vmatprep.subr.mxu0 0.0
        %1333 = vmatpush1.msra.mxu0 0.0
        %1334 = vmatprep.subr.mxu0 0.0
        %1335 = vmatpush1.msra.mxu0 0.0
        %1336 = vmatprep.subr.mxu0 0.0
        %1337 = vmatpush1.msra.mxu0 0.0
        %1338 = vmatprep.subr.mxu0 0.0
        %1339 = vmatpush1.msra.mxu0 0.0
        %1340 = vmatprep.subr.mxu0 0.0
        %1341 = vmatpush1.msra.mxu0 0.0
        %1342 = vmatprep.subr.mxu0 0.0
        %1343 = vmatpush1.msra.mxu0 0.0
        %1344 = vmatprep.subr.mxu0 0.0
        %1345 = vmatpush1.msra.mxu0 0.0
        %1346 = vmatprep.subr.mxu0 0.0
        %1347 = vmatpush1.msra.mxu0 0.0
        %1348 = vmatprep.subr.mxu0 0.0
        %1349 = vmatpush1.msra.mxu0 0.0
        %1350 = vmatprep.subr.mxu0 0.0
        %1351 = vmatpush1.msra.mxu0 0.0
        %1352 = vmatprep.subr.mxu0 0.0
        %1353 = vmatpush1.msra.mxu0 0.0
        %1354 = vmatprep.subr.mxu0 0.0
        %1355 = vmatpush1.msra.mxu0 0.0
        %1356 = vmatprep.mubr.f32.mxu0 0.0
        %1357 = vmatmul.mubr.f32.gmra.mrb[0].mxu0 %v1266
        %v1358 = vpop.f32.mrb[0].mxu0
        %v1359 = vadd.f32 0.0, %v1358
        %v1360 = vpop.f32.mrb[0].mxu0
        %1361 = vmatprep.mubr.f32.mxu0 0.0
        %1362 = vmatmul.mubr.f32.gmra.mrb[0].mxu0 %v1269
        %v1363 = vpop.f32.mrb[0].mxu0
        %v1364 = vadd.f32 0.0, %v1363
        %v1365 = vpop.f32.mrb[0].mxu0
        %1366 = vmatprep.mubr.f32.mxu0 0.0
        %1367 = vmatmul.mubr.f32.gmra.mrb[0].mxu0 %v1272
        %v1368 = vpop.f32.mrb[0].mxu0
        %v1369 = vadd.f32 0.0, %v1368
        %v1370 = vpop.f32.mrb[0].mxu0
        %1371 = vmatprep.mubr.f32.mxu0 0.0
        %1372 = vmatmul.mubr.f32.gmra.mrb[0].mxu0 %v1275
        %v1373 = vpop.f32.mrb[0].mxu0
        %v1374 = vadd.f32 0.0, %v1373
        %v1375 = vpop.f32.mrb[0].mxu0
        %1376 = vmatprep.mubr.f32.mxu0 0.0
        %1377 = vmatmul.mubr.f32.gmra.mrb[0].mxu0 %v1278
        %v1378 = vpop.f32.mrb[0].mxu0
        %v1379 = vadd.f32 0.0, %v1378
        %v1380 = vpop.f32.mrb[0].mxu0
        %1381 = vmatprep.mubr.f32.mxu0 0.0
        %1382 = vmatmul.mubr.f32.gmra.mrb[0].mxu0 %v1281
        %v1383 = vpop.f32.mrb[0].mxu0
        %v1384 = vadd.f32 0.0, %v1383
        %v1385 = vpop.f32.mrb[0].mxu0
        %1386 = vmatprep.mubr.f32.mxu0 0.0
        %1387 = vmatmul.mubr.f32.gmra.mrb[0].mxu0 %v1284
        %v1388 = vpop.f32.mrb[0].mxu0
        %v1389 = vadd.f32 0.0, %v1388
        %v1390 = vpop.f32.mrb[0].mxu0
        %1391 = vmatprep.mubr.f32.mxu0 0.0
        %1392 = vmatmul.mubr.f32.gmra.mrb[0].mxu0 %v1287
        %v1393 = vpop.f32.mrb[0].mxu0
        %v1394 = vadd.f32 0.0, %v1393
        %v1395 = vpop.f32.mrb[0].mxu0
        %1396 = vdwg.mxu0
        %v1397 = vadd.f32 %v1246, %v1359
        %v1398 = vadd.f32 %v1247, %v1364
        %v1399 = vadd.f32 %v1248, %v1369
        %v1400 = vadd.f32 %v1249, %v1374
        %v1401 = vadd.f32 %v1250, %v1379
        %v1402 = vadd.f32 %v1251, %v1384
        %v1403 = vadd.f32 %v1252, %v1389
        %v1404 = vadd.f32 %v1253, %v1394
        %v1405 = vld [vmem:[%s1103 + $0x1] sm:$0xff]
        %v1406 = vld [vmem:[%s1103 + $0x11] sm:$0xff]
        %v1407 = vld [vmem:[%s1103 + $0x21] sm:$0xff]
        %v1408 = vld [vmem:[%s1103 + $0x31] sm:$0xff]
        %v1409 = vld [vmem:[%s1103 + $0x41] sm:$0xff]
        %v1410 = vld [vmem:[%s1103 + $0x51] sm:$0xff]
        %v1411 = vld [vmem:[%s1103 + $0x61] sm:$0xff]
        %v1412 = vld [vmem:[%s1103 + $0x71] sm:$0xff]
        %s1413 = scalar_lea.vmem [#allocation5], 32
        %v1414 = vld [vmem:[%s1413] sm:$0xf]
        %v1416 = vsel %vm235, %v1405, 0
        %v1419 = vsel %vm235, %v1406, 0
        %v1422 = vsel %vm235, %v1407, 0
        %v1425 = vsel %vm235, %v1408, 0
        %v1428 = vsel %vm235, %v1409, 0
        %v1431 = vsel %vm235, %v1410, 0
        %v1434 = vsel %vm235, %v1411, 0
        %v1437 = vsel %vm235, %v1412, 0
        %v1440 = vsel %vm260, %v1414, 0
        %1442 = vmatprep.subr.mxu0 0.0
        %1443 = vmatpush1.msra.mxu0 %v1440
        %1444 = vmatprep.subr.mxu0 0.0
        %1445 = vmatpush1.msra.mxu0 0.0
        %1446 = vmatprep.subr.mxu0 0.0
        %1447 = vmatpush1.msra.mxu0 0.0
        %1448 = vmatprep.subr.mxu0 0.0
        %1449 = vmatpush1.msra.mxu0 0.0
        %1450 = vmatprep.subr.mxu0 0.0
        %1451 = vmatpush1.msra.mxu0 0.0
        %1452 = vmatprep.subr.mxu0 0.0
        %1453 = vmatpush1.msra.mxu0 0.0
        %1454 = vmatprep.subr.mxu0 0.0
        %1455 = vmatpush1.msra.mxu0 0.0
        %1456 = vmatprep.subr.mxu0 0.0
        %1457 = vmatpush1.msra.mxu0 0.0
        %1458 = vmatprep.subr.mxu0 0.0
        %1459 = vmatpush1.msra.mxu0 0.0
        %1460 = vmatprep.subr.mxu0 0.0
        %1461 = vmatpush1.msra.mxu0 0.0
        %1462 = vmatprep.subr.mxu0 0.0
        %1463 = vmatpush1.msra.mxu0 0.0
        %1464 = vmatprep.subr.mxu0 0.0
        %1465 = vmatpush1.msra.mxu0 0.0
        %1466 = vmatprep.subr.mxu0 0.0
        %1467 = vmatpush1.msra.mxu0 0.0
        %1468 = vmatprep.subr.mxu0 0.0
        %1469 = vmatpush1.msra.mxu0 0.0
        %1470 = vmatprep.subr.mxu0 0.0
        %1471 = vmatpush1.msra.mxu0 0.0
        %1472 = vmatprep.subr.mxu0 0.0
        %1473 = vmatpush1.msra.mxu0 0.0
        %1474 = vmatprep.subr.mxu0 0.0
        %1475 = vmatpush1.msra.mxu0 0.0
        %1476 = vmatprep.subr.mxu0 0.0
        %1477 = vmatpush1.msra.mxu0 0.0
        %1478 = vmatprep.subr.mxu0 0.0
        %1479 = vmatpush1.msra.mxu0 0.0
        %1480 = vmatprep.subr.mxu0 0.0
        %1481 = vmatpush1.msra.mxu0 0.0
        %1482 = vmatprep.subr.mxu0 0.0
        %1483 = vmatpush1.msra.mxu0 0.0
        %1484 = vmatprep.subr.mxu0 0.0
        %1485 = vmatpush1.msra.mxu0 0.0
        %1486 = vmatprep.subr.mxu0 0.0
        %1487 = vmatpush1.msra.mxu0 0.0
        %1488 = vmatprep.subr.mxu0 0.0
        %1489 = vmatpush1.msra.mxu0 0.0
        %1490 = vmatprep.subr.mxu0 0.0
        %1491 = vmatpush1.msra.mxu0 0.0
        %1492 = vmatprep.subr.mxu0 0.0
        %1493 = vmatpush1.msra.mxu0 0.0
        %1494 = vmatprep.subr.mxu0 0.0
        %1495 = vmatpush1.msra.mxu0 0.0
        %1496 = vmatprep.subr.mxu0 0.0
        %1497 = vmatpush1.msra.mxu0 0.0
        %1498 = vmatprep.subr.mxu0 0.0
        %1499 = vmatpush1.msra.mxu0 0.0
        %1500 = vmatprep.subr.mxu0 0.0
        %1501 = vmatpush1.msra.mxu0 0.0
        %1502 = vmatprep.subr.mxu0 0.0
        %1503 = vmatpush1.msra.mxu0 0.0
        %1504 = vmatprep.subr.mxu0 0.0
        %1505 = vmatpush1.msra.mxu0 0.0
        %1506 = vmatprep.mubr.f32.mxu0 0.0
        %1507 = vmatmul.mubr.f32.gmra.mrb[0].mxu0 %v1416
        %v1508 = vpop.f32.mrb[0].mxu0
        %v1509 = vadd.f32 0.0, %v1508
        %v1510 = vpop.f32.mrb[0].mxu0
        %1511 = vmatprep.mubr.f32.mxu0 0.0
        %1512 = vmatmul.mubr.f32.gmra.mrb[0].mxu0 %v1419
        %v1513 = vpop.f32.mrb[0].mxu0
        %v1514 = vadd.f32 0.0, %v1513
        %v1515 = vpop.f32.mrb[0].mxu0
        %1516 = vmatprep.mubr.f32.mxu0 0.0
        %1517 = vmatmul.mubr.f32.gmra.mrb[0].mxu0 %v1422
        %v1518 = vpop.f32.mrb[0].mxu0
        %v1519 = vadd.f32 0.0, %v1518
        %v1520 = vpop.f32.mrb[0].mxu0
        %1521 = vmatprep.mubr.f32.mxu0 0.0
        %1522 = vmatmul.mubr.f32.gmra.mrb[0].mxu0 %v1425
        %v1523 = vpop.f32.mrb[0].mxu0
        %v1524 = vadd.f32 0.0, %v1523
        %v1525 = vpop.f32.mrb[0].mxu0
        %1526 = vmatprep.mubr.f32.mxu0 0.0
        %1527 = vmatmul.mubr.f32.gmra.mrb[0].mxu0 %v1428
        %v1528 = vpop.f32.mrb[0].mxu0
        %v1529 = vadd.f32 0.0, %v1528
        %v1530 = vpop.f32.mrb[0].mxu0
        %1531 = vmatprep.mubr.f32.mxu0 0.0
        %1532 = vmatmul.mubr.f32.gmra.mrb[0].mxu0 %v1431
        %v1533 = vpop.f32.mrb[0].mxu0
        %v1534 = vadd.f32 0.0, %v1533
        %v1535 = vpop.f32.mrb[0].mxu0
        %1536 = vmatprep.mubr.f32.mxu0 0.0
        %1537 = vmatmul.mubr.f32.gmra.mrb[0].mxu0 %v1434
        %v1538 = vpop.f32.mrb[0].mxu0
        %v1539 = vadd.f32 0.0, %v1538
        %v1540 = vpop.f32.mrb[0].mxu0
        %1541 = vmatprep.mubr.f32.mxu0 0.0
        %1542 = vmatmul.mubr.f32.gmra.mrb[0].mxu0 %v1437
        %v1543 = vpop.f32.mrb[0].mxu0
        %v1544 = vadd.f32 0.0, %v1543
        %v1545 = vpop.f32.mrb[0].mxu0
        %1546 = vdwg.mxu0
        %v1547 = vadd.f32 %v1397, %v1509
        %v1548 = vadd.f32 %v1398, %v1514
        %v1549 = vadd.f32 %v1399, %v1519
        %v1550 = vadd.f32 %v1400, %v1524
        %v1551 = vadd.f32 %v1401, %v1529
        %v1552 = vadd.f32 %v1402, %v1534
        %v1553 = vadd.f32 %v1403, %v1539
        %v1554 = vadd.f32 %v1404, %v1544
        %1555 = vst [vmem:[%s207] sm:$0xff] %v1547
        %1556 = vst [vmem:[%s207 + $0x8] sm:$0xff] %v1548
        %1557 = vst [vmem:[%s207 + $0x10] sm:$0xff] %v1549
        %1558 = vst [vmem:[%s207 + $0x18] sm:$0xff] %v1550
        %1559 = vst [vmem:[%s207 + $0x20] sm:$0xff] %v1551
        %1560 = vst [vmem:[%s207 + $0x28] sm:$0xff] %v1552
        %1561 = vst [vmem:[%s207 + $0x30] sm:$0xff] %v1553
        %1562 = vst [vmem:[%s207 + $0x38] sm:$0xff] %v1554
        %v1563 = vadd.f32 %v1547, %v1548
        %v1564 = vadd.f32 %v1563, %v1549
        %v1565 = vadd.f32 %v1564, %v1550
        %v1566 = vadd.f32 %v1565, %v1551
        %v1567 = vadd.f32 %v1566, %v1552
        %v1568 = vadd.f32 %v1567, %v1553
        %v1569 = vadd.f32 %v1568, %v1554
        %v1570 = vrot.slane %v1569, 4
        %v1571 = vadd.f32 %v1569, %v1570
        %v1572 = vrot.slane %v1571, 2
        %v1573 = vadd.f32 %v1571, %v1572
        %v1574 = vrot.slane %v1573, 1
        %v1575 = vadd.f32 %v1573, %v1574
        %1576 = vst [vmem:[%s214] sm:$0x1] %v1575
        %v1577 = vmul.f32 %v1547, %v1547
        %v1578 = vmul.f32 %v1548, %v1548
        %v1579 = vmul.f32 %v1549, %v1549
        %v1580 = vmul.f32 %v1550, %v1550
        %v1581 = vmul.f32 %v1551, %v1551
        %v1582 = vmul.f32 %v1552, %v1552
        %v1583 = vmul.f32 %v1553, %v1553
        %v1584 = vmul.f32 %v1554, %v1554
        %v1585 = vadd.f32 %v1577, %v1578
        %v1586 = vadd.f32 %v1585, %v1579
        %v1587 = vadd.f32 %v1586, %v1580
        %v1588 = vadd.f32 %v1587, %v1581
        %v1589 = vadd.f32 %v1588, %v1582
        %v1590 = vadd.f32 %v1589, %v1583
        %v1591 = vadd.f32 %v1590, %v1584
        %v1592 = vrot.slane %v1591, 4
        %v1593 = vadd.f32 %v1591, %v1592
        %v1594 = vrot.slane %v1593, 2
        %v1595 = vadd.f32 %v1593, %v1594
        %v1596 = vrot.slane %v1595, 1
        %v1597 = vadd.f32 %v1595, %v1596
        %1598 = vst [vmem:[%s214 + $0x1] sm:$0x1] %v1597
        %s1599 = sand.u32 %s80, 1
        %s1600 = scalar_lea.sflag [#allocation4], %s1599
        %s1601 = sand.u32 %s80, 1
        %s1602 = smul.addr %s1601, 64
        %s1603 = scalar_lea.vmem [#allocation7], %s1602
        %s1604 = sand.u32 %s106, 1
        %s1605 = scalar_lea.sflag [#allocation9], %s1604
        %s1606 = sand.u32 %s106, 1
        %s1607 = smul.addr %s1606, 2
        %s1608 = scalar_lea.vmem [#allocation8], %s1607
        // Predicated region
        $region37: #{bottleneck_forward.3} parent=27 // pred_check
          %p1609 = pneg %p90
        $region38: #{bottleneck_forward.3} parent=27 // pred_check_branch
          %1611 = sbr.rel (%p1609) target = $region40
        $region39: #{bottleneck_forward.3} parent=27 // pred_region
          %s1613 = ssub.s32 1024, 1024
          %1614 = vsyncadd %s1600, %s1613
          %s1615 = smul.addr %s25, 8
          %s1616 = smul.addr %s1615, 128
          %s1617 = scalar_lea.hbm %s2, %s1616
          %s1618 = sshll.u32 %s1603, 4
          %s1619 = int_to_ptr.vmem [resolvable:$true] %s1618
          %1624 = dma.vmem_to_hbm [thread:$0]  %s1619, 1024, %s1617, %s1600, 128, 128, 8
        $region40: #{bottleneck_forward.3} parent=27 // pred_fallthru
          _
        // Predicated region
        $region41: #{bottleneck_forward.3} parent=27 // pred_check
          %p1625 = pneg %p116
        $region42: #{bottleneck_forward.3} parent=27 // pred_check_branch
          %1627 = sbr.rel (%p1625) target = $region44
        $region43: #{bottleneck_forward.3} parent=27 // pred_region
          %s1629 = ssub.s32 32, 32
          %1630 = vsyncadd %s1605, %s1629
          %s1631 = smul.addr %s25, 32
          %s1632 = scalar_lea.hbm %s3, %s1631
          %s1634 = sshll.u32 %s1608, 4
          %s1635 = int_to_ptr.vmem [resolvable:$true] %s1634
          %1637 = dma.vmem_to_hbm [thread:$0]  %s1635, 32, %s1632, %s1605
        $region44: #{bottleneck_forward.3} parent=27 // pred_fallthru
          _
      $region28: #{bottleneck_forward.3} parent=5 // pred_fallthru
        _
      %p1638 = scmp.le.s32.totalorder 2, %s20
      // Predicated region
      $region45: #{bottleneck_forward.3} parent=5 // pred_check
        %p1639 = pneg %p1638
      $region46: #{bottleneck_forward.3} parent=5 // pred_check_branch
        %1641 = sbr.rel (%p1639) target = $region48
      $region47: #{bottleneck_forward.3} parent=5 // pred_region
        %s1642 = ssub.s32 %s20, 2
        // Predicated region
        $region49: #{bottleneck_forward.3} parent=47 // pred_check
          %p1643 = pneg %p96
        $region50: #{bottleneck_forward.3} parent=47 // pred_check_branch
          %1645 = sbr.rel (%p1643) target = $region52
        $region51: #{bottleneck_forward.3} parent=47 // pred_region
          %s1646 = sand.u32 %s81, 1
          %s1647 = scalar_lea.sflag [#allocation4], %s1646
          %s1648 = sand.u32 %s81, 1
          %s1649 = smul.addr %s1648, 64
          %s1650 = scalar_lea.vmem [#allocation7], %s1649
          %1651 = dma.done %s1647, 1024
        $region52: #{bottleneck_forward.3} parent=47 // pred_fallthru
          _
        // Predicated region
        $region53: #{bottleneck_forward.3} parent=47 // pred_check
          %p1652 = pneg %p122
        $region54: #{bottleneck_forward.3} parent=47 // pred_check_branch
          %1654 = sbr.rel (%p1652) target = $region56
        $region55: #{bottleneck_forward.3} parent=47 // pred_region
          %s1655 = sand.u32 %s107, 1
          %s1656 = scalar_lea.sflag [#allocation9], %s1655
          %s1657 = sand.u32 %s107, 1
          %s1658 = smul.addr %s1657, 2
          %s1659 = scalar_lea.vmem [#allocation8], %s1658
          %1660 = dma.done %s1656, 32
        $region56: #{bottleneck_forward.3} parent=47 // pred_fallthru
          _
      $region48: #{bottleneck_forward.3} parent=5 // pred_fallthru
        _
    $region6: #{bottleneck_forward.3} parent=1 // loop_footer
      %s24 = sadd.s32 1, %s20
    $region7: #{bottleneck_forward.3} parent=1 // loop_footer_branch
      %19 = sbr.rel target = $region3
    $region8: #{bottleneck_forward.3} parent=1 // loop_exit
      _
    %1661 = vsyncpa [#allocation3], 1
    %s1662 = scalar_lea.sflag [#allocation3], 1
    %1663 = vsyncpa %s1662, 1
    %1664 = vsyncpa [#allocation6], 1
    %1665 = vsyncpa [#allocation4], 1
    %s1666 = scalar_lea.sflag [#allocation4], 1
    %1667 = vsyncpa %s1666, 1
    %1668 = vsyncpa [#allocation9], 1
    %s1669 = scalar_lea.sflag [#allocation9], 1
    %1670 = vsyncpa %s1669, 1

// kernel: bottleneck_forward.4
$region0: #{bottleneck_forward.4}
  #allocation0 [shape = 'u32[]', space=smem, size = 0x4, offset = 0x4, fixed_abs, tag = 'smem constant byte address 0x4 - core index']
  #allocation1 [shape = 'u32[144,128]{1,0:T(1,128)}', space=vmem, size = 0x12000, scoped, tag = 'internal scratch']
  #allocation2 [shape = 'f32[10,10,128]{2,1,0:T(8,128)}', space=vmem, size = 0x14000, scoped, tag = 'scratch operand']
  %s0 = inlined_call_operand.hbm [shape: f32[2,8,8,128], index: 0, kind: input, shape index: {}]
  %s1 = inlined_call_operand.hbm [shape: f32[1,128], index: 1, kind: input, shape index: {}]
  %s2 = inlined_call_operand.hbm [shape: f32[1,128], index: 2, kind: input, shape index: {}]
  %s3 = inlined_call_operand.hbm [shape: f32[9,128,128], index: 3, kind: input, shape index: {}]
  %s4 = inlined_call_operand.hbm [shape: f32[2,64,128], index: 4, kind: output, shape index: {0}]
  %s5 = inlined_call_operand.hbm [shape: f32[2,2,128], index: 5, kind: output, shape index: {1}]
  %6 = xla_tuple %s4, %s5
  %s7 = sld [smem:[#allocation0]]
  $region73: #{bottleneck_forward.4} parent=0
    _
  %s9 = ssub.s32 1, %s7
  %s10 = scalar_select 0, %s9, %s7
  $region1: #{bottleneck_forward.4} parent=0
    #allocation3 [shape = 'u8[65536]{0}', space=vmem, size = 0x10000, scoped, tag = 'input window, operand 0']
    #allocation4 [shape = 's32[2]{0}', space=sflag, size = 0x8, scoped, tag = 'scoped memory for bottleneck_forward.4']
    #allocation5 [shape = 's32[2]{0}', space=sflag, size = 0x8, scoped, tag = 'scoped memory for bottleneck_forward.4']
    #allocation6 [shape = 'u8[512]{0}', space=vmem, size = 0x400, scoped, tag = 'input window, operand 1, single buffered']
    #allocation7 [shape = 's32[1]{0}', space=sflag, size = 0x4, scoped, tag = 'scoped memory for bottleneck_forward.4']
    #allocation8 [shape = 'u8[512]{0}', space=vmem, size = 0x400, scoped, tag = 'input window, operand 2, single buffered']
    #allocation9 [shape = 'u8[589824]{0}', space=vmem, size = 0x90000, scoped, tag = 'input window, operand 3, single buffered']
    #allocation10 [shape = 's32[1]{0}', space=sflag, size = 0x4, scoped, tag = 'scoped memory for bottleneck_forward.4']
    #allocation11 [shape = 'u8[65536]{0}', space=vmem, size = 0x10000, scoped, tag = 'output window, operand 0']
    #allocation12 [shape = 'u8[2048]{0}', space=vmem, size = 0x800, scoped, tag = 'output window, operand 1']
    #allocation13 [shape = 's32[2]{0}', space=sflag, size = 0x8, scoped, tag = 'scoped memory for bottleneck_forward.4']
    %11 = vsyncpa [#allocation4], 0
    %s12 = scalar_lea.sflag [#allocation4], 1
    %13 = vsyncpa %s12, 0
    %14 = vsyncpa [#allocation7], 0
    %15 = vsyncpa [#allocation10], 0
    %16 = vsyncpa [#allocation5], 0
    %s17 = scalar_lea.sflag [#allocation5], 1
    %18 = vsyncpa %s17, 0
    %19 = vsyncpa [#allocation13], 0
    %s20 = scalar_lea.sflag [#allocation13], 1
    %21 = vsyncpa %s20, 0
    loop: start=0, step=1, limit=4
    $region2: #{bottleneck_forward.4} parent=1 // loop_pre_header
      _
    $region3: #{bottleneck_forward.4} parent=1 // loop_header
      %s23 = sphi 0, %s27
      %p24 = scmp.ge.s32.totalorder %s23, 4
      %s33 = sphi 0, %s35
      %s36 = sphi 0, %s33
      %s37 = sphi 0, %s36
      %s53 = sphi 0, %s37
      %s57 = sphi 0, %s57
      %s59 = sphi 0, %s57
      %s60 = sphi 0, %s59
      %s74 = sphi 0, %s60
      %s78 = sphi 0, %s78
      %s80 = sphi 0, %s78
      %s81 = sphi 0, %s80
      %s95 = sphi 0, %s81
      %s99 = sphi 0, %s99
      %s101 = sphi 0, %s99
      %s102 = sphi 0, %s101
      %s116 = sphi 0, %s102
      %s122 = sphi 0, %s124
      %s125 = sphi 0, %s122
      %s126 = sphi 0, %s125
      %s142 = sphi 0, %s126
      %s148 = sphi 0, %s150
      %s151 = sphi 0, %s148
      %s152 = sphi 0, %s151
      %s168 = sphi 0, %s152
    $region4: #{bottleneck_forward.4} parent=1 // loop_header_branch
      %26 = sbr.rel (%p24) target = $region8
    $region5: #{bottleneck_forward.4} parent=1 // loop_body
      %s28 = ssub.s32 %s23, 1
      %s29 = ssub.s32 %s23, 2
      %s30 = sadd.s32 %s23, 1
      %s31 = ssub.s32 %s23, %s30
      %p32 = scmp.eq.s32.totalorder %s31, 0
      %s34 = sadd.s32 %s33, 1
      %s35 = scalar_select %p32, %s33, %s34
      %p38 = pneg %p32
      %p39 = scmp.eq.s32.totalorder %s23, 1
      %p40 = por %p38, %p39
      %p41 = scmp.ne.s32.totalorder %s33, %s36
      %p42 = scmp.eq.s32.totalorder %s23, 0
      %p43 = por %p41, %p42
      %p44 = scmp.ne.s32.totalorder %s33, %s36
      %p45 = scmp.eq.s32.totalorder %s28, 1
      %p46 = por %p44, %p45
      %p47 = scmp.ne.s32.totalorder %s36, %s37
      %p48 = scmp.eq.s32.totalorder %s28, 0
      %p49 = por %p47, %p48
      %p50 = scmp.ne.s32.totalorder %s36, %s37
      %p51 = scmp.eq.s32.totalorder %s29, 1
      %p52 = por %p50, %p51
      %p54 = scmp.ne.s32.totalorder %s37, %s53
      %p55 = scmp.eq.s32.totalorder %s29, 0
      %p56 = por %p54, %p55
      %s58 = sadd.s32 %s57, 1
      %p61 = scmp.eq.s32.totalorder %s23, 1
      %p62 = scmp.ne.s32.totalorder %s57, %s59
      %p63 = scmp.eq.s32.totalorder %s23, 0
      %p64 = por %p62, %p63
      %p65 = scmp.ne.s32.totalorder %s57, %s59
      %p66 = scmp.eq.s32.totalorder %s28, 1
      %p67 = por %p65, %p66
      %p68 = scmp.ne.s32.totalorder %s59, %s60
      %p69 = scmp.eq.s32.totalorder %s28, 0
      %p70 = por %p68, %p69
      %p71 = scmp.ne.s32.totalorder %s59, %s60
      %p72 = scmp.eq.s32.totalorder %s29, 1
      %p73 = por %p71, %p72
      %p75 = scmp.ne.s32.totalorder %s60, %s74
      %p76 = scmp.eq.s32.totalorder %s29, 0
      %p77 = por %p75, %p76
      %s79 = sadd.s32 %s78, 1
      %p82 = scmp.eq.s32.totalorder %s23, 1
      %p83 = scmp.ne.s32.totalorder %s78, %s80
      %p84 = scmp.eq.s32.totalorder %s23, 0
      %p85 = por %p83, %p84
      %p86 = scmp.ne.s32.totalorder %s78, %s80
      %p87 = scmp.eq.s32.totalorder %s28, 1
      %p88 = por %p86, %p87
      %p89 = scmp.ne.s32.totalorder %s80, %s81
      %p90 = scmp.eq.s32.totalorder %s28, 0
      %p91 = por %p89, %p90
      %p92 = scmp.ne.s32.totalorder %s80, %s81
      %p93 = scmp.eq.s32.totalorder %s29, 1
      %p94 = por %p92, %p93
      %p96 = scmp.ne.s32.totalorder %s81, %s95
      %p97 = scmp.eq.s32.totalorder %s29, 0
      %p98 = por %p96, %p97
      %s100 = sadd.s32 %s99, 1
      %p103 = scmp.eq.s32.totalorder %s23, 1
      %p104 = scmp.ne.s32.totalorder %s99, %s101
      %p105 = scmp.eq.s32.totalorder %s23, 0
      %p106 = por %p104, %p105
      %p107 = scmp.ne.s32.totalorder %s99, %s101
      %p108 = scmp.eq.s32.totalorder %s28, 1
      %p109 = por %p107, %p108
      %p110 = scmp.ne.s32.totalorder %s101, %s102
      %p111 = scmp.eq.s32.totalorder %s28, 0
      %p112 = por %p110, %p111
      %p113 = scmp.ne.s32.totalorder %s101, %s102
      %p114 = scmp.eq.s32.totalorder %s29, 1
      %p115 = por %p113, %p114
      %p117 = scmp.ne.s32.totalorder %s102, %s116
      %p118 = scmp.eq.s32.totalorder %s29, 0
      %p119 = por %p117, %p118
      %s120 = ssub.s32 %s23, %s30
      %p121 = scmp.eq.s32.totalorder %s120, 0
      %s123 = sadd.s32 %s122, 1
      %s124 = scalar_select %p121, %s122, %s123
      %p127 = pneg %p121
      %p128 = scmp.eq.s32.totalorder %s23, 1
      %p129 = por %p127, %p128
      %p130 = scmp.ne.s32.totalorder %s122, %s125
      %p131 = scmp.eq.s32.totalorder %s23, 0
      %p132 = por %p130, %p131
      %p133 = scmp.ne.s32.totalorder %s122, %s125
      %p134 = scmp.eq.s32.totalorder %s28, 1
      %p135 = por %p133, %p134
      %p136 = scmp.ne.s32.totalorder %s125, %s126
      %p137 = scmp.eq.s32.totalorder %s28, 0
      %p138 = por %p136, %p137
      %p139 = scmp.ne.s32.totalorder %s125, %s126
      %p140 = scmp.eq.s32.totalorder %s29, 1
      %p141 = por %p139, %p140
      %p143 = scmp.ne.s32.totalorder %s126, %s142
      %p144 = scmp.eq.s32.totalorder %s29, 0
      %p145 = por %p143, %p144
      %s146 = ssub.s32 %s23, %s30
      %p147 = scmp.eq.s32.totalorder %s146, 0
      %s149 = sadd.s32 %s148, 1
      %s150 = scalar_select %p147, %s148, %s149
      %p153 = pneg %p147
      %p154 = scmp.eq.s32.totalorder %s23, 1
      %p155 = por %p153, %p154
      %p156 = scmp.ne.s32.totalorder %s148, %s151
      %p157 = scmp.eq.s32.totalorder %s23, 0
      %p158 = por %p156, %p157
      %p159 = scmp.ne.s32.totalorder %s148, %s151
      %p160 = scmp.eq.s32.totalorder %s28, 1
      %p161 = por %p159, %p160
      %p162 = scmp.ne.s32.totalorder %s151, %s152
      %p163 = scmp.eq.s32.totalorder %s28, 0
      %p164 = por %p162, %p163
      %p165 = scmp.ne.s32.totalorder %s151, %s152
      %p166 = scmp.eq.s32.totalorder %s29, 1
      %p167 = por %p165, %p166
      %p169 = scmp.ne.s32.totalorder %s152, %s168
      %p170 = scmp.eq.s32.totalorder %s29, 0
      %p171 = por %p169, %p170
      %p172 = scmp.le.s32.totalorder 1, %s23
      %p173 = scmp.lt.s32.totalorder %s23, 3
      %p174 = pnand %p172, %p173
      %p175 = pneg %p174
      // Predicated region
      $region9: #{bottleneck_forward.4} parent=5 // pred_check
        _
      $region10: #{bottleneck_forward.4} parent=5 // pred_check_branch
        %177 = sbr.rel (%p174) target = $region12
      $region11: #{bottleneck_forward.4} parent=5 // pred_region
        %s178 = ssub.s32 %s23, 1
        // Predicated region
        $region13: #{bottleneck_forward.4} parent=11 // pred_check
          %p179 = pneg %p70
        $region14: #{bottleneck_forward.4} parent=11 // pred_check_branch
          %181 = sbr.rel (%p179) target = $region16
        $region15: #{bottleneck_forward.4} parent=11 // pred_region
          %s183 = ssub.s32 16, 16
          %184 = vsyncadd [#allocation7], %s183
          %s186 = sshll.u32 [#allocation6], 4
          %s187 = int_to_ptr.vmem [resolvable:$true] %s186
          %189 = dma.hbm_to_vmem [thread:$0]  %s1, 16, %s187, [#allocation7]
        $region16: #{bottleneck_forward.4} parent=11 // pred_fallthru
          _
        // Predicated region
        $region17: #{bottleneck_forward.4} parent=11 // pred_check
          %p190 = pneg %p91
        $region18: #{bottleneck_forward.4} parent=11 // pred_check_branch
          %192 = sbr.rel (%p190) target = $region20
        $region19: #{bottleneck_forward.4} parent=11 // pred_region
          %s194 = ssub.s32 16, 16
          %195 = vsyncadd [#allocation7], %s194
          %s197 = sshll.u32 [#allocation8], 4
          %s198 = int_to_ptr.vmem [resolvable:$true] %s197
          %200 = dma.hbm_to_vmem [thread:$0]  %s2, 16, %s198, [#allocation7]
        $region20: #{bottleneck_forward.4} parent=11 // pred_fallthru
          _
        // Predicated region
        $region21: #{bottleneck_forward.4} parent=11 // pred_check
          %p201 = pneg %p112
        $region22: #{bottleneck_forward.4} parent=11 // pred_check_branch
          %203 = sbr.rel (%p201) target = $region24
        $region23: #{bottleneck_forward.4} parent=11 // pred_region
          %s205 = ssub.s32 18432, 18432
          %206 = vsyncadd [#allocation10], %s205
          %s207 = sshll.u32 [#allocation9], 4
          %s208 = int_to_ptr.vmem [resolvable:$true] %s207
          %213 = dma.hbm_to_vmem [thread:$0]  %s3, 18432, %s208, [#allocation10], 128, 128, 8
        $region24: #{bottleneck_forward.4} parent=11 // pred_fallthru
          _
      $region12: #{bottleneck_forward.4} parent=5 // pred_fallthru
        _
      %p214 = scmp.lt.s32.totalorder %s23, 2
      // Predicated region
      $region25: #{bottleneck_forward.4} parent=5 // pred_check
        %p215 = pneg %p214
      $region26: #{bottleneck_forward.4} parent=5 // pred_check_branch
        %217 = sbr.rel (%p215) target = $region28
      $region27: #{bottleneck_forward.4} parent=5 // pred_region
        // Predicated region
        $region29: #{bottleneck_forward.4} parent=27 // pred_check
          %p218 = pneg %p43
        $region30: #{bottleneck_forward.4} parent=27 // pred_check_branch
          %220 = sbr.rel (%p218) target = $region32
        $region31: #{bottleneck_forward.4} parent=27 // pred_region
          %s221 = sand.u32 %s33, 1
          %s222 = scalar_lea.sflag [#allocation4], %s221
          %s223 = sand.u32 %s33, 1
          %s224 = smul.addr %s223, 64
          %s225 = scalar_lea.vmem [#allocation3], %s224
          %s227 = ssub.s32 1024, 1024
          %228 = vsyncadd %s222, %s227
          %s229 = smul.addr %s23, 8
          %s230 = smul.addr %s229, 128
          %s231 = scalar_lea.hbm %s0, %s230
          %s232 = sshll.u32 %s225, 4
          %s233 = int_to_ptr.vmem [resolvable:$true] %s232
          %238 = dma.hbm_to_vmem [thread:$0]  %s231, 1024, %s233, %s222, 128, 128, 8
        $region32: #{bottleneck_forward.4} parent=27 // pred_fallthru
          _
      $region28: #{bottleneck_forward.4} parent=5 // pred_fallthru
        _
      %p239 = scmp.le.s32.totalorder 1, %s23
      %p240 = scmp.lt.s32.totalorder %s23, 3
      %p241 = pnand %p239, %p240
      %p242 = pneg %p241
      // Predicated region
      $region33: #{bottleneck_forward.4} parent=5 // pred_check
        _
      $region34: #{bottleneck_forward.4} parent=5 // pred_check_branch
        %244 = sbr.rel (%p241) target = $region36
      $region35: #{bottleneck_forward.4} parent=5 // pred_region
        %s245 = ssub.s32 %s23, 1
        %s246 = sand.u32 %s36, 1
        %s247 = scalar_lea.sflag [#allocation4], %s246
        %s248 = sand.u32 %s36, 1
        %s249 = smul.addr %s248, 64
        %s250 = scalar_lea.vmem [#allocation3], %s249
        // Predicated region
        $region37: #{bottleneck_forward.4} parent=35 // pred_check
          %p251 = pneg %p49
        $region38: #{bottleneck_forward.4} parent=35 // pred_check_branch
          %253 = sbr.rel (%p251) target = $region40
        $region39: #{bottleneck_forward.4} parent=35 // pred_region
          %254 = dma.done %s247, 1024
        $region40: #{bottleneck_forward.4} parent=35 // pred_fallthru
          _
        // Predicated region
        $region41: #{bottleneck_forward.4} parent=35 // pred_check
          %p255 = pneg %p70
        $region42: #{bottleneck_forward.4} parent=35 // pred_check_branch
          %257 = sbr.rel (%p255) target = $region44
        $region43: #{bottleneck_forward.4} parent=35 // pred_region
          %258 = dma.done [#allocation7], 16
        $region44: #{bottleneck_forward.4} parent=35 // pred_fallthru
          _
        // Predicated region
        $region45: #{bottleneck_forward.4} parent=35 // pred_check
          %p259 = pneg %p91
        $region46: #{bottleneck_forward.4} parent=35 // pred_check_branch
          %261 = sbr.rel (%p259) target = $region48
        $region47: #{bottleneck_forward.4} parent=35 // pred_region
          %262 = dma.done [#allocation7], 16
        $region48: #{bottleneck_forward.4} parent=35 // pred_fallthru
          _
        // Predicated region
        $region49: #{bottleneck_forward.4} parent=35 // pred_check
          %p263 = pneg %p112
        $region50: #{bottleneck_forward.4} parent=35 // pred_check_branch
          %265 = sbr.rel (%p263) target = $region52
        $region51: #{bottleneck_forward.4} parent=35 // pred_region
          %266 = dma.done [#allocation10], 18432
        $region52: #{bottleneck_forward.4} parent=35 // pred_fallthru
          _
        %s267 = sand.u32 %s36, 1
        %s268 = scalar_lea.sflag [#allocation4], %s267
        %s269 = sand.u32 %s36, 1
        %s270 = smul.addr %s269, 64
        %s271 = scalar_lea.vmem [#allocation3], %s270
        %p272 = pneg %p49
        %p273 = pneg %p46
        %p274 = pneg %p70
        %p275 = pneg %p67
        %p276 = pneg %p91
        %p277 = pneg %p88
        %p278 = pneg %p112
        %p279 = pneg %p109
        %p280 = pneg %p138
        %p281 = pneg %p135
        %s282 = sand.u32 %s125, 1
        %s283 = scalar_lea.sflag [#allocation5], %s282
        %s284 = sand.u32 %s125, 1
        %s285 = smul.addr %s284, 64
        %s286 = scalar_lea.vmem [#allocation11], %s285
        %p287 = pneg %p164
        %p288 = pneg %p161
        %s289 = sand.u32 %s151, 1
        %s290 = scalar_lea.sflag [#allocation13], %s289
        %s291 = sand.u32 %s151, 1
        %s292 = smul.addr %s291, 2
        %s293 = scalar_lea.vmem [#allocation12], %s292
        %v294 = vld [vmem:[%s250] sm:$0xff]
        %v295 = vld [vmem:[%s250 + $0x8] sm:$0xff]
        %v296 = vld [vmem:[%s250 + $0x10] sm:$0xff]
        %v297 = vld [vmem:[%s250 + $0x18] sm:$0xff]
        %v298 = vld [vmem:[%s250 + $0x20] sm:$0xff]
        %v299 = vld [vmem:[%s250 + $0x28] sm:$0xff]
        %v300 = vld [vmem:[%s250 + $0x30] sm:$0xff]
        %v301 = vld [vmem:[%s250 + $0x38] sm:$0xff]
        %v302 = vld [vmem:[#allocation6] sm:$0x1]
        %v304 = vlaneseq
        %v305 = vshrl.u32 %v304, 7
        %v306 = vsub.s32 0, %v305
        %v307 = vrot.slane %v302, %v306
        %v309 = vmul.f32 %v294, %v307
        %v310 = vmul.f32 %v295, %v307
        %v311 = vmul.f32 %v296, %v307
        %v312 = vmul.f32 %v297, %v307
        %v313 = vmul.f32 %v298, %v307
        %v314 = vmul.f32 %v299, %v307
        %v315 = vmul.f32 %v300, %v307
        %v316 = vmul.f32 %v301, %v307
        %v317 = vld [vmem:[#allocation8] sm:$0x1]
        %v319 = vlaneseq
        %v320 = vshrl.u32 %v319, 7
        %v321 = vsub.s32 0, %v320
        %v322 = vrot.slane %v317, %v321
        %v324 = vadd.f32 %v309, %v322
        %v325 = vadd.f32 %v310, %v322
        %v326 = vadd.f32 %v311, %v322
        %v327 = vadd.f32 %v312, %v322
        %v328 = vadd.f32 %v313, %v322
        %v329 = vadd.f32 %v314, %v322
        %v330 = vadd.f32 %v315, %v322
        %v331 = vadd.f32 %v316, %v322
        %v332 = vmax.f32 %v324, 0.0
        %v333 = vmax.f32 %v325, 0.0
        %v334 = vmax.f32 %v326, 0.0
        %v335 = vmax.f32 %v327, 0.0
        %v336 = vmax.f32 %v328, 0.0
        %v337 = vmax.f32 %v329, 0.0
        %v338 = vmax.f32 %v330, 0.0
        %v339 = vmax.f32 %v331, 0.0
        %340 = vst [vmem:[#allocation2] sm:$0xff] 0.0
        %341 = vst [vmem:[#allocation2 + $0x8] sm:$0x3] 0.0
        %s342 = scalar_lea.vmem [#allocation2], 144
        %343 = vst [vmem:[%s342] sm:$0xff] 0.0
        %344 = vst [vmem:[%s342 + $0x8] sm:$0x3] 0.0
        %345 = vst [vmem:[#allocation2] sm:$0x1] 0.0
        %346 = vst [vmem:[#allocation2 + $0x10] sm:$0x1] 0.0
        %347 = vst [vmem:[#allocation2 + $0x20] sm:$0x1] 0.0
        %348 = vst [vmem:[#allocation2 + $0x30] sm:$0x1] 0.0
        %349 = vst [vmem:[#allocation2 + $0x40] sm:$0x1] 0.0
        %350 = vst [vmem:[#allocation2 + $0x50] sm:$0x1] 0.0
        %351 = vst [vmem:[#allocation2 + $0x60] sm:$0x1] 0.0
        %352 = vst [vmem:[#allocation2 + $0x70] sm:$0x1] 0.0
        %353 = vst [vmem:[#allocation2 + $0x80] sm:$0x1] 0.0
        %354 = vst [vmem:[#allocation2 + $0x90] sm:$0x1] 0.0
        %355 = vst [vmem:[#allocation2 + $0x9] sm:$0x1] 0.0
        %356 = vst [vmem:[#allocation2 + $0x19] sm:$0x1] 0.0
        %357 = vst [vmem:[#allocation2 + $0x29] sm:$0x1] 0.0
        %358 = vst [vmem:[#allocation2 + $0x39] sm:$0x1] 0.0
        %359 = vst [vmem:[#allocation2 + $0x49] sm:$0x1] 0.0
        %360 = vst [vmem:[#allocation2 + $0x59] sm:$0x1] 0.0
        %361 = vst [vmem:[#allocation2 + $0x69] sm:$0x1] 0.0
        %362 = vst [vmem:[#allocation2 + $0x79] sm:$0x1] 0.0
        %363 = vst [vmem:[#allocation2 + $0x89] sm:$0x1] 0.0
        %364 = vst [vmem:[#allocation2 + $0x99] sm:$0x1] 0.0
        %s365 = scalar_lea.vmem [#allocation2], 16
        %366 = vst [vmem:[%s365 + $0x1] sm:$0xff] %v332
        %367 = vst [vmem:[%s365 + $0x11] sm:$0xff] %v333
        %368 = vst [vmem:[%s365 + $0x21] sm:$0xff] %v334
        %369 = vst [vmem:[%s365 + $0x31] sm:$0xff] %v335
        %370 = vst [vmem:[%s365 + $0x41] sm:$0xff] %v336
        %371 = vst [vmem:[%s365 + $0x51] sm:$0xff] %v337
        %372 = vst [vmem:[%s365 + $0x61] sm:$0xff] %v338
        %373 = vst [vmem:[%s365 + $0x71] sm:$0xff] %v339
        %v374 = vld [vmem:[#allocation2] sm:$0xff]
        %v375 = vld [vmem:[#allocation2 + $0x10] sm:$0xff]
        %v376 = vld [vmem:[#allocation2 + $0x20] sm:$0xff]
        %v377 = vld [vmem:[#allocation2 + $0x30] sm:$0xff]
        %v378 = vld [vmem:[#allocation2 + $0x40] sm:$0xff]
        %v379 = vld [vmem:[#allocation2 + $0x50] sm:$0xff]
        %v380 = vld [vmem:[#allocation2 + $0x60] sm:$0xff]
        %v381 = vld [vmem:[#allocation2 + $0x70] sm:$0xff]
        %v382 = vld [vmem:[#allocation9] sm:$0xff]
        %v383 = vld [vmem:[#allocation9 + $0x8] sm:$0xff]
        %v384 = vld [vmem:[#allocation9 + $0x10] sm:$0xff]
        %v385 = vld [vmem:[#allocation9 + $0x18] sm:$0xff]
        %v386 = vld [vmem:[#allocation9 + $0x20] sm:$0xff]
        %v387 = vld [vmem:[#allocation9 + $0x28] sm:$0xff]
        %v388 = vld [vmem:[#allocation9 + $0x30] sm:$0xff]
        %v389 = vld [vmem:[#allocation9 + $0x38] sm:$0xff]
        %v390 = vld [vmem:[#allocation9 + $0x40] sm:$0xff]
        %v391 = vld [vmem:[#allocation9 + $0x48] sm:$0xff]
        %v392 = vld [vmem:[#allocation9 + $0x50] sm:$0xff]
        %v393 = vld [vmem:[#allocation9 + $0x58] sm:$0xff]
        %v394 = vld [vmem:[#allocation9 + $0x60] sm:$0xff]
        %v395 = vld [vmem:[#allocation9 + $0x68] sm:$0xff]
        %v396 = vld [vmem:[#allocation9 + $0x70] sm:$0xff]
        %v397 = vld [vmem:[#allocation9 + $0x78] sm:$0xff]
        %v398 = vld [vmem:[#allocation2 + $0x1] sm:$0xff]
        %v399 = vld [vmem:[#allocation2 + $0x11] sm:$0xff]
        %v400 = vld [vmem:[#allocation2 + $0x21] sm:$0xff]
        %v401 = vld [vmem:[#allocation2 + $0x31] sm:$0xff]
        %v402 = vld [vmem:[#allocation2 + $0x41] sm:$0xff]
        %v403 = vld [vmem:[#allocation2 + $0x51] sm:$0xff]
        %v404 = vld [vmem:[#allocation2 + $0x61] sm:$0xff]
        %v405 = vld [vmem:[#allocation2 + $0x71] sm:$0xff]
        %s406 = scalar_lea.vmem [#allocation9], 128
        %v407 = vld [vmem:[%s406] sm:$0xff]
        %v408 = vld [vmem:[%s406 + $0x8] sm:$0xff]
        %v409 = vld [vmem:[%s406 + $0x10] sm:$0xff]
        %v410 = vld [vmem:[%s406 + $0x18] sm:$0xff]
        %v411 = vld [vmem:[%s406 + $0x20] sm:$0xff]
        %v412 = vld [vmem:[%s406 + $0x28] sm:$0xff]
        %v413 = vld [vmem:[%s406 + $0x30] sm:$0xff]
        %v414 = vld [vmem:[%s406 + $0x38] sm:$0xff]
        %v415 = vld [vmem:[%s406 + $0x40] sm:$0xff]
        %v416 = vld [vmem:[%s406 + $0x48] sm:$0xff]
        %v417 = vld [vmem:[%s406 + $0x50] sm:$0xff]
        %v418 = vld [vmem:[%s406 + $0x58] sm:$0xff]
        %v419 = vld [vmem:[%s406 + $0x60] sm:$0xff]
        %v420 = vld [vmem:[%s406 + $0x68] sm:$0xff]
        %v421 = vld [vmem:[%s406 + $0x70] sm:$0xff]
        %v422 = vld [vmem:[%s406 + $0x78] sm:$0xff]
        %423 = vmatprep.subr.mxu0 0.0
        %424 = vmatpush1.msra.mxu0 %v407
        %425 = vmatprep.subr.mxu0 0.0
        %426 = vmatpush1.msra.mxu0 %v408
        %427 = vmatprep.subr.mxu0 0.0
        %428 = vmatpush1.msra.mxu0 %v409
        %429 = vmatprep.subr.mxu0 0.0
        %430 = vmatpush1.msra.mxu0 %v410
        %431 = vmatprep.subr.mxu0 0.0
        %432 = vmatpush1.msra.mxu0 %v411
        %433 = vmatprep.subr.mxu0 0.0
        %434 = vmatpush1.msra.mxu0 %v412
        %435 = vmatprep.subr.mxu0 0.0
        %436 = vmatpush1.msra.mxu0 %v413
        %437 = vmatprep.subr.mxu0 0.0
        %438 = vmatpush1.msra.mxu0 %v414
        %439 = vmatprep.subr.mxu0 0.0
        %440 = vmatpush1.msra.mxu0 %v415
        %441 = vmatprep.subr.mxu0 0.0
        %442 = vmatpush1.msra.mxu0 %v416
        %443 = vmatprep.subr.mxu0 0.0
        %444 = vmatpush1.msra.mxu0 %v417
        %445 = vmatprep.subr.mxu0 0.0
        %446 = vmatpush1.msra.mxu0 %v418
        %447 = vmatprep.subr.mxu0 0.0
        %448 = vmatpush1.msra.mxu0 %v419
        %449 = vmatprep.subr.mxu0 0.0
        %450 = vmatpush1.msra.mxu0 %v420
        %451 = vmatprep.subr.mxu0 0.0
        %452 = vmatpush1.msra.mxu0 %v421
        %453 = vmatprep.subr.mxu0 0.0
        %454 = vmatpush1.msra.mxu0 %v422
        %455 = vmatprep.subr.mxu0 0.0
        %456 = vmatpush1.msra.mxu0 0.0
        %457 = vmatprep.subr.mxu0 0.0
        %458 = vmatpush1.msra.mxu0 0.0
        %459 = vmatprep.subr.mxu0 0.0
        %460 = vmatpush1.msra.mxu0 0.0
        %461 = vmatprep.subr.mxu0 0.0
        %462 = vmatpush1.msra.mxu0 0.0
        %463 = vmatprep.subr.mxu0 0.0
        %464 = vmatpush1.msra.mxu0 0.0
        %465 = vmatprep.subr.mxu0 0.0
        %466 = vmatpush1.msra.mxu0 0.0
        %467 = vmatprep.subr.mxu0 0.0
        %468 = vmatpush1.msra.mxu0 0.0
        %469 = vmatprep.subr.mxu0 0.0
        %470 = vmatpush1.msra.mxu0 0.0
        %471 = vmatprep.subr.mxu0 0.0
        %472 = vmatpush1.msra.mxu0 0.0
        %473 = vmatprep.subr.mxu0 0.0
        %474 = vmatpush1.msra.mxu0 0.0
        %475 = vmatprep.subr.mxu0 0.0
        %476 = vmatpush1.msra.mxu0 0.0
        %477 = vmatprep.subr.mxu0 0.0
        %478 = vmatpush1.msra.mxu0 0.0
        %479 = vmatprep.subr.mxu0 0.0
        %480 = vmatpush1.msra.mxu0 0.0
        %481 = vmatprep.subr.mxu0 0.0
        %482 = vmatpush1.msra.mxu0 0.0
        %483 = vmatprep.subr.mxu0 0.0
        %484 = vmatpush1.msra.mxu0 0.0
        %485 = vmatprep.subr.mxu0 0.0
        %486 = vmatpush1.msra.mxu0 0.0
        %487 = vmatprep.mubr.f32.mxu0 0.0
        %488 = vmatmul.mubr.f32.gmra.mrb[0].mxu0 %v398
        %v489 = vpop.f32.mrb[0].mxu0
        %v490 = vadd.f32 0.0, %v489
        %v491 = vpop.f32.mrb[0].mxu0
        %492 = vmatprep.mubr.f32.mxu0 0.0
        %493 = vmatmul.mubr.f32.gmra.mrb[0].mxu0 %v399
        %v494 = vpop.f32.mrb[0].mxu0
        %v495 = vadd.f32 0.0, %v494
        %v496 = vpop.f32.mrb[0].mxu0
        %497 = vmatprep.mubr.f32.mxu0 0.0
        %498 = vmatmul.mubr.f32.gmra.mrb[0].mxu0 %v400
        %v499 = vpop.f32.mrb[0].mxu0
        %v500 = vadd.f32 0.0, %v499
        %v501 = vpop.f32.mrb[0].mxu0
        %502 = vmatprep.mubr.f32.mxu0 0.0
        %503 = vmatmul.mubr.f32.gmra.mrb[0].mxu0 %v401
        %v504 = vpop.f32.mrb[0].mxu0
        %v505 = vadd.f32 0.0, %v504
        %v506 = vpop.f32.mrb[0].mxu0
        %507 = vmatprep.mubr.f32.mxu0 0.0
        %508 = vmatmul.mubr.f32.gmra.mrb[0].mxu0 %v402
        %v509 = vpop.f32.mrb[0].mxu0
        %v510 = vadd.f32 0.0, %v509
        %v511 = vpop.f32.mrb[0].mxu0
        %512 = vmatprep.mubr.f32.mxu0 0.0
        %513 = vmatmul.mubr.f32.gmra.mrb[0].mxu0 %v403
        %v514 = vpop.f32.mrb[0].mxu0
        %v515 = vadd.f32 0.0, %v514
        %v516 = vpop.f32.mrb[0].mxu0
        %517 = vmatprep.mubr.f32.mxu0 0.0
        %518 = vmatmul.mubr.f32.gmra.mrb[0].mxu0 %v404
        %v519 = vpop.f32.mrb[0].mxu0
        %v520 = vadd.f32 0.0, %v519
        %v521 = vpop.f32.mrb[0].mxu0
        %522 = vmatprep.mubr.f32.mxu0 0.0
        %523 = vmatmul.mubr.f32.gmra.mrb[0].mxu0 %v405
        %v524 = vpop.f32.mrb[0].mxu0
        %v525 = vadd.f32 0.0, %v524
        %v526 = vpop.f32.mrb[0].mxu0
        %527 = vdwg.mxu0
        %528 = vmatprep.subr.mxu0 0.0
        %529 = vmatpush1.msra.mxu0 %v382
        %530 = vmatprep.subr.mxu0 0.0
        %531 = vmatpush1.msra.mxu0 %v383
        %532 = vmatprep.subr.mxu0 0.0
        %533 = vmatpush1.msra.mxu0 %v384
        %534 = vmatprep.subr.mxu0 0.0
        %535 = vmatpush1.msra.mxu0 %v385
        %536 = vmatprep.subr.mxu0 0.0
        %537 = vmatpush1.msra.mxu0 %v386
        %538 = vmatprep.subr.mxu0 0.0
        %539 = vmatpush1.msra.mxu0 %v387
        %540 = vmatprep.subr.mxu0 0.0
        %541 = vmatpush1.msra.mxu0 %v388
        %542 = vmatprep.subr.mxu0 0.0
        %543 = vmatpush1.msra.mxu0 %v389
        %544 = vmatprep.subr.mxu0 0.0
        %545 = vmatpush1.msra.mxu0 %v390
        %546 = vmatprep.subr.mxu0 0.0
        %547 = vmatpush1.msra.mxu0 %v391
        %548 = vmatprep.subr.mxu0 0.0
        %549 = vmatpush1.msra.mxu0 %v392
        %550 = vmatprep.subr.mxu0 0.0
        %551 = vmatpush1.msra.mxu0 %v393
        %552 = vmatprep.subr.mxu0 0.0
        %553 = vmatpush1.msra.mxu0 %v394
        %554 = vmatprep.subr.mxu0 0.0
        %555 = vmatpush1.msra.mxu0 %v395
        %556 = vmatprep.subr.mxu0 0.0
        %557 = vmatpush1.msra.mxu0 %v396
        %558 = vmatprep.subr.mxu0 0.0
        %559 = vmatpush1.msra.mxu0 %v397
        %560 = vmatprep.subr.mxu0 0.0
        %561 = vmatpush1.msra.mxu0 0.0
        %562 = vmatprep.subr.mxu0 0.0
        %563 = vmatpush1.msra.mxu0 0.0
        %564 = vmatprep.subr.mxu0 0.0
        %565 = vmatpush1.msra.mxu0 0.0
        %566 = vmatprep.subr.mxu0 0.0
        %567 = vmatpush1.msra.mxu0 0.0
        %568 = vmatprep.subr.mxu0 0.0
        %569 = vmatpush1.msra.mxu0 0.0
        %570 = vmatprep.subr.mxu0 0.0
        %571 = vmatpush1.msra.mxu0 0.0
        %572 = vmatprep.subr.mxu0 0.0
        %573 = vmatpush1.msra.mxu0 0.0
        %574 = vmatprep.subr.mxu0 0.0
        %575 = vmatpush1.msra.mxu0 0.0
        %576 = vmatprep.subr.mxu0 0.0
        %577 = vmatpush1.msra.mxu0 0.0
        %578 = vmatprep.subr.mxu0 0.0
        %579 = vmatpush1.msra.mxu0 0.0
        %580 = vmatprep.subr.mxu0 0.0
        %581 = vmatpush1.msra.mxu0 0.0
        %582 = vmatprep.subr.mxu0 0.0
        %583 = vmatpush1.msra.mxu0 0.0
        %584 = vmatprep.subr.mxu0 0.0
        %585 = vmatpush1.msra.mxu0 0.0
        %586 = vmatprep.subr.mxu0 0.0
        %587 = vmatpush1.msra.mxu0 0.0
        %588 = vmatprep.subr.mxu0 0.0
        %589 = vmatpush1.msra.mxu0 0.0
        %590 = vmatprep.subr.mxu0 0.0
        %591 = vmatpush1.msra.mxu0 0.0
        %592 = vmatprep.mubr.f32.mxu0 0.0
        %593 = vmatmul.mubr.f32.gmra.mrb[0].mxu0 %v374
        %v594 = vpop.f32.mrb[0].mxu0
        %v595 = vadd.f32 %v490, %v594
        %v596 = vpop.f32.mrb[0].mxu0
        %597 = vmatprep.mubr.f32.mxu0 0.0
        %598 = vmatmul.mubr.f32.gmra.mrb[0].mxu0 %v375
        %v599 = vpop.f32.mrb[0].mxu0
        %v600 = vadd.f32 %v495, %v599
        %v601 = vpop.f32.mrb[0].mxu0
        %602 = vmatprep.mubr.f32.mxu0 0.0
        %603 = vmatmul.mubr.f32.gmra.mrb[0].mxu0 %v376
        %v604 = vpop.f32.mrb[0].mxu0
        %v605 = vadd.f32 %v500, %v604
        %v606 = vpop.f32.mrb[0].mxu0
        %607 = vmatprep.mubr.f32.mxu0 0.0
        %608 = vmatmul.mubr.f32.gmra.mrb[0].mxu0 %v377
        %v609 = vpop.f32.mrb[0].mxu0
        %v610 = vadd.f32 %v505, %v609
        %v611 = vpop.f32.mrb[0].mxu0
        %612 = vmatprep.mubr.f32.mxu0 0.0
        %613 = vmatmul.mubr.f32.gmra.mrb[0].mxu0 %v378
        %v614 = vpop.f32.mrb[0].mxu0
        %v615 = vadd.f32 %v510, %v614
        %v616 = vpop.f32.mrb[0].mxu0
        %617 = vmatprep.mubr.f32.mxu0 0.0
        %618 = vmatmul.mubr.f32.gmra.mrb[0].mxu0 %v379
        %v619 = vpop.f32.mrb[0].mxu0
        %v620 = vadd.f32 %v515, %v619
        %v621 = vpop.f32.mrb[0].mxu0
        %622 = vmatprep.mubr.f32.mxu0 0.0
        %623 = vmatmul.mubr.f32.gmra.mrb[0].mxu0 %v380
        %v624 = vpop.f32.mrb[0].mxu0
        %v625 = vadd.f32 %v520, %v624
        %v626 = vpop.f32.mrb[0].mxu0
        %627 = vmatprep.mubr.f32.mxu0 0.0
        %628 = vmatmul.mubr.f32.gmra.mrb[0].mxu0 %v381
        %v629 = vpop.f32.mrb[0].mxu0
        %v630 = vadd.f32 %v525, %v629
        %v631 = vpop.f32.mrb[0].mxu0
        %632 = vdwg.mxu0
        %v633 = vld [vmem:[#allocation2 + $0x2] sm:$0xff]
        %v634 = vld [vmem:[#allocation2 + $0x12] sm:$0xff]
        %v635 = vld [vmem:[#allocation2 + $0x22] sm:$0xff]
        %v636 = vld [vmem:[#allocation2 + $0x32] sm:$0xff]
        %v637 = vld [vmem:[#allocation2 + $0x42] sm:$0xff]
        %v638 = vld [vmem:[#allocation2 + $0x52] sm:$0xff]
        %v639 = vld [vmem:[#allocation2 + $0x62] sm:$0xff]
        %v640 = vld [vmem:[#allocation2 + $0x72] sm:$0xff]
        %s641 = scalar_lea.vmem [#allocation9], 256
        %v642 = vld [vmem:[%s641] sm:$0xff]
        %v643 = vld [vmem:[%s641 + $0x8] sm:$0xff]
        %v644 = vld [vmem:[%s641 + $0x10] sm:$0xff]
        %v645 = vld [vmem:[%s641 + $0x18] sm:$0xff]
        %v646 = vld [vmem:[%s641 + $0x20] sm:$0xff]
        %v647 = vld [vmem:[%s641 + $0x28] sm:$0xff]
        %v648 = vld [vmem:[%s641 + $0x30] sm:$0xff]
        %v649 = vld [vmem:[%s641 + $0x38] sm:$0xff]
        %v650 = vld [vmem:[%s641 + $0x40] sm:$0xff]
        %v651 = vld [vmem:[%s641 + $0x48] sm:$0xff]
        %v652 = vld [vmem:[%s641 + $0x50] sm:$0xff]
        %v653 = vld [vmem:[%s641 + $0x58] sm:$0xff]
        %v654 = vld [vmem:[%s641 + $0x60] sm:$0xff]
        %v655 = vld [vmem:[%s641 + $0x68] sm:$0xff]
        %v656 = vld [vmem:[%s641 + $0x70] sm:$0xff]
        %v657 = vld [vmem:[%s641 + $0x78] sm:$0xff]
        %658 = vmatprep.subr.mxu0 0.0
        %659 = vmatpush1.msra.mxu0 %v642
        %660 = vmatprep.subr.mxu0 0.0
        %661 = vmatpush1.msra.mxu0 %v643
        %662 = vmatprep.subr.mxu0 0.0
        %663 = vmatpush1.msra.mxu0 %v644
        %664 = vmatprep.subr.mxu0 0.0
        %665 = vmatpush1.msra.mxu0 %v645
        %666 = vmatprep.subr.mxu0 0.0
        %667 = vmatpush1.msra.mxu0 %v646
        %668 = vmatprep.subr.mxu0 0.0
        %669 = vmatpush1.msra.mxu0 %v647
        %670 = vmatprep.subr.mxu0 0.0
        %671 = vmatpush1.msra.mxu0 %v648
        %672 = vmatprep.subr.mxu0 0.0
        %673 = vmatpush1.msra.mxu0 %v649
        %674 = vmatprep.subr.mxu0 0.0
        %675 = vmatpush1.msra.mxu0 %v650
        %676 = vmatprep.subr.mxu0 0.0
        %677 = vmatpush1.msra.mxu0 %v651
        %678 = vmatprep.subr.mxu0 0.0
        %679 = vmatpush1.msra.mxu0 %v652
        %680 = vmatprep.subr.mxu0 0.0
        %681 = vmatpush1.msra.mxu0 %v653
        %682 = vmatprep.subr.mxu0 0.0
        %683 = vmatpush1.msra.mxu0 %v654
        %684 = vmatprep.subr.mxu0 0.0
        %685 = vmatpush1.msra.mxu0 %v655
        %686 = vmatprep.subr.mxu0 0.0
        %687 = vmatpush1.msra.mxu0 %v656
        %688 = vmatprep.subr.mxu0 0.0
        %689 = vmatpush1.msra.mxu0 %v657
        %690 = vmatprep.subr.mxu0 0.0
        %691 = vmatpush1.msra.mxu0 0.0
        %692 = vmatprep.subr.mxu0 0.0
        %693 = vmatpush1.msra.mxu0 0.0
        %694 = vmatprep.subr.mxu0 0.0
        %695 = vmatpush1.msra.mxu0 0.0
        %696 = vmatprep.subr.mxu0 0.0
        %697 = vmatpush1.msra.mxu0 0.0
        %698 = vmatprep.subr.mxu0 0.0
        %699 = vmatpush1.msra.mxu0 0.0
        %700 = vmatprep.subr.mxu0 0.0
        %701 = vmatpush1.msra.mxu0 0.0
        %702 = vmatprep.subr.mxu0 0.0
        %703 = vmatpush1.msra.mxu0 0.0
        %704 = vmatprep.subr.mxu0 0.0
        %705 = vmatpush1.msra.mxu0 0.0
        %706 = vmatprep.subr.mxu0 0.0
        %707 = vmatpush1.msra.mxu0 0.0
        %708 = vmatprep.subr.mxu0 0.0
        %709 = vmatpush1.msra.mxu0 0.0
        %710 = vmatprep.subr.mxu0 0.0
        %711 = vmatpush1.msra.mxu0 0.0
        %712 = vmatprep.subr.mxu0 0.0
        %713 = vmatpush1.msra.mxu0 0.0
        %714 = vmatprep.subr.mxu0 0.0
        %715 = vmatpush1.msra.mxu0 0.0
        %716 = vmatprep.subr.mxu0 0.0
        %717 = vmatpush1.msra.mxu0 0.0
        %718 = vmatprep.subr.mxu0 0.0
        %719 = vmatpush1.msra.mxu0 0.0
        %720 = vmatprep.subr.mxu0 0.0
        %721 = vmatpush1.msra.mxu0 0.0
        %722 = vmatprep.mubr.f32.mxu0 0.0
        %723 = vmatmul.mubr.f32.gmra.mrb[0].mxu0 %v633
        %v724 = vpop.f32.mrb[0].mxu0
        %v725 = vadd.f32 0.0, %v724
        %v726 = vpop.f32.mrb[0].mxu0
        %727 = vmatprep.mubr.f32.mxu0 0.0
        %728 = vmatmul.mubr.f32.gmra.mrb[0].mxu0 %v634
        %v729 = vpop.f32.mrb[0].mxu0
        %v730 = vadd.f32 0.0, %v729
        %v731 = vpop.f32.mrb[0].mxu0
        %732 = vmatprep.mubr.f32.mxu0 0.0
        %733 = vmatmul.mubr.f32.gmra.mrb[0].mxu0 %v635
        %v734 = vpop.f32.mrb[0].mxu0
        %v735 = vadd.f32 0.0, %v734
        %v736 = vpop.f32.mrb[0].mxu0
        %737 = vmatprep.mubr.f32.mxu0 0.0
        %738 = vmatmul.mubr.f32.gmra.mrb[0].mxu0 %v636
        %v739 = vpop.f32.mrb[0].mxu0
        %v740 = vadd.f32 0.0, %v739
        %v741 = vpop.f32.mrb[0].mxu0
        %742 = vmatprep.mubr.f32.mxu0 0.0
        %743 = vmatmul.mubr.f32.gmra.mrb[0].mxu0 %v637
        %v744 = vpop.f32.mrb[0].mxu0
        %v745 = vadd.f32 0.0, %v744
        %v746 = vpop.f32.mrb[0].mxu0
        %747 = vmatprep.mubr.f32.mxu0 0.0
        %748 = vmatmul.mubr.f32.gmra.mrb[0].mxu0 %v638
        %v749 = vpop.f32.mrb[0].mxu0
        %v750 = vadd.f32 0.0, %v749
        %v751 = vpop.f32.mrb[0].mxu0
        %752 = vmatprep.mubr.f32.mxu0 0.0
        %753 = vmatmul.mubr.f32.gmra.mrb[0].mxu0 %v639
        %v754 = vpop.f32.mrb[0].mxu0
        %v755 = vadd.f32 0.0, %v754
        %v756 = vpop.f32.mrb[0].mxu0
        %757 = vmatprep.mubr.f32.mxu0 0.0
        %758 = vmatmul.mubr.f32.gmra.mrb[0].mxu0 %v640
        %v759 = vpop.f32.mrb[0].mxu0
        %v760 = vadd.f32 0.0, %v759
        %v761 = vpop.f32.mrb[0].mxu0
        %762 = vdwg.mxu0
        %v763 = vadd.f32 %v595, %v725
        %v764 = vadd.f32 %v600, %v730
        %v765 = vadd.f32 %v605, %v735
        %v766 = vadd.f32 %v610, %v740
        %v767 = vadd.f32 %v615, %v745
        %v768 = vadd.f32 %v620, %v750
        %v769 = vadd.f32 %v625, %v755
        %v770 = vadd.f32 %v630, %v760
        %v771 = vld [vmem:[%s365] sm:$0xff]
        %v772 = vld [vmem:[%s365 + $0x10] sm:$0xff]
        %v773 = vld [vmem:[%s365 + $0x20] sm:$0xff]
        %v774 = vld [vmem:[%s365 + $0x30] sm:$0xff]
        %v775 = vld [vmem:[%s365 + $0x40] sm:$0xff]
        %v776 = vld [vmem:[%s365 + $0x50] sm:$0xff]
        %v777 = vld [vmem:[%s365 + $0x60] sm:$0xff]
        %v778 = vld [vmem:[%s365 + $0x70] sm:$0xff]
        %s779 = scalar_lea.vmem [#allocation9], 384
        %v780 = vld [vmem:[%s779] sm:$0xff]
        %v781 = vld [vmem:[%s779 + $0x8] sm:$0xff]
        %v782 = vld [vmem:[%s779 + $0x10] sm:$0xff]
        %v783 = vld [vmem:[%s779 + $0x18] sm:$0xff]
        %v784 = vld [vmem:[%s779 + $0x20] sm:$0xff]
        %v785 = vld [vmem:[%s779 + $0x28] sm:$0xff]
        %v786 = vld [vmem:[%s779 + $0x30] sm:$0xff]
        %v787 = vld [vmem:[%s779 + $0x38] sm:$0xff]
        %v788 = vld [vmem:[%s779 + $0x40] sm:$0xff]
        %v789 = vld [vmem:[%s779 + $0x48] sm:$0xff]
        %v790 = vld [vmem:[%s779 + $0x50] sm:$0xff]
        %v791 = vld [vmem:[%s779 + $0x58] sm:$0xff]
        %v792 = vld [vmem:[%s779 + $0x60] sm:$0xff]
        %v793 = vld [vmem:[%s779 + $0x68] sm:$0xff]
        %v794 = vld [vmem:[%s779 + $0x70] sm:$0xff]
        %v795 = vld [vmem:[%s779 + $0x78] sm:$0xff]
        %796 = vmatprep.subr.mxu0 0.0
        %797 = vmatpush1.msra.mxu0 %v780
        %798 = vmatprep.subr.mxu0 0.0
        %799 = vmatpush1.msra.mxu0 %v781
        %800 = vmatprep.subr.mxu0 0.0
        %801 = vmatpush1.msra.mxu0 %v782
        %802 = vmatprep.subr.mxu0 0.0
        %803 = vmatpush1.msra.mxu0 %v783
        %804 = vmatprep.subr.mxu0 0.0
        %805 = vmatpush1.msra.mxu0 %v784
        %806 = vmatprep.subr.mxu0 0.0
        %807 = vmatpush1.msra.mxu0 %v785
        %808 = vmatprep.subr.mxu0 0.0
        %809 = vmatpush1.msra.mxu0 %v786
        %810 = vmatprep.subr.mxu0 0.0
        %811 = vmatpush1.msra.mxu0 %v787
        %812 = vmatprep.subr.mxu0 0.0
        %813 = vmatpush1.msra.mxu0 %v788
        %814 = vmatprep.subr.mxu0 0.0
        %815 = vmatpush1.msra.mxu0 %v789
        %816 = vmatprep.subr.mxu0 0.0
        %817 = vmatpush1.msra.mxu0 %v790
        %818 = vmatprep.subr.mxu0 0.0
        %819 = vmatpush1.msra.mxu0 %v791
        %820 = vmatprep.subr.mxu0 0.0
        %821 = vmatpush1.msra.mxu0 %v792
        %822 = vmatprep.subr.mxu0 0.0
        %823 = vmatpush1.msra.mxu0 %v793
        %824 = vmatprep.subr.mxu0 0.0
        %825 = vmatpush1.msra.mxu0 %v794
        %826 = vmatprep.subr.mxu0 0.0
        %827 = vmatpush1.msra.mxu0 %v795
        %828 = vmatprep.subr.mxu0 0.0
        %829 = vmatpush1.msra.mxu0 0.0
        %830 = vmatprep.subr.mxu0 0.0
        %831 = vmatpush1.msra.mxu0 0.0
        %832 = vmatprep.subr.mxu0 0.0
        %833 = vmatpush1.msra.mxu0 0.0
        %834 = vmatprep.subr.mxu0 0.0
        %835 = vmatpush1.msra.mxu0 0.0
        %836 = vmatprep.subr.mxu0 0.0
        %837 = vmatpush1.msra.mxu0 0.0
        %838 = vmatprep.subr.mxu0 0.0
        %839 = vmatpush1.msra.mxu0 0.0
        %840 = vmatprep.subr.mxu0 0.0
        %841 = vmatpush1.msra.mxu0 0.0
        %842 = vmatprep.subr.mxu0 0.0
        %843 = vmatpush1.msra.mxu0 0.0
        %844 = vmatprep.subr.mxu0 0.0
        %845 = vmatpush1.msra.mxu0 0.0
        %846 = vmatprep.subr.mxu0 0.0
        %847 = vmatpush1.msra.mxu0 0.0
        %848 = vmatprep.subr.mxu0 0.0
        %849 = vmatpush1.msra.mxu0 0.0
        %850 = vmatprep.subr.mxu0 0.0
        %851 = vmatpush1.msra.mxu0 0.0
        %852 = vmatprep.subr.mxu0 0.0
        %853 = vmatpush1.msra.mxu0 0.0
        %854 = vmatprep.subr.mxu0 0.0
        %855 = vmatpush1.msra.mxu0 0.0
        %856 = vmatprep.subr.mxu0 0.0
        %857 = vmatpush1.msra.mxu0 0.0
        %858 = vmatprep.subr.mxu0 0.0
        %859 = vmatpush1.msra.mxu0 0.0
        %860 = vmatprep.mubr.f32.mxu0 0.0
        %861 = vmatmul.mubr.f32.gmra.mrb[0].mxu0 %v771
        %v862 = vpop.f32.mrb[0].mxu0
        %v863 = vadd.f32 0.0, %v862
        %v864 = vpop.f32.mrb[0].mxu0
        %865 = vmatprep.mubr.f32.mxu0 0.0
        %866 = vmatmul.mubr.f32.gmra.mrb[0].mxu0 %v772
        %v867 = vpop.f32.mrb[0].mxu0
        %v868 = vadd.f32 0.0, %v867
        %v869 = vpop.f32.mrb[0].mxu0
        %870 = vmatprep.mubr.f32.mxu0 0.0
        %871 = vmatmul.mubr.f32.gmra.mrb[0].mxu0 %v773
        %v872 = vpop.f32.mrb[0].mxu0
        %v873 = vadd.f32 0.0, %v872
        %v874 = vpop.f32.mrb[0].mxu0
        %875 = vmatprep.mubr.f32.mxu0 0.0
        %876 = vmatmul.mubr.f32.gmra.mrb[0].mxu0 %v774
        %v877 = vpop.f32.mrb[0].mxu0
        %v878 = vadd.f32 0.0, %v877
        %v879 = vpop.f32.mrb[0].mxu0
        %880 = vmatprep.mubr.f32.mxu0 0.0
        %881 = vmatmul.mubr.f32.gmra.mrb[0].mxu0 %v775
        %v882 = vpop.f32.mrb[0].mxu0
        %v883 = vadd.f32 0.0, %v882
        %v884 = vpop.f32.mrb[0].mxu0
        %885 = vmatprep.mubr.f32.mxu0 0.0
        %886 = vmatmul.mubr.f32.gmra.mrb[0].mxu0 %v776
        %v887 = vpop.f32.mrb[0].mxu0
        %v888 = vadd.f32 0.0, %v887
        %v889 = vpop.f32.mrb[0].mxu0
        %890 = vmatprep.mubr.f32.mxu0 0.0
        %891 = vmatmul.mubr.f32.gmra.mrb[0].mxu0 %v777
        %v892 = vpop.f32.mrb[0].mxu0
        %v893 = vadd.f32 0.0, %v892
        %v894 = vpop.f32.mrb[0].mxu0
        %895 = vmatprep.mubr.f32.mxu0 0.0
        %896 = vmatmul.mubr.f32.gmra.mrb[0].mxu0 %v778
        %v897 = vpop.f32.mrb[0].mxu0
        %v898 = vadd.f32 0.0, %v897
        %v899 = vpop.f32.mrb[0].mxu0
        %900 = vdwg.mxu0
        %v901 = vadd.f32 %v763, %v863
        %v902 = vadd.f32 %v764, %v868
        %v903 = vadd.f32 %v765, %v873
        %v904 = vadd.f32 %v766, %v878
        %v905 = vadd.f32 %v767, %v883
        %v906 = vadd.f32 %v768, %v888
        %v907 = vadd.f32 %v769, %v893
        %v908 = vadd.f32 %v770, %v898
        %v909 = vld [vmem:[%s365 + $0x1] sm:$0xff]
        %v910 = vld [vmem:[%s365 + $0x11] sm:$0xff]
        %v911 = vld [vmem:[%s365 + $0x21] sm:$0xff]
        %v912 = vld [vmem:[%s365 + $0x31] sm:$0xff]
        %v913 = vld [vmem:[%s365 + $0x41] sm:$0xff]
        %v914 = vld [vmem:[%s365 + $0x51] sm:$0xff]
        %v915 = vld [vmem:[%s365 + $0x61] sm:$0xff]
        %v916 = vld [vmem:[%s365 + $0x71] sm:$0xff]
        %s917 = scalar_lea.vmem [#allocation9], 512
        %v918 = vld [vmem:[%s917] sm:$0xff]
        %v919 = vld [vmem:[%s917 + $0x8] sm:$0xff]
        %v920 = vld [vmem:[%s917 + $0x10] sm:$0xff]
        %v921 = vld [vmem:[%s917 + $0x18] sm:$0xff]
        %v922 = vld [vmem:[%s917 + $0x20] sm:$0xff]
        %v923 = vld [vmem:[%s917 + $0x28] sm:$0xff]
        %v924 = vld [vmem:[%s917 + $0x30] sm:$0xff]
        %v925 = vld [vmem:[%s917 + $0x38] sm:$0xff]
        %v926 = vld [vmem:[%s917 + $0x40] sm:$0xff]
        %v927 = vld [vmem:[%s917 + $0x48] sm:$0xff]
        %v928 = vld [vmem:[%s917 + $0x50] sm:$0xff]
        %v929 = vld [vmem:[%s917 + $0x58] sm:$0xff]
        %v930 = vld [vmem:[%s917 + $0x60] sm:$0xff]
        %v931 = vld [vmem:[%s917 + $0x68] sm:$0xff]
        %v932 = vld [vmem:[%s917 + $0x70] sm:$0xff]
        %v933 = vld [vmem:[%s917 + $0x78] sm:$0xff]
        %934 = vmatprep.subr.mxu0 0.0
        %935 = vmatpush1.msra.mxu0 %v918
        %936 = vmatprep.subr.mxu0 0.0
        %937 = vmatpush1.msra.mxu0 %v919
        %938 = vmatprep.subr.mxu0 0.0
        %939 = vmatpush1.msra.mxu0 %v920
        %940 = vmatprep.subr.mxu0 0.0
        %941 = vmatpush1.msra.mxu0 %v921
        %942 = vmatprep.subr.mxu0 0.0
        %943 = vmatpush1.msra.mxu0 %v922
        %944 = vmatprep.subr.mxu0 0.0
        %945 = vmatpush1.msra.mxu0 %v923
        %946 = vmatprep.subr.mxu0 0.0
        %947 = vmatpush1.msra.mxu0 %v924
        %948 = vmatprep.subr.mxu0 0.0
        %949 = vmatpush1.msra.mxu0 %v925
        %950 = vmatprep.subr.mxu0 0.0
        %951 = vmatpush1.msra.mxu0 %v926
        %952 = vmatprep.subr.mxu0 0.0
        %953 = vmatpush1.msra.mxu0 %v927
        %954 = vmatprep.subr.mxu0 0.0
        %955 = vmatpush1.msra.mxu0 %v928
        %956 = vmatprep.subr.mxu0 0.0
        %957 = vmatpush1.msra.mxu0 %v929
        %958 = vmatprep.subr.mxu0 0.0
        %959 = vmatpush1.msra.mxu0 %v930
        %960 = vmatprep.subr.mxu0 0.0
        %961 = vmatpush1.msra.mxu0 %v931
        %962 = vmatprep.subr.mxu0 0.0
        %963 = vmatpush1.msra.mxu0 %v932
        %964 = vmatprep.subr.mxu0 0.0
        %965 = vmatpush1.msra.mxu0 %v933
        %966 = vmatprep.subr.mxu0 0.0
        %967 = vmatpush1.msra.mxu0 0.0
        %968 = vmatprep.subr.mxu0 0.0
        %969 = vmatpush1.msra.mxu0 0.0
        %970 = vmatprep.subr.mxu0 0.0
        %971 = vmatpush1.msra.mxu0 0.0
        %972 = vmatprep.subr.mxu0 0.0
        %973 = vmatpush1.msra.mxu0 0.0
        %974 = vmatprep.subr.mxu0 0.0
        %975 = vmatpush1.msra.mxu0 0.0
        %976 = vmatprep.subr.mxu0 0.0
        %977 = vmatpush1.msra.mxu0 0.0
        %978 = vmatprep.subr.mxu0 0.0
        %979 = vmatpush1.msra.mxu0 0.0
        %980 = vmatprep.subr.mxu0 0.0
        %981 = vmatpush1.msra.mxu0 0.0
        %982 = vmatprep.subr.mxu0 0.0
        %983 = vmatpush1.msra.mxu0 0.0
        %984 = vmatprep.subr.mxu0 0.0
        %985 = vmatpush1.msra.mxu0 0.0
        %986 = vmatprep.subr.mxu0 0.0
        %987 = vmatpush1.msra.mxu0 0.0
        %988 = vmatprep.subr.mxu0 0.0
        %989 = vmatpush1.msra.mxu0 0.0
        %990 = vmatprep.subr.mxu0 0.0
        %991 = vmatpush1.msra.mxu0 0.0
        %992 = vmatprep.subr.mxu0 0.0
        %993 = vmatpush1.msra.mxu0 0.0
        %994 = vmatprep.subr.mxu0 0.0
        %995 = vmatpush1.msra.mxu0 0.0
        %996 = vmatprep.subr.mxu0 0.0
        %997 = vmatpush1.msra.mxu0 0.0
        %998 = vmatprep.mubr.f32.mxu0 0.0
        %999 = vmatmul.mubr.f32.gmra.mrb[0].mxu0 %v909
        %v1000 = vpop.f32.mrb[0].mxu0
        %v1001 = vadd.f32 0.0, %v1000
        %v1002 = vpop.f32.mrb[0].mxu0
        %1003 = vmatprep.mubr.f32.mxu0 0.0
        %1004 = vmatmul.mubr.f32.gmra.mrb[0].mxu0 %v910
        %v1005 = vpop.f32.mrb[0].mxu0
        %v1006 = vadd.f32 0.0, %v1005
        %v1007 = vpop.f32.mrb[0].mxu0
        %1008 = vmatprep.mubr.f32.mxu0 0.0
        %1009 = vmatmul.mubr.f32.gmra.mrb[0].mxu0 %v911
        %v1010 = vpop.f32.mrb[0].mxu0
        %v1011 = vadd.f32 0.0, %v1010
        %v1012 = vpop.f32.mrb[0].mxu0
        %1013 = vmatprep.mubr.f32.mxu0 0.0
        %1014 = vmatmul.mubr.f32.gmra.mrb[0].mxu0 %v912
        %v1015 = vpop.f32.mrb[0].mxu0
        %v1016 = vadd.f32 0.0, %v1015
        %v1017 = vpop.f32.mrb[0].mxu0
        %1018 = vmatprep.mubr.f32.mxu0 0.0
        %1019 = vmatmul.mubr.f32.gmra.mrb[0].mxu0 %v913
        %v1020 = vpop.f32.mrb[0].mxu0
        %v1021 = vadd.f32 0.0, %v1020
        %v1022 = vpop.f32.mrb[0].mxu0
        %1023 = vmatprep.mubr.f32.mxu0 0.0
        %1024 = vmatmul.mubr.f32.gmra.mrb[0].mxu0 %v914
        %v1025 = vpop.f32.mrb[0].mxu0
        %v1026 = vadd.f32 0.0, %v1025
        %v1027 = vpop.f32.mrb[0].mxu0
        %1028 = vmatprep.mubr.f32.mxu0 0.0
        %1029 = vmatmul.mubr.f32.gmra.mrb[0].mxu0 %v915
        %v1030 = vpop.f32.mrb[0].mxu0
        %v1031 = vadd.f32 0.0, %v1030
        %v1032 = vpop.f32.mrb[0].mxu0
        %1033 = vmatprep.mubr.f32.mxu0 0.0
        %1034 = vmatmul.mubr.f32.gmra.mrb[0].mxu0 %v916
        %v1035 = vpop.f32.mrb[0].mxu0
        %v1036 = vadd.f32 0.0, %v1035
        %v1037 = vpop.f32.mrb[0].mxu0
        %1038 = vdwg.mxu0
        %v1039 = vadd.f32 %v901, %v1001
        %v1040 = vadd.f32 %v902, %v1006
        %v1041 = vadd.f32 %v903, %v1011
        %v1042 = vadd.f32 %v904, %v1016
        %v1043 = vadd.f32 %v905, %v1021
        %v1044 = vadd.f32 %v906, %v1026
        %v1045 = vadd.f32 %v907, %v1031
        %v1046 = vadd.f32 %v908, %v1036
        %v1047 = vld [vmem:[%s365 + $0x2] sm:$0xff]
        %v1048 = vld [vmem:[%s365 + $0x12] sm:$0xff]
        %v1049 = vld [vmem:[%s365 + $0x22] sm:$0xff]
        %v1050 = vld [vmem:[%s365 + $0x32] sm:$0xff]
        %v1051 = vld [vmem:[%s365 + $0x42] sm:$0xff]
        %v1052 = vld [vmem:[%s365 + $0x52] sm:$0xff]
        %v1053 = vld [vmem:[%s365 + $0x62] sm:$0xff]
        %v1054 = vld [vmem:[%s365 + $0x72] sm:$0xff]
        %s1055 = scalar_lea.vmem [#allocation9], 640
        %v1056 = vld [vmem:[%s1055] sm:$0xff]
        %v1057 = vld [vmem:[%s1055 + $0x8] sm:$0xff]
        %v1058 = vld [vmem:[%s1055 + $0x10] sm:$0xff]
        %v1059 = vld [vmem:[%s1055 + $0x18] sm:$0xff]
        %v1060 = vld [vmem:[%s1055 + $0x20] sm:$0xff]
        %v1061 = vld [vmem:[%s1055 + $0x28] sm:$0xff]
        %v1062 = vld [vmem:[%s1055 + $0x30] sm:$0xff]
        %v1063 = vld [vmem:[%s1055 + $0x38] sm:$0xff]
        %v1064 = vld [vmem:[%s1055 + $0x40] sm:$0xff]
        %v1065 = vld [vmem:[%s1055 + $0x48] sm:$0xff]
        %v1066 = vld [vmem:[%s1055 + $0x50] sm:$0xff]
        %v1067 = vld [vmem:[%s1055 + $0x58] sm:$0xff]
        %v1068 = vld [vmem:[%s1055 + $0x60] sm:$0xff]
        %v1069 = vld [vmem:[%s1055 + $0x68] sm:$0xff]
        %v1070 = vld [vmem:[%s1055 + $0x70] sm:$0xff]
        %v1071 = vld [vmem:[%s1055 + $0x78] sm:$0xff]
        %1072 = vmatprep.subr.mxu0 0.0
        %1073 = vmatpush1.msra.mxu0 %v1056
        %1074 = vmatprep.subr.mxu0 0.0
        %1075 = vmatpush1.msra.mxu0 %v1057
        %1076 = vmatprep.subr.mxu0 0.0
        %1077 = vmatpush1.msra.mxu0 %v1058
        %1078 = vmatprep.subr.mxu0 0.0
        %1079 = vmatpush1.msra.mxu0 %v1059
        %1080 = vmatprep.subr.mxu0 0.0
        %1081 = vmatpush1.msra.mxu0 %v1060
        %1082 = vmatprep.subr.mxu0 0.0
        %1083 = vmatpush1.msra.mxu0 %v1061
        %1084 = vmatprep.subr.mxu0 0.0
        %1085 = vmatpush1.msra.mxu0 %v1062
        %1086 = vmatprep.subr.mxu0 0.0
        %1087 = vmatpush1.msra.mxu0 %v1063
        %1088 = vmatprep.subr.mxu0 0.0
        %1089 = vmatpush1.msra.mxu0 %v1064
        %1090 = vmatprep.subr.mxu0 0.0
        %1091 = vmatpush1.msra.mxu0 %v1065
        %1092 = vmatprep.subr.mxu0 0.0
        %1093 = vmatpush1.msra.mxu0 %v1066
        %1094 = vmatprep.subr.mxu0 0.0
        %1095 = vmatpush1.msra.mxu0 %v1067
        %1096 = vmatprep.subr.mxu0 0.0
        %1097 = vmatpush1.msra.mxu0 %v1068
        %1098 = vmatprep.subr.mxu0 0.0
        %1099 = vmatpush1.msra.mxu0 %v1069
        %1100 = vmatprep.subr.mxu0 0.0
        %1101 = vmatpush1.msra.mxu0 %v1070
        %1102 = vmatprep.subr.mxu0 0.0
        %1103 = vmatpush1.msra.mxu0 %v1071
        %1104 = vmatprep.subr.mxu0 0.0
        %1105 = vmatpush1.msra.mxu0 0.0
        %1106 = vmatprep.subr.mxu0 0.0
        %1107 = vmatpush1.msra.mxu0 0.0
        %1108 = vmatprep.subr.mxu0 0.0
        %1109 = vmatpush1.msra.mxu0 0.0
        %1110 = vmatprep.subr.mxu0 0.0
        %1111 = vmatpush1.msra.mxu0 0.0
        %1112 = vmatprep.subr.mxu0 0.0
        %1113 = vmatpush1.msra.mxu0 0.0
        %1114 = vmatprep.subr.mxu0 0.0
        %1115 = vmatpush1.msra.mxu0 0.0
        %1116 = vmatprep.subr.mxu0 0.0
        %1117 = vmatpush1.msra.mxu0 0.0
        %1118 = vmatprep.subr.mxu0 0.0
        %1119 = vmatpush1.msra.mxu0 0.0
        %1120 = vmatprep.subr.mxu0 0.0
        %1121 = vmatpush1.msra.mxu0 0.0
        %1122 = vmatprep.subr.mxu0 0.0
        %1123 = vmatpush1.msra.mxu0 0.0
        %1124 = vmatprep.subr.mxu0 0.0
        %1125 = vmatpush1.msra.mxu0 0.0
        %1126 = vmatprep.subr.mxu0 0.0
        %1127 = vmatpush1.msra.mxu0 0.0
        %1128 = vmatprep.subr.mxu0 0.0
        %1129 = vmatpush1.msra.mxu0 0.0
        %1130 = vmatprep.subr.mxu0 0.0
        %1131 = vmatpush1.msra.mxu0 0.0
        %1132 = vmatprep.subr.mxu0 0.0
        %1133 = vmatpush1.msra.mxu0 0.0
        %1134 = vmatprep.subr.mxu0 0.0
        %1135 = vmatpush1.msra.mxu0 0.0
        %1136 = vmatprep.mubr.f32.mxu0 0.0
        %1137 = vmatmul.mubr.f32.gmra.mrb[0].mxu0 %v1047
        %v1138 = vpop.f32.mrb[0].mxu0
        %v1139 = vadd.f32 0.0, %v1138
        %v1140 = vpop.f32.mrb[0].mxu0
        %1141 = vmatprep.mubr.f32.mxu0 0.0
        %1142 = vmatmul.mubr.f32.gmra.mrb[0].mxu0 %v1048
        %v1143 = vpop.f32.mrb[0].mxu0
        %v1144 = vadd.f32 0.0, %v1143
        %v1145 = vpop.f32.mrb[0].mxu0
        %1146 = vmatprep.mubr.f32.mxu0 0.0
        %1147 = vmatmul.mubr.f32.gmra.mrb[0].mxu0 %v1049
        %v1148 = vpop.f32.mrb[0].mxu0
        %v1149 = vadd.f32 0.0, %v1148
        %v1150 = vpop.f32.mrb[0].mxu0
        %1151 = vmatprep.mubr.f32.mxu0 0.0
        %1152 = vmatmul.mubr.f32.gmra.mrb[0].mxu0 %v1050
        %v1153 = vpop.f32.mrb[0].mxu0
        %v1154 = vadd.f32 0.0, %v1153
        %v1155 = vpop.f32.mrb[0].mxu0
        %1156 = vmatprep.mubr.f32.mxu0 0.0
        %1157 = vmatmul.mubr.f32.gmra.mrb[0].mxu0 %v1051
        %v1158 = vpop.f32.mrb[0].mxu0
        %v1159 = vadd.f32 0.0, %v1158
        %v1160 = vpop.f32.mrb[0].mxu0
        %1161 = vmatprep.mubr.f32.mxu0 0.0
        %1162 = vmatmul.mubr.f32.gmra.mrb[0].mxu0 %v1052
        %v1163 = vpop.f32.mrb[0].mxu0
        %v1164 = vadd.f32 0.0, %v1163
        %v1165 = vpop.f32.mrb[0].mxu0
        %1166 = vmatprep.mubr.f32.mxu0 0.0
        %1167 = vmatmul.mubr.f32.gmra.mrb[0].mxu0 %v1053
        %v1168 = vpop.f32.mrb[0].mxu0
        %v1169 = vadd.f32 0.0, %v1168
        %v1170 = vpop.f32.mrb[0].mxu0
        %1171 = vmatprep.mubr.f32.mxu0 0.0
        %1172 = vmatmul.mubr.f32.gmra.mrb[0].mxu0 %v1054
        %v1173 = vpop.f32.mrb[0].mxu0
        %v1174 = vadd.f32 0.0, %v1173
        %v1175 = vpop.f32.mrb[0].mxu0
        %1176 = vdwg.mxu0
        %v1177 = vadd.f32 %v1039, %v1139
        %v1178 = vadd.f32 %v1040, %v1144
        %v1179 = vadd.f32 %v1041, %v1149
        %v1180 = vadd.f32 %v1042, %v1154
        %v1181 = vadd.f32 %v1043, %v1159
        %v1182 = vadd.f32 %v1044, %v1164
        %v1183 = vadd.f32 %v1045, %v1169
        %v1184 = vadd.f32 %v1046, %v1174
        %s1185 = scalar_lea.vmem [#allocation2], 32
        %v1186 = vld [vmem:[%s1185] sm:$0xff]
        %v1187 = vld [vmem:[%s1185 + $0x10] sm:$0xff]
        %v1188 = vld [vmem:[%s1185 + $0x20] sm:$0xff]
        %v1189 = vld [vmem:[%s1185 + $0x30] sm:$0xff]
        %v1190 = vld [vmem:[%s1185 + $0x40] sm:$0xff]
        %v1191 = vld [vmem:[%s1185 + $0x50] sm:$0xff]
        %v1192 = vld [vmem:[%s1185 + $0x60] sm:$0xff]
        %v1193 = vld [vmem:[%s1185 + $0x70] sm:$0xff]
        %s1194 = scalar_lea.vmem [#allocation9], 768
        %v1195 = vld [vmem:[%s1194] sm:$0xff]
        %v1196 = vld [vmem:[%s1194 + $0x8] sm:$0xff]
        %v1197 = vld [vmem:[%s1194 + $0x10] sm:$0xff]
        %v1198 = vld [vmem:[%s1194 + $0x18] sm:$0xff]
        %v1199 = vld [vmem:[%s1194 + $0x20] sm:$0xff]
        %v1200 = vld [vmem:[%s1194 + $0x28] sm:$0xff]
        %v1201 = vld [vmem:[%s1194 + $0x30] sm:$0xff]
        %v1202 = vld [vmem:[%s1194 + $0x38] sm:$0xff]
        %v1203 = vld [vmem:[%s1194 + $0x40] sm:$0xff]
        %v1204 = vld [vmem:[%s1194 + $0x48] sm:$0xff]
        %v1205 = vld [vmem:[%s1194 + $0x50] sm:$0xff]
        %v1206 = vld [vmem:[%s1194 + $0x58] sm:$0xff]
        %v1207 = vld [vmem:[%s1194 + $0x60] sm:$0xff]
        %v1208 = vld [vmem:[%s1194 + $0x68] sm:$0xff]
        %v1209 = vld [vmem:[%s1194 + $0x70] sm:$0xff]
        %v1210 = vld [vmem:[%s1194 + $0x78] sm:$0xff]
        %1211 = vmatprep.subr.mxu0 0.0
        %1212 = vmatpush1.msra.mxu0 %v1195
        %1213 = vmatprep.subr.mxu0 0.0
        %1214 = vmatpush1.msra.mxu0 %v1196
        %1215 = vmatprep.subr.mxu0 0.0
        %1216 = vmatpush1.msra.mxu0 %v1197
        %1217 = vmatprep.subr.mxu0 0.0
        %1218 = vmatpush1.msra.mxu0 %v1198
        %1219 = vmatprep.subr.mxu0 0.0
        %1220 = vmatpush1.msra.mxu0 %v1199
        %1221 = vmatprep.subr.mxu0 0.0
        %1222 = vmatpush1.msra.mxu0 %v1200
        %1223 = vmatprep.subr.mxu0 0.0
        %1224 = vmatpush1.msra.mxu0 %v1201
        %1225 = vmatprep.subr.mxu0 0.0
        %1226 = vmatpush1.msra.mxu0 %v1202
        %1227 = vmatprep.subr.mxu0 0.0
        %1228 = vmatpush1.msra.mxu0 %v1203
        %1229 = vmatprep.subr.mxu0 0.0
        %1230 = vmatpush1.msra.mxu0 %v1204
        %1231 = vmatprep.subr.mxu0 0.0
        %1232 = vmatpush1.msra.mxu0 %v1205
        %1233 = vmatprep.subr.mxu0 0.0
        %1234 = vmatpush1.msra.mxu0 %v1206
        %1235 = vmatprep.subr.mxu0 0.0
        %1236 = vmatpush1.msra.mxu0 %v1207
        %1237 = vmatprep.subr.mxu0 0.0
        %1238 = vmatpush1.msra.mxu0 %v1208
        %1239 = vmatprep.subr.mxu0 0.0
        %1240 = vmatpush1.msra.mxu0 %v1209
        %1241 = vmatprep.subr.mxu0 0.0
        %1242 = vmatpush1.msra.mxu0 %v1210
        %1243 = vmatprep.subr.mxu0 0.0
        %1244 = vmatpush1.msra.mxu0 0.0
        %1245 = vmatprep.subr.mxu0 0.0
        %1246 = vmatpush1.msra.mxu0 0.0
        %1247 = vmatprep.subr.mxu0 0.0
        %1248 = vmatpush1.msra.mxu0 0.0
        %1249 = vmatprep.subr.mxu0 0.0
        %1250 = vmatpush1.msra.mxu0 0.0
        %1251 = vmatprep.subr.mxu0 0.0
        %1252 = vmatpush1.msra.mxu0 0.0
        %1253 = vmatprep.subr.mxu0 0.0
        %1254 = vmatpush1.msra.mxu0 0.0
        %1255 = vmatprep.subr.mxu0 0.0
        %1256 = vmatpush1.msra.mxu0 0.0
        %1257 = vmatprep.subr.mxu0 0.0
        %1258 = vmatpush1.msra.mxu0 0.0
        %1259 = vmatprep.subr.mxu0 0.0
        %1260 = vmatpush1.msra.mxu0 0.0
        %1261 = vmatprep.subr.mxu0 0.0
        %1262 = vmatpush1.msra.mxu0 0.0
        %1263 = vmatprep.subr.mxu0 0.0
        %1264 = vmatpush1.msra.mxu0 0.0
        %1265 = vmatprep.subr.mxu0 0.0
        %1266 = vmatpush1.msra.mxu0 0.0
        %1267 = vmatprep.subr.mxu0 0.0
        %1268 = vmatpush1.msra.mxu0 0.0
        %1269 = vmatprep.subr.mxu0 0.0
        %1270 = vmatpush1.msra.mxu0 0.0
        %1271 = vmatprep.subr.mxu0 0.0
        %1272 = vmatpush1.msra.mxu0 0.0
        %1273 = vmatprep.subr.mxu0 0.0
        %1274 = vmatpush1.msra.mxu0 0.0
        %1275 = vmatprep.mubr.f32.mxu0 0.0
        %1276 = vmatmul.mubr.f32.gmra.mrb[0].mxu0 %v1186
        %v1277 = vpop.f32.mrb[0].mxu0
        %v1278 = vadd.f32 0.0, %v1277
        %v1279 = vpop.f32.mrb[0].mxu0
        %1280 = vmatprep.mubr.f32.mxu0 0.0
        %1281 = vmatmul.mubr.f32.gmra.mrb[0].mxu0 %v1187
        %v1282 = vpop.f32.mrb[0].mxu0
        %v1283 = vadd.f32 0.0, %v1282
        %v1284 = vpop.f32.mrb[0].mxu0
        %1285 = vmatprep.mubr.f32.mxu0 0.0
        %1286 = vmatmul.mubr.f32.gmra.mrb[0].mxu0 %v1188
        %v1287 = vpop.f32.mrb[0].mxu0
        %v1288 = vadd.f32 0.0, %v1287
        %v1289 = vpop.f32.mrb[0].mxu0
        %1290 = vmatprep.mubr.f32.mxu0 0.0
        %1291 = vmatmul.mubr.f32.gmra.mrb[0].mxu0 %v1189
        %v1292 = vpop.f32.mrb[0].mxu0
        %v1293 = vadd.f32 0.0, %v1292
        %v1294 = vpop.f32.mrb[0].mxu0
        %1295 = vmatprep.mubr.f32.mxu0 0.0
        %1296 = vmatmul.mubr.f32.gmra.mrb[0].mxu0 %v1190
        %v1297 = vpop.f32.mrb[0].mxu0
        %v1298 = vadd.f32 0.0, %v1297
        %v1299 = vpop.f32.mrb[0].mxu0
        %1300 = vmatprep.mubr.f32.mxu0 0.0
        %1301 = vmatmul.mubr.f32.gmra.mrb[0].mxu0 %v1191
        %v1302 = vpop.f32.mrb[0].mxu0
        %v1303 = vadd.f32 0.0, %v1302
        %v1304 = vpop.f32.mrb[0].mxu0
        %1305 = vmatprep.mubr.f32.mxu0 0.0
        %1306 = vmatmul.mubr.f32.gmra.mrb[0].mxu0 %v1192
        %v1307 = vpop.f32.mrb[0].mxu0
        %v1308 = vadd.f32 0.0, %v1307
        %v1309 = vpop.f32.mrb[0].mxu0
        %1310 = vmatprep.mubr.f32.mxu0 0.0
        %1311 = vmatmul.mubr.f32.gmra.mrb[0].mxu0 %v1193
        %v1312 = vpop.f32.mrb[0].mxu0
        %v1313 = vadd.f32 0.0, %v1312
        %v1314 = vpop.f32.mrb[0].mxu0
        %1315 = vdwg.mxu0
        %v1316 = vadd.f32 %v1177, %v1278
        %v1317 = vadd.f32 %v1178, %v1283
        %v1318 = vadd.f32 %v1179, %v1288
        %v1319 = vadd.f32 %v1180, %v1293
        %v1320 = vadd.f32 %v1181, %v1298
        %v1321 = vadd.f32 %v1182, %v1303
        %v1322 = vadd.f32 %v1183, %v1308
        %v1323 = vadd.f32 %v1184, %v1313
        %v1324 = vld [vmem:[%s1185 + $0x1] sm:$0xff]
        %v1325 = vld [vmem:[%s1185 + $0x11] sm:$0xff]
        %v1326 = vld [vmem:[%s1185 + $0x21] sm:$0xff]
        %v1327 = vld [vmem:[%s1185 + $0x31] sm:$0xff]
        %v1328 = vld [vmem:[%s1185 + $0x41] sm:$0xff]
        %v1329 = vld [vmem:[%s1185 + $0x51] sm:$0xff]
        %v1330 = vld [vmem:[%s1185 + $0x61] sm:$0xff]
        %v1331 = vld [vmem:[%s1185 + $0x71] sm:$0xff]
        %s1332 = scalar_lea.vmem [#allocation9], 896
        %v1333 = vld [vmem:[%s1332] sm:$0xff]
        %v1334 = vld [vmem:[%s1332 + $0x8] sm:$0xff]
        %v1335 = vld [vmem:[%s1332 + $0x10] sm:$0xff]
        %v1336 = vld [vmem:[%s1332 + $0x18] sm:$0xff]
        %v1337 = vld [vmem:[%s1332 + $0x20] sm:$0xff]
        %v1338 = vld [vmem:[%s1332 + $0x28] sm:$0xff]
        %v1339 = vld [vmem:[%s1332 + $0x30] sm:$0xff]
        %v1340 = vld [vmem:[%s1332 + $0x38] sm:$0xff]
        %v1341 = vld [vmem:[%s1332 + $0x40] sm:$0xff]
        %v1342 = vld [vmem:[%s1332 + $0x48] sm:$0xff]
        %v1343 = vld [vmem:[%s1332 + $0x50] sm:$0xff]
        %v1344 = vld [vmem:[%s1332 + $0x58] sm:$0xff]
        %v1345 = vld [vmem:[%s1332 + $0x60] sm:$0xff]
        %v1346 = vld [vmem:[%s1332 + $0x68] sm:$0xff]
        %v1347 = vld [vmem:[%s1332 + $0x70] sm:$0xff]
        %v1348 = vld [vmem:[%s1332 + $0x78] sm:$0xff]
        %1349 = vmatprep.subr.mxu0 0.0
        %1350 = vmatpush1.msra.mxu0 %v1333
        %1351 = vmatprep.subr.mxu0 0.0
        %1352 = vmatpush1.msra.mxu0 %v1334
        %1353 = vmatprep.subr.mxu0 0.0
        %1354 = vmatpush1.msra.mxu0 %v1335
        %1355 = vmatprep.subr.mxu0 0.0
        %1356 = vmatpush1.msra.mxu0 %v1336
        %1357 = vmatprep.subr.mxu0 0.0
        %1358 = vmatpush1.msra.mxu0 %v1337
        %1359 = vmatprep.subr.mxu0 0.0
        %1360 = vmatpush1.msra.mxu0 %v1338
        %1361 = vmatprep.subr.mxu0 0.0
        %1362 = vmatpush1.msra.mxu0 %v1339
        %1363 = vmatprep.subr.mxu0 0.0
        %1364 = vmatpush1.msra.mxu0 %v1340
        %1365 = vmatprep.subr.mxu0 0.0
        %1366 = vmatpush1.msra.mxu0 %v1341
        %1367 = vmatprep.subr.mxu0 0.0
        %1368 = vmatpush1.msra.mxu0 %v1342
        %1369 = vmatprep.subr.mxu0 0.0
        %1370 = vmatpush1.msra.mxu0 %v1343
        %1371 = vmatprep.subr.mxu0 0.0
        %1372 = vmatpush1.msra.mxu0 %v1344
        %1373 = vmatprep.subr.mxu0 0.0
        %1374 = vmatpush1.msra.mxu0 %v1345
        %1375 = vmatprep.subr.mxu0 0.0
        %1376 = vmatpush1.msra.mxu0 %v1346
        %1377 = vmatprep.subr.mxu0 0.0
        %1378 = vmatpush1.msra.mxu0 %v1347
        %1379 = vmatprep.subr.mxu0 0.0
        %1380 = vmatpush1.msra.mxu0 %v1348
        %1381 = vmatprep.subr.mxu0 0.0
        %1382 = vmatpush1.msra.mxu0 0.0
        %1383 = vmatprep.subr.mxu0 0.0
        %1384 = vmatpush1.msra.mxu0 0.0
        %1385 = vmatprep.subr.mxu0 0.0
        %1386 = vmatpush1.msra.mxu0 0.0
        %1387 = vmatprep.subr.mxu0 0.0
        %1388 = vmatpush1.msra.mxu0 0.0
        %1389 = vmatprep.subr.mxu0 0.0
        %1390 = vmatpush1.msra.mxu0 0.0
        %1391 = vmatprep.subr.mxu0 0.0
        %1392 = vmatpush1.msra.mxu0 0.0
        %1393 = vmatprep.subr.mxu0 0.0
        %1394 = vmatpush1.msra.mxu0 0.0
        %1395 = vmatprep.subr.mxu0 0.0
        %1396 = vmatpush1.msra.mxu0 0.0
        %1397 = vmatprep.subr.mxu0 0.0
        %1398 = vmatpush1.msra.mxu0 0.0
        %1399 = vmatprep.subr.mxu0 0.0
        %1400 = vmatpush1.msra.mxu0 0.0
        %1401 = vmatprep.subr.mxu0 0.0
        %1402 = vmatpush1.msra.mxu0 0.0
        %1403 = vmatprep.subr.mxu0 0.0
        %1404 = vmatpush1.msra.mxu0 0.0
        %1405 = vmatprep.subr.mxu0 0.0
        %1406 = vmatpush1.msra.mxu0 0.0
        %1407 = vmatprep.subr.mxu0 0.0
        %1408 = vmatpush1.msra.mxu0 0.0
        %1409 = vmatprep.subr.mxu0 0.0
        %1410 = vmatpush1.msra.mxu0 0.0
        %1411 = vmatprep.subr.mxu0 0.0
        %1412 = vmatpush1.msra.mxu0 0.0
        %1413 = vmatprep.mubr.f32.mxu0 0.0
        %1414 = vmatmul.mubr.f32.gmra.mrb[0].mxu0 %v1324
        %v1415 = vpop.f32.mrb[0].mxu0
        %v1416 = vadd.f32 0.0, %v1415
        %v1417 = vpop.f32.mrb[0].mxu0
        %1418 = vmatprep.mubr.f32.mxu0 0.0
        %1419 = vmatmul.mubr.f32.gmra.mrb[0].mxu0 %v1325
        %v1420 = vpop.f32.mrb[0].mxu0
        %v1421 = vadd.f32 0.0, %v1420
        %v1422 = vpop.f32.mrb[0].mxu0
        %1423 = vmatprep.mubr.f32.mxu0 0.0
        %1424 = vmatmul.mubr.f32.gmra.mrb[0].mxu0 %v1326
        %v1425 = vpop.f32.mrb[0].mxu0
        %v1426 = vadd.f32 0.0, %v1425
        %v1427 = vpop.f32.mrb[0].mxu0
        %1428 = vmatprep.mubr.f32.mxu0 0.0
        %1429 = vmatmul.mubr.f32.gmra.mrb[0].mxu0 %v1327
        %v1430 = vpop.f32.mrb[0].mxu0
        %v1431 = vadd.f32 0.0, %v1430
        %v1432 = vpop.f32.mrb[0].mxu0
        %1433 = vmatprep.mubr.f32.mxu0 0.0
        %1434 = vmatmul.mubr.f32.gmra.mrb[0].mxu0 %v1328
        %v1435 = vpop.f32.mrb[0].mxu0
        %v1436 = vadd.f32 0.0, %v1435
        %v1437 = vpop.f32.mrb[0].mxu0
        %1438 = vmatprep.mubr.f32.mxu0 0.0
        %1439 = vmatmul.mubr.f32.gmra.mrb[0].mxu0 %v1329
        %v1440 = vpop.f32.mrb[0].mxu0
        %v1441 = vadd.f32 0.0, %v1440
        %v1442 = vpop.f32.mrb[0].mxu0
        %1443 = vmatprep.mubr.f32.mxu0 0.0
        %1444 = vmatmul.mubr.f32.gmra.mrb[0].mxu0 %v1330
        %v1445 = vpop.f32.mrb[0].mxu0
        %v1446 = vadd.f32 0.0, %v1445
        %v1447 = vpop.f32.mrb[0].mxu0
        %1448 = vmatprep.mubr.f32.mxu0 0.0
        %1449 = vmatmul.mubr.f32.gmra.mrb[0].mxu0 %v1331
        %v1450 = vpop.f32.mrb[0].mxu0
        %v1451 = vadd.f32 0.0, %v1450
        %v1452 = vpop.f32.mrb[0].mxu0
        %1453 = vdwg.mxu0
        %v1454 = vadd.f32 %v1316, %v1416
        %v1455 = vadd.f32 %v1317, %v1421
        %v1456 = vadd.f32 %v1318, %v1426
        %v1457 = vadd.f32 %v1319, %v1431
        %v1458 = vadd.f32 %v1320, %v1436
        %v1459 = vadd.f32 %v1321, %v1441
        %v1460 = vadd.f32 %v1322, %v1446
        %v1461 = vadd.f32 %v1323, %v1451
        %v1462 = vld [vmem:[%s1185 + $0x2] sm:$0xff]
        %v1463 = vld [vmem:[%s1185 + $0x12] sm:$0xff]
        %v1464 = vld [vmem:[%s1185 + $0x22] sm:$0xff]
        %v1465 = vld [vmem:[%s1185 + $0x32] sm:$0xff]
        %v1466 = vld [vmem:[%s1185 + $0x42] sm:$0xff]
        %v1467 = vld [vmem:[%s1185 + $0x52] sm:$0xff]
        %v1468 = vld [vmem:[%s1185 + $0x62] sm:$0xff]
        %v1469 = vld [vmem:[%s1185 + $0x72] sm:$0xff]
        %s1470 = scalar_lea.vmem [#allocation9], 1024
        %v1471 = vld [vmem:[%s1470] sm:$0xff]
        %v1472 = vld [vmem:[%s1470 + $0x8] sm:$0xff]
        %v1473 = vld [vmem:[%s1470 + $0x10] sm:$0xff]
        %v1474 = vld [vmem:[%s1470 + $0x18] sm:$0xff]
        %v1475 = vld [vmem:[%s1470 + $0x20] sm:$0xff]
        %v1476 = vld [vmem:[%s1470 + $0x28] sm:$0xff]
        %v1477 = vld [vmem:[%s1470 + $0x30] sm:$0xff]
        %v1478 = vld [vmem:[%s1470 + $0x38] sm:$0xff]
        %v1479 = vld [vmem:[%s1470 + $0x40] sm:$0xff]
        %v1480 = vld [vmem:[%s1470 + $0x48] sm:$0xff]
        %v1481 = vld [vmem:[%s1470 + $0x50] sm:$0xff]
        %v1482 = vld [vmem:[%s1470 + $0x58] sm:$0xff]
        %v1483 = vld [vmem:[%s1470 + $0x60] sm:$0xff]
        %v1484 = vld [vmem:[%s1470 + $0x68] sm:$0xff]
        %v1485 = vld [vmem:[%s1470 + $0x70] sm:$0xff]
        %v1486 = vld [vmem:[%s1470 + $0x78] sm:$0xff]
        %1487 = vmatprep.subr.mxu0 0.0
        %1488 = vmatpush1.msra.mxu0 %v1471
        %1489 = vmatprep.subr.mxu0 0.0
        %1490 = vmatpush1.msra.mxu0 %v1472
        %1491 = vmatprep.subr.mxu0 0.0
        %1492 = vmatpush1.msra.mxu0 %v1473
        %1493 = vmatprep.subr.mxu0 0.0
        %1494 = vmatpush1.msra.mxu0 %v1474
        %1495 = vmatprep.subr.mxu0 0.0
        %1496 = vmatpush1.msra.mxu0 %v1475
        %1497 = vmatprep.subr.mxu0 0.0
        %1498 = vmatpush1.msra.mxu0 %v1476
        %1499 = vmatprep.subr.mxu0 0.0
        %1500 = vmatpush1.msra.mxu0 %v1477
        %1501 = vmatprep.subr.mxu0 0.0
        %1502 = vmatpush1.msra.mxu0 %v1478
        %1503 = vmatprep.subr.mxu0 0.0
        %1504 = vmatpush1.msra.mxu0 %v1479
        %1505 = vmatprep.subr.mxu0 0.0
        %1506 = vmatpush1.msra.mxu0 %v1480
        %1507 = vmatprep.subr.mxu0 0.0
        %1508 = vmatpush1.msra.mxu0 %v1481
        %1509 = vmatprep.subr.mxu0 0.0
        %1510 = vmatpush1.msra.mxu0 %v1482
        %1511 = vmatprep.subr.mxu0 0.0
        %1512 = vmatpush1.msra.mxu0 %v1483
        %1513 = vmatprep.subr.mxu0 0.0
        %1514 = vmatpush1.msra.mxu0 %v1484
        %1515 = vmatprep.subr.mxu0 0.0
        %1516 = vmatpush1.msra.mxu0 %v1485
        %1517 = vmatprep.subr.mxu0 0.0
        %1518 = vmatpush1.msra.mxu0 %v1486
        %1519 = vmatprep.subr.mxu0 0.0
        %1520 = vmatpush1.msra.mxu0 0.0
        %1521 = vmatprep.subr.mxu0 0.0
        %1522 = vmatpush1.msra.mxu0 0.0
        %1523 = vmatprep.subr.mxu0 0.0
        %1524 = vmatpush1.msra.mxu0 0.0
        %1525 = vmatprep.subr.mxu0 0.0
        %1526 = vmatpush1.msra.mxu0 0.0
        %1527 = vmatprep.subr.mxu0 0.0
        %1528 = vmatpush1.msra.mxu0 0.0
        %1529 = vmatprep.subr.mxu0 0.0
        %1530 = vmatpush1.msra.mxu0 0.0
        %1531 = vmatprep.subr.mxu0 0.0
        %1532 = vmatpush1.msra.mxu0 0.0
        %1533 = vmatprep.subr.mxu0 0.0
        %1534 = vmatpush1.msra.mxu0 0.0
        %1535 = vmatprep.subr.mxu0 0.0
        %1536 = vmatpush1.msra.mxu0 0.0
        %1537 = vmatprep.subr.mxu0 0.0
        %1538 = vmatpush1.msra.mxu0 0.0
        %1539 = vmatprep.subr.mxu0 0.0
        %1540 = vmatpush1.msra.mxu0 0.0
        %1541 = vmatprep.subr.mxu0 0.0
        %1542 = vmatpush1.msra.mxu0 0.0
        %1543 = vmatprep.subr.mxu0 0.0
        %1544 = vmatpush1.msra.mxu0 0.0
        %1545 = vmatprep.subr.mxu0 0.0
        %1546 = vmatpush1.msra.mxu0 0.0
        %1547 = vmatprep.subr.mxu0 0.0
        %1548 = vmatpush1.msra.mxu0 0.0
        %1549 = vmatprep.subr.mxu0 0.0
        %1550 = vmatpush1.msra.mxu0 0.0
        %1551 = vmatprep.mubr.f32.mxu0 0.0
        %1552 = vmatmul.mubr.f32.gmra.mrb[0].mxu0 %v1462
        %v1553 = vpop.f32.mrb[0].mxu0
        %v1554 = vadd.f32 0.0, %v1553
        %v1555 = vpop.f32.mrb[0].mxu0
        %1556 = vmatprep.mubr.f32.mxu0 0.0
        %1557 = vmatmul.mubr.f32.gmra.mrb[0].mxu0 %v1463
        %v1558 = vpop.f32.mrb[0].mxu0
        %v1559 = vadd.f32 0.0, %v1558
        %v1560 = vpop.f32.mrb[0].mxu0
        %1561 = vmatprep.mubr.f32.mxu0 0.0
        %1562 = vmatmul.mubr.f32.gmra.mrb[0].mxu0 %v1464
        %v1563 = vpop.f32.mrb[0].mxu0
        %v1564 = vadd.f32 0.0, %v1563
        %v1565 = vpop.f32.mrb[0].mxu0
        %1566 = vmatprep.mubr.f32.mxu0 0.0
        %1567 = vmatmul.mubr.f32.gmra.mrb[0].mxu0 %v1465
        %v1568 = vpop.f32.mrb[0].mxu0
        %v1569 = vadd.f32 0.0, %v1568
        %v1570 = vpop.f32.mrb[0].mxu0
        %1571 = vmatprep.mubr.f32.mxu0 0.0
        %1572 = vmatmul.mubr.f32.gmra.mrb[0].mxu0 %v1466
        %v1573 = vpop.f32.mrb[0].mxu0
        %v1574 = vadd.f32 0.0, %v1573
        %v1575 = vpop.f32.mrb[0].mxu0
        %1576 = vmatprep.mubr.f32.mxu0 0.0
        %1577 = vmatmul.mubr.f32.gmra.mrb[0].mxu0 %v1467
        %v1578 = vpop.f32.mrb[0].mxu0
        %v1579 = vadd.f32 0.0, %v1578
        %v1580 = vpop.f32.mrb[0].mxu0
        %1581 = vmatprep.mubr.f32.mxu0 0.0
        %1582 = vmatmul.mubr.f32.gmra.mrb[0].mxu0 %v1468
        %v1583 = vpop.f32.mrb[0].mxu0
        %v1584 = vadd.f32 0.0, %v1583
        %v1585 = vpop.f32.mrb[0].mxu0
        %1586 = vmatprep.mubr.f32.mxu0 0.0
        %1587 = vmatmul.mubr.f32.gmra.mrb[0].mxu0 %v1469
        %v1588 = vpop.f32.mrb[0].mxu0
        %v1589 = vadd.f32 0.0, %v1588
        %v1590 = vpop.f32.mrb[0].mxu0
        %1591 = vdwg.mxu0
        %v1592 = vadd.f32 %v1454, %v1554
        %v1593 = vadd.f32 %v1455, %v1559
        %v1594 = vadd.f32 %v1456, %v1564
        %v1595 = vadd.f32 %v1457, %v1569
        %v1596 = vadd.f32 %v1458, %v1574
        %v1597 = vadd.f32 %v1459, %v1579
        %v1598 = vadd.f32 %v1460, %v1584
        %v1599 = vadd.f32 %v1461, %v1589
        %1600 = vst [vmem:[%s286] sm:$0xff] %v1592
        %1601 = vst [vmem:[%s286 + $0x8] sm:$0xff] %v1593
        %1602 = vst [vmem:[%s286 + $0x10] sm:$0xff] %v1594
        %1603 = vst [vmem:[%s286 + $0x18] sm:$0xff] %v1595
        %1604 = vst [vmem:[%s286 + $0x20] sm:$0xff] %v1596
        %1605 = vst [vmem:[%s286 + $0x28] sm:$0xff] %v1597
        %1606 = vst [vmem:[%s286 + $0x30] sm:$0xff] %v1598
        %1607 = vst [vmem:[%s286 + $0x38] sm:$0xff] %v1599
        %v1608 = vadd.f32 %v1592, %v1593
        %v1609 = vadd.f32 %v1608, %v1594
        %v1610 = vadd.f32 %v1609, %v1595
        %v1611 = vadd.f32 %v1610, %v1596
        %v1612 = vadd.f32 %v1611, %v1597
        %v1613 = vadd.f32 %v1612, %v1598
        %v1614 = vadd.f32 %v1613, %v1599
        %v1615 = vrot.slane %v1614, 4
        %v1616 = vadd.f32 %v1614, %v1615
        %v1617 = vrot.slane %v1616, 2
        %v1618 = vadd.f32 %v1616, %v1617
        %v1619 = vrot.slane %v1618, 1
        %v1620 = vadd.f32 %v1618, %v1619
        %1621 = vst [vmem:[%s293] sm:$0x1] %v1620
        %v1622 = vmul.f32 %v1592, %v1592
        %v1623 = vmul.f32 %v1593, %v1593
        %v1624 = vmul.f32 %v1594, %v1594
        %v1625 = vmul.f32 %v1595, %v1595
        %v1626 = vmul.f32 %v1596, %v1596
        %v1627 = vmul.f32 %v1597, %v1597
        %v1628 = vmul.f32 %v1598, %v1598
        %v1629 = vmul.f32 %v1599, %v1599
        %v1630 = vadd.f32 %v1622, %v1623
        %v1631 = vadd.f32 %v1630, %v1624
        %v1632 = vadd.f32 %v1631, %v1625
        %v1633 = vadd.f32 %v1632, %v1626
        %v1634 = vadd.f32 %v1633, %v1627
        %v1635 = vadd.f32 %v1634, %v1628
        %v1636 = vadd.f32 %v1635, %v1629
        %v1637 = vrot.slane %v1636, 4
        %v1638 = vadd.f32 %v1636, %v1637
        %v1639 = vrot.slane %v1638, 2
        %v1640 = vadd.f32 %v1638, %v1639
        %v1641 = vrot.slane %v1640, 1
        %v1642 = vadd.f32 %v1640, %v1641
        %1643 = vst [vmem:[%s293 + $0x1] sm:$0x1] %v1642
        %s1644 = sand.u32 %s125, 1
        %s1645 = scalar_lea.sflag [#allocation5], %s1644
        %s1646 = sand.u32 %s125, 1
        %s1647 = smul.addr %s1646, 64
        %s1648 = scalar_lea.vmem [#allocation11], %s1647
        %s1649 = sand.u32 %s151, 1
        %s1650 = scalar_lea.sflag [#allocation13], %s1649
        %s1651 = sand.u32 %s151, 1
        %s1652 = smul.addr %s1651, 2
        %s1653 = scalar_lea.vmem [#allocation12], %s1652
        // Predicated region
        $region53: #{bottleneck_forward.4} parent=35 // pred_check
          %p1654 = pneg %p135
        $region54: #{bottleneck_forward.4} parent=35 // pred_check_branch
          %1656 = sbr.rel (%p1654) target = $region56
        $region55: #{bottleneck_forward.4} parent=35 // pred_region
          %s1658 = ssub.s32 1024, 1024
          %1659 = vsyncadd %s1645, %s1658
          %s1660 = smul.addr %s28, 8
          %s1661 = smul.addr %s1660, 128
          %s1662 = scalar_lea.hbm %s4, %s1661
          %s1663 = sshll.u32 %s1648, 4
          %s1664 = int_to_ptr.vmem [resolvable:$true] %s1663
          %1669 = dma.vmem_to_hbm [thread:$0]  %s1664, 1024, %s1662, %s1645, 128, 128, 8
        $region56: #{bottleneck_forward.4} parent=35 // pred_fallthru
          _
        // Predicated region
        $region57: #{bottleneck_forward.4} parent=35 // pred_check
          %p1670 = pneg %p161
        $region58: #{bottleneck_forward.4} parent=35 // pred_check_branch
          %1672 = sbr.rel (%p1670) target = $region60
        $region59: #{bottleneck_forward.4} parent=35 // pred_region
          %s1674 = ssub.s32 32, 32
          %1675 = vsyncadd %s1650, %s1674
          %s1676 = smul.addr %s28, 32
          %s1677 = scalar_lea.hbm %s5, %s1676
          %s1679 = sshll.u32 %s1653, 4
          %s1680 = int_to_ptr.vmem [resolvable:$true] %s1679
          %1682 = dma.vmem_to_hbm [thread:$0]  %s1680, 32, %s1677, %s1650
        $region60: #{bottleneck_forward.4} parent=35 // pred_fallthru
          _
      $region36: #{bottleneck_forward.4} parent=5 // pred_fallthru
        _
      %p1683 = scmp.le.s32.totalorder 2, %s23
      // Predicated region
      $region61: #{bottleneck_forward.4} parent=5 // pred_check
        %p1684 = pneg %p1683
      $region62: #{bottleneck_forward.4} parent=5 // pred_check_branch
        %1686 = sbr.rel (%p1684) target = $region64
      $region63: #{bottleneck_forward.4} parent=5 // pred_region
        %s1687 = ssub.s32 %s23, 2
        // Predicated region
        $region65: #{bottleneck_forward.4} parent=63 // pred_check
          %p1688 = pneg %p141
        $region66: #{bottleneck_forward.4} parent=63 // pred_check_branch
          %1690 = sbr.rel (%p1688) target = $region68
        $region67: #{bottleneck_forward.4} parent=63 // pred_region
          %s1691 = sand.u32 %s126, 1
          %s1692 = scalar_lea.sflag [#allocation5], %s1691
          %s1693 = sand.u32 %s126, 1
          %s1694 = smul.addr %s1693, 64
          %s1695 = scalar_lea.vmem [#allocation11], %s1694
          %1696 = dma.done %s1692, 1024
        $region68: #{bottleneck_forward.4} parent=63 // pred_fallthru
          _
        // Predicated region
        $region69: #{bottleneck_forward.4} parent=63 // pred_check
          %p1697 = pneg %p167
        $region70: #{bottleneck_forward.4} parent=63 // pred_check_branch
          %1699 = sbr.rel (%p1697) target = $region72
        $region71: #{bottleneck_forward.4} parent=63 // pred_region
          %s1700 = sand.u32 %s152, 1
          %s1701 = scalar_lea.sflag [#allocation13], %s1700
          %s1702 = sand.u32 %s152, 1
          %s1703 = smul.addr %s1702, 2
          %s1704 = scalar_lea.vmem [#allocation12], %s1703
          %1705 = dma.done %s1701, 32
        $region72: #{bottleneck_forward.4} parent=63 // pred_fallthru
          _
      $region64: #{bottleneck_forward.4} parent=5 // pred_fallthru
        _
    $region6: #{bottleneck_forward.4} parent=1 // loop_footer
      %s27 = sadd.s32 1, %s23
    $region7: #{bottleneck_forward.4} parent=1 // loop_footer_branch
      %22 = sbr.rel target = $region3
    $region8: #{bottleneck_forward.4} parent=1 // loop_exit
      _
    %1706 = vsyncpa [#allocation4], 1
    %s1707 = scalar_lea.sflag [#allocation4], 1
    %1708 = vsyncpa %s1707, 1
    %1709 = vsyncpa [#allocation7], 1
    %1710 = vsyncpa [#allocation10], 1
    %1711 = vsyncpa [#allocation5], 1
    %s1712 = scalar_lea.sflag [#allocation5], 1
    %1713 = vsyncpa %s1712, 1
    %1714 = vsyncpa [#allocation13], 1
    %s1715 = scalar_lea.sflag [#allocation13], 1
    %1716 = vsyncpa %s1715, 1

</llo_original>
